<compile_context>
chip_gen: v6e
topology: v6e:2x2x1
jax: 0.10.0
libtpu: 0.0.40
codegen_flags: <defaults>
</compile_context>

<pallas_src>
import numpy as np
import jax
import jax.numpy as jnp
from jax.experimental import pallas as pl
from jax.experimental.pallas import tpu as pltpu

HEAD_PAD = 128   # lane-dense head width; real logits/value are a prefix slice
HID_PAD = 128    # combined (actor|critic) hidden lane width (>= 2*H)
GATE_PAD = 128   # one 128-lane tile per GRU gate: actor lanes [0:H], critic [H:2H]


# ----------------------------------------------------------------------------- kernel

def _make_fused_kernel(T, B, H):
    GP = GATE_PAD

    def _ln(x, g, b):
        mu = jnp.mean(x, axis=-1, keepdims=True)
        d = x - mu
        var = jnp.mean(d * d, axis=-1, keepdims=True)
        return d * jax.lax.rsqrt(var + 1e-5) * g + b

    def _sigmoid(x):
        return 0.5 * (jnp.tanh(0.5 * x) + 1.0)

    def _dot(a, w):
        # bf16 operands, f32 accumulation (native MXU path).
        return jnp.dot(a.astype(jnp.bfloat16), w, preferred_element_type=jnp.float32)

    def kernel(obs_ref, keep_ref, h0_ref,
               w_emb_ref, b_emb_ref,
               w1_ref, b1_ref, g1_ref, be1_ref,
               w2_ref, b2_ref, g2_ref, be2_ref,
               wih_ref, whh_ref, bih_ref, bhn_ref,
               gr_ref, br_ref, wh_ref, bh_ref,
               out_a_ref, out_c_ref, hx_ref,
               gi_buf, rnn_buf):
        obs = obs_ref[...]

        # --- per-network obs embedding + 2 dense layers (+LayerNorm); runs once ---
        def backbone_dense(net):
            x = jnp.maximum(_dot(obs, w_emb_ref[net]) + b_emb_ref[net], 0.0)
            x = _ln(jnp.maximum(_dot(x, w1_ref[net]) + b1_ref[net], 0.0),
                    g1_ref[net], be1_ref[net])
            x = _ln(jnp.maximum(_dot(x, w2_ref[net]) + b2_ref[net], 0.0),
                    g2_ref[net], be2_ref[net])
            return x

        x_a = backbone_dense(0)
        x_c = backbone_dense(1)

        # --- hoisted GRU input projection for BOTH networks, all T steps, written to
        #     VMEM scratch (combined gate layout; r/z parts of b_hh already folded in) ---
        gi_buf[...] = _dot(x_a, wih_ref[0]) + _dot(x_c, wih_ref[1]) + bih_ref[...]

        bhn = bhn_ref[...]            # (B, GATE_PAD) pre-broadcast b_hn (both nets)
        h = h0_ref[...]               # (B, HID_PAD): actor lanes [0:H], critic [H:2H]

        # --- single fully-unrolled auto-reset GRU chain for actor+critic together ---
        for t in range(T):
            r0 = t * B
            h = h * keep_ref[r0:r0 + B, :]          # zero hidden where on_reset==1
            gi = gi_buf[r0:r0 + B, :]               # (B, 3*GATE_PAD) from VMEM
            gh = _dot(h, whh_ref[...])              # one block-diag matmul, both nets
            r = _sigmoid(gi[:, 0:GP] + gh[:, 0:GP])
            z = _sigmoid(gi[:, GP:2 * GP] + gh[:, GP:2 * GP])
            n = jnp.tanh(gi[:, 2 * GP:3 * GP] + r * (gh[:, 2 * GP:3 * GP] + bhn))
            h = (1.0 - z) * n + z * h
            rnn_buf[r0:r0 + B, :] = h

        hx_ref[...] = h

        # --- post-RNN per-network LayerNorm + lane-dense linear heads (runs once) ---
        fb = rnn_buf[...]
        fa = _ln(fb[:, 0:H], gr_ref[0], br_ref[0])
        fc = _ln(fb[:, H:2 * H], gr_ref[1], br_ref[1])
        out_a_ref[...] = _dot(fa, wh_ref[0]) + bh_ref[0]
        out_c_ref[...] = _dot(fc, wh_ref[1]) + bh_ref[1]

    return kernel


def _run_fused(inputs, T, B, H):
    kernel = _make_fused_kernel(T, B, H)

    def full_spec(arr):
        zeros = (0,) * arr.ndim
        return pl.BlockSpec(arr.shape, lambda i, _z=zeros: _z)

    out_shapes = (jax.ShapeDtypeStruct((T * B, HEAD_PAD), jnp.float32),
                  jax.ShapeDtypeStruct((T * B, HEAD_PAD), jnp.float32),
                  jax.ShapeDtypeStruct((B, HID_PAD), jnp.float32))
    out_specs = (pl.BlockSpec((T * B, HEAD_PAD), lambda i: (0, 0)),
                 pl.BlockSpec((T * B, HEAD_PAD), lambda i: (0, 0)),
                 pl.BlockSpec((B, HID_PAD), lambda i: (0, 0)))

    return pl.pallas_call(
        kernel,
        out_shape=out_shapes,
        grid_spec=pltpu.PrefetchScalarGridSpec(
            num_scalar_prefetch=0,
            grid=(1,),                               # single body: both nets interleaved
            in_specs=[full_spec(a) for a in inputs],
            out_specs=out_specs,
            scratch_shapes=[pltpu.VMEM((T * B, 3 * GATE_PAD), jnp.float32),  # gi_buf
                            pltpu.VMEM((T * B, HID_PAD), jnp.float32)]),     # rnn_buf
        compiler_params=pltpu.CompilerParams(
            dimension_semantics=("arbitrary",)),
    )(*inputs)


# ------------------------------------------------------------------------- parameters

def _linear(key, fan_in, fan_out, scale=None, dtype=jnp.float32, rand_bias=False):
    kw, kb = jax.random.split(key)
    scale = (1.0 / np.sqrt(fan_in)) if scale is None else scale
    w = (scale * jax.random.normal(kw, (fan_in, fan_out), jnp.float32)).astype(dtype)
    if rand_bias:
        b = (1.0 / np.sqrt(fan_in)) * jax.random.normal(kb, (1, fan_out), jnp.float32)
    else:
        b = jnp.zeros((1, fan_out), jnp.float32)
    return w, b


def init_backbone_head_params(key, obs_dim, hidden, out_dim, head_gain=0.01):
    """make_models_for_obs (flat) + RecurrentBackbone(dense_layers=2, 1-layer GRU,
    layernorm=True) + linear head (gain=0.01, zero bias).  Matmul weights stored bf16
    (MXU operands); biases/LayerNorm params f32.  Head padded to HEAD_PAD lanes."""
    ks = jax.random.split(key, 8)
    bf = jnp.bfloat16
    w_emb, b_emb = _linear(ks[0], obs_dim, hidden, dtype=bf, rand_bias=True)
    w1, b1 = _linear(ks[1], hidden, hidden, dtype=bf, rand_bias=True)
    g1, be1 = jnp.ones((1, hidden), jnp.float32), jnp.zeros((1, hidden), jnp.float32)
    w2, b2 = _linear(ks[2], hidden, hidden, dtype=bf, rand_bias=True)
    g2, be2 = jnp.ones((1, hidden), jnp.float32), jnp.zeros((1, hidden), jnp.float32)
    wih = ((1.0 / np.sqrt(hidden)) *
           jax.random.normal(ks[3], (hidden, 3 * hidden), jnp.float32)).astype(bf)
    whh = ((1.0 / np.sqrt(hidden)) *
           jax.random.normal(ks[4], (hidden, 3 * hidden), jnp.float32)).astype(bf)
    bih = 0.1 * jax.random.normal(ks[5], (1, 3 * hidden), jnp.float32)
    bhh = 0.1 * jax.random.normal(ks[6], (1, 3 * hidden), jnp.float32)
    gr, br = jnp.ones((1, hidden), jnp.float32), jnp.zeros((1, hidden), jnp.float32)
    wh_core, _ = _linear(ks[7], hidden, out_dim, scale=head_gain)
    wh = jnp.zeros((hidden, HEAD_PAD), jnp.float32).at[:, :out_dim].set(wh_core).astype(bf)
    bh = jnp.zeros((1, HEAD_PAD), jnp.float32)
    return [w_emb, b_emb, w1, b1, g1, be1, w2, b2, g2, be2,
            wih, whh, bih, bhh, gr, br, wh, bh]


# ---------------------------------------------------------------------- module forward

def _scatter_gates(x, net, hidden):
    """Scatter (..., 3H) gate columns (PyTorch order r,z,n) into the combined
    3*GATE_PAD layout: gate g -> lanes [g*GATE_PAD + net*H : g*GATE_PAD + (net+1)*H]."""
    out = jnp.zeros(x.shape[:-1] + (3 * GATE_PAD,), x.dtype)
    off = net * hidden
    for g in range(3):
        out = out.at[..., g * GATE_PAD + off:g * GATE_PAD + off + hidden].set(
            x[..., g * hidden:(g + 1) * hidden])
    return out


def actor_critic_separate_forward(obs_dict, policy_state, on_reset,
                                  actor_params, critic_params,
                                  action_dim, value_dim):
    """Mirrors ActorCriticSeparate.forward with shared_backbone=False, state_dim=None
    (critic consumes the same obs), discrete actions, popart=False, auxiliary_head=False."""
    obs = obs_dict["obs"]                       # (T, B, obs_dim)
    T, B, D = obs.shape
    H = policy_state[0].shape[-1]
    assert 2 * H <= HID_PAD and 2 * H <= GATE_PAD

    obs2d = obs.reshape(T * B, D)
    # reset mask pre-negated AND pre-broadcast (one aligned vmul per GRU step in-kernel)
    keep = jnp.broadcast_to((1.0 - on_reset.reshape(T * B, 1)).astype(jnp.float32),
                            (T * B, HID_PAD))
    # combined hidden state: actor lanes [0:H], critic lanes [H:2H], rest zero
    h0 = jnp.zeros((B, HID_PAD), jnp.float32)
    h0 = h0.at[:, 0:H].set(policy_state[0].reshape(B, H))
    h0 = h0.at[:, H:2 * H].set(policy_state[1].reshape(B, H))

    (aw_emb, ab_emb, aw1, ab1, ag1, abe1, aw2, ab2, ag2, abe2,
     awih, awhh, abih, abhh, agr, abr, awh, abh) = actor_params
    (cw_emb, cb_emb, cw1, cb1, cg1, cbe1, cw2, cb2, cg2, cbe2,
     cwih, cwhh, cbih, cbhh, cgr, cbr, cwh, cbh) = critic_params

    stack = lambda a, c: jnp.stack([a, c])
    w_emb_s, b_emb_s = stack(aw_emb, cw_emb), stack(ab_emb, cb_emb)
    w1_s, b1_s = stack(aw1, cw1), stack(ab1, cb1)
    g1_s, be1_s = stack(ag1, cg1), stack(abe1, cbe1)
    w2_s, b2_s = stack(aw2, cw2), stack(ab2, cb2)
    g2_s, be2_s = stack(ag2, cg2), stack(abe2, cbe2)
    gr_s, br_s = stack(agr, cgr), stack(abr, cbr)
    wh_s, bh_s = stack(awh, cwh), stack(abh, cbh)

    # combined GRU params: each gate in its own 128-lane tile, actor [0:H], critic [H:2H]
    wih_s = stack(_scatter_gates(awih, 0, H), _scatter_gates(cwih, 1, H))     # (2,H,384)
    whh_comb = jnp.zeros((HID_PAD, 3 * GATE_PAD), jnp.bfloat16)               # block-diag
    whh_comb = whh_comb.at[0:H, :].set(_scatter_gates(awhh, 0, H))
    whh_comb = whh_comb.at[H:2 * H, :].set(_scatter_gates(cwhh, 1, H))
    # fold b_hr, b_hz into b_ih (legal: only b_hn must stay inside r*(...))
    abih_f = abih.at[:, 0:2 * H].add(abhh[:, 0:2 * H])
    cbih_f = cbih.at[:, 0:2 * H].add(cbhh[:, 0:2 * H])
    bih_comb = _scatter_gates(abih_f, 0, H) + _scatter_gates(cbih_f, 1, H)    # (1,384)
    bhn_comb = jnp.zeros((B, GATE_PAD), jnp.float32)                          # pre-broadcast
    bhn_comb = bhn_comb.at[:, 0:H].set(jnp.broadcast_to(abhh[:, 2 * H:3 * H], (B, H)))
    bhn_comb = bhn_comb.at[:, H:2 * H].set(jnp.broadcast_to(cbhh[:, 2 * H:3 * H], (B, H)))

    inputs = [obs2d, keep, h0,
              w_emb_s, b_emb_s,
              w1_s, b1_s, g1_s, be1_s,
              w2_s, b2_s, g2_s, be2_s,
              wih_s, whh_comb, bih_comb, bhn_comb,
              gr_s, br_s, wh_s, bh_s]

    out_a, out_c, h_fin = _run_fused(inputs, T, B, H)

    a = out_a[:, :action_dim].reshape(T, B, action_dim)
    v = out_c[:, :value_dim].reshape(T, B, value_dim)
    new_state = (h_fin[:, 0:H].reshape(1, B, H), h_fin[:, H:2 * H].reshape(1, B, H))
    return (a,), (v,), new_state


# -------------------------------------------------------------------- pure-JAX reference
# Mirrors the kernel's precision policy (bf16 matmul operands, f32 accumulate).

def _ref_backbone_head(obs2d, keep2d, h0, p, T, B, H):
    (w_emb, b_emb, w1, b1, g1, be1, w2, b2, g2, be2,
     wih, whh, bih, bhh, gr, br, wh, bh) = p
    bf = jnp.bfloat16

    def dot(a, w):
        return jnp.dot(a.astype(bf), w, preferred_element_type=jnp.float32)

    def ln(x, g, b):
        mu = x.mean(-1, keepdims=True)
        d = x - mu
        var = (d * d).mean(-1, keepdims=True)
        return d * jax.lax.rsqrt(var + 1e-5) * g + b

    def sig(x):
        return 0.5 * (jnp.tanh(0.5 * x) + 1.0)

    x = jnp.maximum(dot(obs2d, w_emb) + b_emb, 0.0)
    x = ln(jnp.maximum(dot(x, w1) + b1, 0.0), g1, be1)
    x = ln(jnp.maximum(dot(x, w2) + b2, 0.0), g2, be2)
    gi_all = dot(x, wih) + bih
    h = h0
    outs = []
    for t in range(T):
        h = h * keep2d[t * B:(t + 1) * B]
        gi = gi_all[t * B:(t + 1) * B]
        gh = dot(h, whh) + bhh
        r = sig(gi[:, :H] + gh[:, :H])
        z = sig(gi[:, H:2 * H] + gh[:, H:2 * H])
        n = jnp.tanh(gi[:, 2 * H:] + r * gh[:, 2 * H:])
        h = (1.0 - z) * n + z * h
        outs.append(h)
    feats = ln(jnp.concatenate(outs, axis=0), gr, br)
    return dot(feats, wh) + bh, h


# --------------------------------------------------------------------------------- main

if __name__ == "__main__":
    T, B = 8, 8
    OBS_DIM, HIDDEN, ACTION_DIM, VALUE_DIM = 24, 32, 6, 1

    key = jax.random.PRNGKey(0)
    k_obs, k_reset, k_h1, k_h2, k_ap, k_cp = jax.random.split(key, 6)

    obs = jax.random.normal(k_obs, (T, B, OBS_DIM), jnp.float32)
    on_reset = (jax.random.uniform(k_reset, (T, B, 1)) < 0.15).astype(jnp.float32)
    actor_h0 = 0.1 * jax.random.normal(k_h1, (1, B, HIDDEN), jnp.float32)
    critic_h0 = 0.1 * jax.random.normal(k_h2, (1, B, HIDDEN), jnp.float32)

    actor_params = init_backbone_head_params(k_ap, OBS_DIM, HIDDEN, ACTION_DIM)
    critic_params = init_backbone_head_params(k_cp, OBS_DIM, HIDDEN, VALUE_DIM)

    obs_dict = {"obs": obs}
    (a,), (v,), (actor_hx, critic_hx) = actor_critic_separate_forward(
        obs_dict, (actor_h0, critic_h0), on_reset,
        actor_params, critic_params, ACTION_DIM, VALUE_DIM)
    jax.block_until_ready((a, v, actor_hx, critic_hx))

    # correctness check vs. pure-JAX reference (same precision policy)
    obs2d = obs.reshape(T * B, OBS_DIM)
    keep2d = (1.0 - on_reset.reshape(T * B, 1)).astype(jnp.float32)
    a_ref, ahx_ref = _ref_backbone_head(obs2d, keep2d, actor_h0.reshape(B, HIDDEN),
                                        actor_params, T, B, HIDDEN)
    v_ref, chx_ref = _ref_backbone_head(obs2d, keep2d, critic_h0.reshape(B, HIDDEN),
                                        critic_params, T, B, HIDDEN)
    np.testing.assert_allclose(np.asarray(a).reshape(T * B, ACTION_DIM),
                               np.asarray(a_ref[:, :ACTION_DIM]), rtol=2e-2, atol=2e-3)
    np.testing.assert_allclose(np.asarray(v).reshape(T * B, VALUE_DIM),
                               np.asarray(v_ref[:, :VALUE_DIM]), rtol=2e-2, atol=2e-3)
    np.testing.assert_allclose(np.asarray(actor_hx).reshape(B, HIDDEN),
                               np.asarray(ahx_ref), rtol=2e-2, atol=2e-3)
    np.testing.assert_allclose(np.asarray(critic_hx).reshape(B, HIDDEN),
                               np.asarray(chx_ref), rtol=2e-2, atol=2e-3)

    assert a.shape == (T, B, ACTION_DIM) and v.shape == (T, B, VALUE_DIM)
    assert actor_hx.shape == (1, B, HIDDEN) and critic_hx.shape == (1, B, HIDDEN)
    print("KERNEL_OK")
</pallas_src>

<mosaic_0001>
module attributes {stable_mosaic.version = 11 : i64} {
  func.func @kernel(%arg0: i32, %arg1: memref<64x24xf32, #tpu.memory_space<vmem>>, %arg2: memref<64x128xf32, #tpu.memory_space<vmem>>, %arg3: memref<8x128xf32, #tpu.memory_space<vmem>>, %arg4: memref<2x24x32xbf16, #tpu.memory_space<vmem>>, %arg5: memref<2x1x32xf32, #tpu.memory_space<vmem>>, %arg6: memref<2x32x32xbf16, #tpu.memory_space<vmem>>, %arg7: memref<2x1x32xf32, #tpu.memory_space<vmem>>, %arg8: memref<2x1x32xf32, #tpu.memory_space<vmem>>, %arg9: memref<2x1x32xf32, #tpu.memory_space<vmem>>, %arg10: memref<2x32x32xbf16, #tpu.memory_space<vmem>>, %arg11: memref<2x1x32xf32, #tpu.memory_space<vmem>>, %arg12: memref<2x1x32xf32, #tpu.memory_space<vmem>>, %arg13: memref<2x1x32xf32, #tpu.memory_space<vmem>>, %arg14: memref<2x32x384xbf16, #tpu.memory_space<vmem>>, %arg15: memref<128x384xbf16, #tpu.memory_space<vmem>>, %arg16: memref<1x384xf32, #tpu.memory_space<vmem>>, %arg17: memref<8x128xf32, #tpu.memory_space<vmem>>, %arg18: memref<2x1x32xf32, #tpu.memory_space<vmem>>, %arg19: memref<2x1x32xf32, #tpu.memory_space<vmem>>, %arg20: memref<2x32x128xbf16, #tpu.memory_space<vmem>>, %arg21: memref<2x1x128xf32, #tpu.memory_space<vmem>>, %arg22: memref<64x128xf32, #tpu.memory_space<vmem>>, %arg23: memref<64x128xf32, #tpu.memory_space<vmem>>, %arg24: memref<8x128xf32, #tpu.memory_space<vmem>>, %arg25: memref<64x384xf32, #tpu.memory_space<vmem>>, %arg26: memref<64x128xf32, #tpu.memory_space<vmem>>) attributes {dimension_semantics = [#tpu.dimension_semantics<arbitrary>], iteration_bounds = array<i64: 1>, scalar_prefetch = 0 : i64, scratch_operands = 2 : i64, tpu.core_type = #tpu.core_type<tc>, window_params = [{pipeline_mode = #tpu.pipeline_mode<synchronous>, transform_indices = @transform_0, window_bounds = array<i64: 64, 24>}, {pipeline_mode = #tpu.pipeline_mode<synchronous>, transform_indices = @transform_1, window_bounds = array<i64: 64, 128>}, {pipeline_mode = #tpu.pipeline_mode<synchronous>, transform_indices = @transform_2, window_bounds = array<i64: 8, 128>}, {pipeline_mode = #tpu.pipeline_mode<synchronous>, transform_indices = @transform_3, window_bounds = array<i64: 2, 24, 32>}, {pipeline_mode = #tpu.pipeline_mode<synchronous>, transform_indices = @transform_4, window_bounds = array<i64: 2, 1, 32>}, {pipeline_mode = #tpu.pipeline_mode<synchronous>, transform_indices = @transform_5, window_bounds = array<i64: 2, 32, 32>}, {pipeline_mode = #tpu.pipeline_mode<synchronous>, transform_indices = @transform_6, window_bounds = array<i64: 2, 1, 32>}, {pipeline_mode = #tpu.pipeline_mode<synchronous>, transform_indices = @transform_7, window_bounds = array<i64: 2, 1, 32>}, {pipeline_mode = #tpu.pipeline_mode<synchronous>, transform_indices = @transform_8, window_bounds = array<i64: 2, 1, 32>}, {pipeline_mode = #tpu.pipeline_mode<synchronous>, transform_indices = @transform_9, window_bounds = array<i64: 2, 32, 32>}, {pipeline_mode = #tpu.pipeline_mode<synchronous>, transform_indices = @transform_10, window_bounds = array<i64: 2, 1, 32>}, {pipeline_mode = #tpu.pipeline_mode<synchronous>, transform_indices = @transform_11, window_bounds = array<i64: 2, 1, 32>}, {pipeline_mode = #tpu.pipeline_mode<synchronous>, transform_indices = @transform_12, window_bounds = array<i64: 2, 1, 32>}, {pipeline_mode = #tpu.pipeline_mode<synchronous>, transform_indices = @transform_13, window_bounds = array<i64: 2, 32, 384>}, {pipeline_mode = #tpu.pipeline_mode<synchronous>, transform_indices = @transform_14, window_bounds = array<i64: 128, 384>}, {pipeline_mode = #tpu.pipeline_mode<synchronous>, transform_indices = @transform_15, window_bounds = array<i64: 1, 384>}, {pipeline_mode = #tpu.pipeline_mode<synchronous>, transform_indices = @transform_16, window_bounds = array<i64: 8, 128>}, {pipeline_mode = #tpu.pipeline_mode<synchronous>, transform_indices = @transform_17, window_bounds = array<i64: 2, 1, 32>}, {pipeline_mode = #tpu.pipeline_mode<synchronous>, transform_indices = @transform_18, window_bounds = array<i64: 2, 1, 32>}, {pipeline_mode = #tpu.pipeline_mode<synchronous>, transform_indices = @transform_19, window_bounds = array<i64: 2, 32, 128>}, {pipeline_mode = #tpu.pipeline_mode<synchronous>, transform_indices = @transform_20, window_bounds = array<i64: 2, 1, 128>}, {pipeline_mode = #tpu.pipeline_mode<synchronous>, transform_indices = @transform_21, window_bounds = array<i64: 64, 128>}, {pipeline_mode = #tpu.pipeline_mode<synchronous>, transform_indices = @transform_22, window_bounds = array<i64: 64, 128>}, {pipeline_mode = #tpu.pipeline_mode<synchronous>, transform_indices = @transform_23, window_bounds = array<i64: 8, 128>}]} {
    %c0 = arith.constant 0 : index
    %c0_0 = arith.constant 0 : index
    %0 = vector.load %arg1[%c0, %c0_0] : memref<64x24xf32, #tpu.memory_space<vmem>>, vector<64x24xf32>
    %c0_1 = arith.constant 0 : index
    %c0_2 = arith.constant 0 : index
    %c0_3 = arith.constant 0 : index
    %1 = vector.load %arg4[%c0_1, %c0_2, %c0_3] : memref<2x24x32xbf16, #tpu.memory_space<vmem>>, vector<1x24x32xbf16>
    %2 = vector.shape_cast %1 : vector<1x24x32xbf16> to vector<24x32xbf16>
    %3 = arith.truncf %0 : vector<64x24xf32> to vector<64x24xbf16>
    %cst = arith.constant dense<0.000000e+00> : vector<64x32xf32>
    %4 = tpu.matmul %3, %2, %cst {dimension_numbers = #tpu.dot_dimension_numbers<[1], [0], [0], [1], [0, 0, 1, 1], [], []>} : vector<64x24xbf16>, vector<24x32xbf16>, vector<64x32xf32> -> vector<64x32xf32>
    %c0_4 = arith.constant 0 : index
    %c0_5 = arith.constant 0 : index
    %c0_6 = arith.constant 0 : index
    %5 = vector.load %arg5[%c0_4, %c0_5, %c0_6] : memref<2x1x32xf32, #tpu.memory_space<vmem>>, vector<1x1x32xf32>
    %6 = vector.shape_cast %5 : vector<1x1x32xf32> to vector<1x32xf32>
    %7 = vector.broadcast %6 : vector<1x32xf32> to vector<64x32xf32>
    %8 = arith.addf %4, %7 : vector<64x32xf32>
    %cst_7 = arith.constant 0.000000e+00 : f32
    %9 = vector.broadcast %cst_7 : f32 to vector<64x32xf32>
    %10 = arith.maximumf %8, %9 : vector<64x32xf32>
    %c0_8 = arith.constant 0 : index
    %c0_9 = arith.constant 0 : index
    %c0_10 = arith.constant 0 : index
    %11 = vector.load %arg6[%c0_8, %c0_9, %c0_10] : memref<2x32x32xbf16, #tpu.memory_space<vmem>>, vector<1x32x32xbf16>
    %12 = vector.shape_cast %11 : vector<1x32x32xbf16> to vector<32x32xbf16>
    %13 = arith.truncf %10 : vector<64x32xf32> to vector<64x32xbf16>
    %cst_11 = arith.constant dense<0.000000e+00> : vector<64x32xf32>
    %14 = tpu.matmul %13, %12, %cst_11 {dimension_numbers = #tpu.dot_dimension_numbers<[1], [0], [0], [1], [0, 0, 1, 1], [], []>} : vector<64x32xbf16>, vector<32x32xbf16>, vector<64x32xf32> -> vector<64x32xf32>
    %c0_12 = arith.constant 0 : index
    %c0_13 = arith.constant 0 : index
    %c0_14 = arith.constant 0 : index
    %15 = vector.load %arg7[%c0_12, %c0_13, %c0_14] : memref<2x1x32xf32, #tpu.memory_space<vmem>>, vector<1x1x32xf32>
    %16 = vector.shape_cast %15 : vector<1x1x32xf32> to vector<1x32xf32>
    %17 = vector.broadcast %16 : vector<1x32xf32> to vector<64x32xf32>
    %18 = arith.addf %14, %17 : vector<64x32xf32>
    %cst_15 = arith.constant 0.000000e+00 : f32
    %19 = vector.broadcast %cst_15 : f32 to vector<64x32xf32>
    %20 = arith.maximumf %18, %19 : vector<64x32xf32>
    %c0_16 = arith.constant 0 : index
    %c0_17 = arith.constant 0 : index
    %c0_18 = arith.constant 0 : index
    %21 = vector.load %arg8[%c0_16, %c0_17, %c0_18] : memref<2x1x32xf32, #tpu.memory_space<vmem>>, vector<1x1x32xf32>
    %22 = vector.shape_cast %21 : vector<1x1x32xf32> to vector<1x32xf32>
    %c0_19 = arith.constant 0 : index
    %c0_20 = arith.constant 0 : index
    %c0_21 = arith.constant 0 : index
    %23 = vector.load %arg9[%c0_19, %c0_20, %c0_21] : memref<2x1x32xf32, #tpu.memory_space<vmem>>, vector<1x1x32xf32>
    %24 = vector.shape_cast %23 : vector<1x1x32xf32> to vector<1x32xf32>
    %cst_22 = arith.constant dense<0.000000e+00> : vector<64xf32>
    %25 = vector.multi_reduction <add>, %20, %cst_22 [1] : vector<64x32xf32> to vector<64xf32>
    %26 = vector.shape_cast %25 : vector<64xf32> to vector<64x1xf32>
    %cst_23 = arith.constant 3.200000e+01 : f32
    %27 = vector.broadcast %cst_23 : f32 to vector<64x1xf32>
    %28 = arith.divf %26, %27 : vector<64x1xf32>
    %29 = vector.broadcast %28 : vector<64x1xf32> to vector<64x32xf32>
    %30 = arith.subf %20, %29 : vector<64x32xf32>
    %31 = arith.mulf %30, %30 : vector<64x32xf32>
    %cst_24 = arith.constant dense<0.000000e+00> : vector<64xf32>
    %32 = vector.multi_reduction <add>, %31, %cst_24 [1] : vector<64x32xf32> to vector<64xf32>
    %33 = vector.shape_cast %32 : vector<64xf32> to vector<64x1xf32>
    %cst_25 = arith.constant 3.200000e+01 : f32
    %34 = vector.broadcast %cst_25 : f32 to vector<64x1xf32>
    %35 = arith.divf %33, %34 : vector<64x1xf32>
    %cst_26 = arith.constant 9.99999974E-6 : f32
    %36 = vector.broadcast %cst_26 : f32 to vector<64x1xf32>
    %37 = arith.addf %35, %36 : vector<64x1xf32>
    %38 = math.rsqrt %37 : vector<64x1xf32>
    %39 = vector.broadcast %38 : vector<64x1xf32> to vector<64x32xf32>
    %40 = arith.mulf %30, %39 : vector<64x32xf32>
    %41 = vector.broadcast %22 : vector<1x32xf32> to vector<64x32xf32>
    %42 = arith.mulf %40, %41 : vector<64x32xf32>
    %43 = vector.broadcast %24 : vector<1x32xf32> to vector<64x32xf32>
    %44 = arith.addf %42, %43 : vector<64x32xf32>
    %c0_27 = arith.constant 0 : index
    %c0_28 = arith.constant 0 : index
    %c0_29 = arith.constant 0 : index
    %45 = vector.load %arg10[%c0_27, %c0_28, %c0_29] : memref<2x32x32xbf16, #tpu.memory_space<vmem>>, vector<1x32x32xbf16>
    %46 = vector.shape_cast %45 : vector<1x32x32xbf16> to vector<32x32xbf16>
    %47 = arith.truncf %44 : vector<64x32xf32> to vector<64x32xbf16>
    %cst_30 = arith.constant dense<0.000000e+00> : vector<64x32xf32>
    %48 = tpu.matmul %47, %46, %cst_30 {dimension_numbers = #tpu.dot_dimension_numbers<[1], [0], [0], [1], [0, 0, 1, 1], [], []>} : vector<64x32xbf16>, vector<32x32xbf16>, vector<64x32xf32> -> vector<64x32xf32>
    %c0_31 = arith.constant 0 : index
    %c0_32 = arith.constant 0 : index
    %c0_33 = arith.constant 0 : index
    %49 = vector.load %arg11[%c0_31, %c0_32, %c0_33] : memref<2x1x32xf32, #tpu.memory_space<vmem>>, vector<1x1x32xf32>
    %50 = vector.shape_cast %49 : vector<1x1x32xf32> to vector<1x32xf32>
    %51 = vector.broadcast %50 : vector<1x32xf32> to vector<64x32xf32>
    %52 = arith.addf %48, %51 : vector<64x32xf32>
    %cst_34 = arith.constant 0.000000e+00 : f32
    %53 = vector.broadcast %cst_34 : f32 to vector<64x32xf32>
    %54 = arith.maximumf %52, %53 : vector<64x32xf32>
    %c0_35 = arith.constant 0 : index
    %c0_36 = arith.constant 0 : index
    %c0_37 = arith.constant 0 : index
    %55 = vector.load %arg12[%c0_35, %c0_36, %c0_37] : memref<2x1x32xf32, #tpu.memory_space<vmem>>, vector<1x1x32xf32>
    %56 = vector.shape_cast %55 : vector<1x1x32xf32> to vector<1x32xf32>
    %c0_38 = arith.constant 0 : index
    %c0_39 = arith.constant 0 : index
    %c0_40 = arith.constant 0 : index
    %57 = vector.load %arg13[%c0_38, %c0_39, %c0_40] : memref<2x1x32xf32, #tpu.memory_space<vmem>>, vector<1x1x32xf32>
    %58 = vector.shape_cast %57 : vector<1x1x32xf32> to vector<1x32xf32>
    %cst_41 = arith.constant dense<0.000000e+00> : vector<64xf32>
    %59 = vector.multi_reduction <add>, %54, %cst_41 [1] : vector<64x32xf32> to vector<64xf32>
    %60 = vector.shape_cast %59 : vector<64xf32> to vector<64x1xf32>
    %cst_42 = arith.constant 3.200000e+01 : f32
    %61 = vector.broadcast %cst_42 : f32 to vector<64x1xf32>
    %62 = arith.divf %60, %61 : vector<64x1xf32>
    %63 = vector.broadcast %62 : vector<64x1xf32> to vector<64x32xf32>
    %64 = arith.subf %54, %63 : vector<64x32xf32>
    %65 = arith.mulf %64, %64 : vector<64x32xf32>
    %cst_43 = arith.constant dense<0.000000e+00> : vector<64xf32>
    %66 = vector.multi_reduction <add>, %65, %cst_43 [1] : vector<64x32xf32> to vector<64xf32>
    %67 = vector.shape_cast %66 : vector<64xf32> to vector<64x1xf32>
    %cst_44 = arith.constant 3.200000e+01 : f32
    %68 = vector.broadcast %cst_44 : f32 to vector<64x1xf32>
    %69 = arith.divf %67, %68 : vector<64x1xf32>
    %cst_45 = arith.constant 9.99999974E-6 : f32
    %70 = vector.broadcast %cst_45 : f32 to vector<64x1xf32>
    %71 = arith.addf %69, %70 : vector<64x1xf32>
    %72 = math.rsqrt %71 : vector<64x1xf32>
    %73 = vector.broadcast %72 : vector<64x1xf32> to vector<64x32xf32>
    %74 = arith.mulf %64, %73 : vector<64x32xf32>
    %75 = vector.broadcast %56 : vector<1x32xf32> to vector<64x32xf32>
    %76 = arith.mulf %74, %75 : vector<64x32xf32>
    %77 = vector.broadcast %58 : vector<1x32xf32> to vector<64x32xf32>
    %78 = arith.addf %76, %77 : vector<64x32xf32>
    %c1 = arith.constant 1 : index
    %c0_46 = arith.constant 0 : index
    %c0_47 = arith.constant 0 : index
    %79 = vector.load %arg4[%c1, %c0_46, %c0_47] : memref<2x24x32xbf16, #tpu.memory_space<vmem>>, vector<1x24x32xbf16>
    %80 = vector.shape_cast %79 : vector<1x24x32xbf16> to vector<24x32xbf16>
    %81 = arith.truncf %0 : vector<64x24xf32> to vector<64x24xbf16>
    %cst_48 = arith.constant dense<0.000000e+00> : vector<64x32xf32>
    %82 = tpu.matmul %81, %80, %cst_48 {dimension_numbers = #tpu.dot_dimension_numbers<[1], [0], [0], [1], [0, 0, 1, 1], [], []>} : vector<64x24xbf16>, vector<24x32xbf16>, vector<64x32xf32> -> vector<64x32xf32>
    %c1_49 = arith.constant 1 : index
    %c0_50 = arith.constant 0 : index
    %c0_51 = arith.constant 0 : index
    %83 = vector.load %arg5[%c1_49, %c0_50, %c0_51] : memref<2x1x32xf32, #tpu.memory_space<vmem>>, vector<1x1x32xf32>
    %84 = vector.shape_cast %83 : vector<1x1x32xf32> to vector<1x32xf32>
    %85 = vector.broadcast %84 : vector<1x32xf32> to vector<64x32xf32>
    %86 = arith.addf %82, %85 : vector<64x32xf32>
    %cst_52 = arith.constant 0.000000e+00 : f32
    %87 = vector.broadcast %cst_52 : f32 to vector<64x32xf32>
    %88 = arith.maximumf %86, %87 : vector<64x32xf32>
    %c1_53 = arith.constant 1 : index
    %c0_54 = arith.constant 0 : index
    %c0_55 = arith.constant 0 : index
    %89 = vector.load %arg6[%c1_53, %c0_54, %c0_55] : memref<2x32x32xbf16, #tpu.memory_space<vmem>>, vector<1x32x32xbf16>
    %90 = vector.shape_cast %89 : vector<1x32x32xbf16> to vector<32x32xbf16>
    %91 = arith.truncf %88 : vector<64x32xf32> to vector<64x32xbf16>
    %cst_56 = arith.constant dense<0.000000e+00> : vector<64x32xf32>
    %92 = tpu.matmul %91, %90, %cst_56 {dimension_numbers = #tpu.dot_dimension_numbers<[1], [0], [0], [1], [0, 0, 1, 1], [], []>} : vector<64x32xbf16>, vector<32x32xbf16>, vector<64x32xf32> -> vector<64x32xf32>
    %c1_57 = arith.constant 1 : index
    %c0_58 = arith.constant 0 : index
    %c0_59 = arith.constant 0 : index
    %93 = vector.load %arg7[%c1_57, %c0_58, %c0_59] : memref<2x1x32xf32, #tpu.memory_space<vmem>>, vector<1x1x32xf32>
    %94 = vector.shape_cast %93 : vector<1x1x32xf32> to vector<1x32xf32>
    %95 = vector.broadcast %94 : vector<1x32xf32> to vector<64x32xf32>
    %96 = arith.addf %92, %95 : vector<64x32xf32>
    %cst_60 = arith.constant 0.000000e+00 : f32
    %97 = vector.broadcast %cst_60 : f32 to vector<64x32xf32>
    %98 = arith.maximumf %96, %97 : vector<64x32xf32>
    %c1_61 = arith.constant 1 : index
    %c0_62 = arith.constant 0 : index
    %c0_63 = arith.constant 0 : index
    %99 = vector.load %arg8[%c1_61, %c0_62, %c0_63] : memref<2x1x32xf32, #tpu.memory_space<vmem>>, vector<1x1x32xf32>
    %100 = vector.shape_cast %99 : vector<1x1x32xf32> to vector<1x32xf32>
    %c1_64 = arith.constant 1 : index
    %c0_65 = arith.constant 0 : index
    %c0_66 = arith.constant 0 : index
    %101 = vector.load %arg9[%c1_64, %c0_65, %c0_66] : memref<2x1x32xf32, #tpu.memory_space<vmem>>, vector<1x1x32xf32>
    %102 = vector.shape_cast %101 : vector<1x1x32xf32> to vector<1x32xf32>
    %cst_67 = arith.constant dense<0.000000e+00> : vector<64xf32>
    %103 = vector.multi_reduction <add>, %98, %cst_67 [1] : vector<64x32xf32> to vector<64xf32>
    %104 = vector.shape_cast %103 : vector<64xf32> to vector<64x1xf32>
    %cst_68 = arith.constant 3.200000e+01 : f32
    %105 = vector.broadcast %cst_68 : f32 to vector<64x1xf32>
    %106 = arith.divf %104, %105 : vector<64x1xf32>
    %107 = vector.broadcast %106 : vector<64x1xf32> to vector<64x32xf32>
    %108 = arith.subf %98, %107 : vector<64x32xf32>
    %109 = arith.mulf %108, %108 : vector<64x32xf32>
    %cst_69 = arith.constant dense<0.000000e+00> : vector<64xf32>
    %110 = vector.multi_reduction <add>, %109, %cst_69 [1] : vector<64x32xf32> to vector<64xf32>
    %111 = vector.shape_cast %110 : vector<64xf32> to vector<64x1xf32>
    %cst_70 = arith.constant 3.200000e+01 : f32
    %112 = vector.broadcast %cst_70 : f32 to vector<64x1xf32>
    %113 = arith.divf %111, %112 : vector<64x1xf32>
    %cst_71 = arith.constant 9.99999974E-6 : f32
    %114 = vector.broadcast %cst_71 : f32 to vector<64x1xf32>
    %115 = arith.addf %113, %114 : vector<64x1xf32>
    %116 = math.rsqrt %115 : vector<64x1xf32>
    %117 = vector.broadcast %116 : vector<64x1xf32> to vector<64x32xf32>
    %118 = arith.mulf %108, %117 : vector<64x32xf32>
    %119 = vector.broadcast %100 : vector<1x32xf32> to vector<64x32xf32>
    %120 = arith.mulf %118, %119 : vector<64x32xf32>
    %121 = vector.broadcast %102 : vector<1x32xf32> to vector<64x32xf32>
    %122 = arith.addf %120, %121 : vector<64x32xf32>
    %c1_72 = arith.constant 1 : index
    %c0_73 = arith.constant 0 : index
    %c0_74 = arith.constant 0 : index
    %123 = vector.load %arg10[%c1_72, %c0_73, %c0_74] : memref<2x32x32xbf16, #tpu.memory_space<vmem>>, vector<1x32x32xbf16>
    %124 = vector.shape_cast %123 : vector<1x32x32xbf16> to vector<32x32xbf16>
    %125 = arith.truncf %122 : vector<64x32xf32> to vector<64x32xbf16>
    %cst_75 = arith.constant dense<0.000000e+00> : vector<64x32xf32>
    %126 = tpu.matmul %125, %124, %cst_75 {dimension_numbers = #tpu.dot_dimension_numbers<[1], [0], [0], [1], [0, 0, 1, 1], [], []>} : vector<64x32xbf16>, vector<32x32xbf16>, vector<64x32xf32> -> vector<64x32xf32>
    %c1_76 = arith.constant 1 : index
    %c0_77 = arith.constant 0 : index
    %c0_78 = arith.constant 0 : index
    %127 = vector.load %arg11[%c1_76, %c0_77, %c0_78] : memref<2x1x32xf32, #tpu.memory_space<vmem>>, vector<1x1x32xf32>
    %128 = vector.shape_cast %127 : vector<1x1x32xf32> to vector<1x32xf32>
    %129 = vector.broadcast %128 : vector<1x32xf32> to vector<64x32xf32>
    %130 = arith.addf %126, %129 : vector<64x32xf32>
    %cst_79 = arith.constant 0.000000e+00 : f32
    %131 = vector.broadcast %cst_79 : f32 to vector<64x32xf32>
    %132 = arith.maximumf %130, %131 : vector<64x32xf32>
    %c1_80 = arith.constant 1 : index
    %c0_81 = arith.constant 0 : index
    %c0_82 = arith.constant 0 : index
    %133 = vector.load %arg12[%c1_80, %c0_81, %c0_82] : memref<2x1x32xf32, #tpu.memory_space<vmem>>, vector<1x1x32xf32>
    %134 = vector.shape_cast %133 : vector<1x1x32xf32> to vector<1x32xf32>
    %c1_83 = arith.constant 1 : index
    %c0_84 = arith.constant 0 : index
    %c0_85 = arith.constant 0 : index
    %135 = vector.load %arg13[%c1_83, %c0_84, %c0_85] : memref<2x1x32xf32, #tpu.memory_space<vmem>>, vector<1x1x32xf32>
    %136 = vector.shape_cast %135 : vector<1x1x32xf32> to vector<1x32xf32>
    %cst_86 = arith.constant dense<0.000000e+00> : vector<64xf32>
    %137 = vector.multi_reduction <add>, %132, %cst_86 [1] : vector<64x32xf32> to vector<64xf32>
    %138 = vector.shape_cast %137 : vector<64xf32> to vector<64x1xf32>
    %cst_87 = arith.constant 3.200000e+01 : f32
    %139 = vector.broadcast %cst_87 : f32 to vector<64x1xf32>
    %140 = arith.divf %138, %139 : vector<64x1xf32>
    %141 = vector.broadcast %140 : vector<64x1xf32> to vector<64x32xf32>
    %142 = arith.subf %132, %141 : vector<64x32xf32>
    %143 = arith.mulf %142, %142 : vector<64x32xf32>
    %cst_88 = arith.constant dense<0.000000e+00> : vector<64xf32>
    %144 = vector.multi_reduction <add>, %143, %cst_88 [1] : vector<64x32xf32> to vector<64xf32>
    %145 = vector.shape_cast %144 : vector<64xf32> to vector<64x1xf32>
    %cst_89 = arith.constant 3.200000e+01 : f32
    %146 = vector.broadcast %cst_89 : f32 to vector<64x1xf32>
    %147 = arith.divf %145, %146 : vector<64x1xf32>
    %cst_90 = arith.constant 9.99999974E-6 : f32
    %148 = vector.broadcast %cst_90 : f32 to vector<64x1xf32>
    %149 = arith.addf %147, %148 : vector<64x1xf32>
    %150 = math.rsqrt %149 : vector<64x1xf32>
    %151 = vector.broadcast %150 : vector<64x1xf32> to vector<64x32xf32>
    %152 = arith.mulf %142, %151 : vector<64x32xf32>
    %153 = vector.broadcast %134 : vector<1x32xf32> to vector<64x32xf32>
    %154 = arith.mulf %152, %153 : vector<64x32xf32>
    %155 = vector.broadcast %136 : vector<1x32xf32> to vector<64x32xf32>
    %156 = arith.addf %154, %155 : vector<64x32xf32>
    %c0_91 = arith.constant 0 : index
    %c0_92 = arith.constant 0 : index
    %c0_93 = arith.constant 0 : index
    %157 = vector.load %arg14[%c0_91, %c0_92, %c0_93] : memref<2x32x384xbf16, #tpu.memory_space<vmem>>, vector<1x32x384xbf16>
    %158 = vector.shape_cast %157 : vector<1x32x384xbf16> to vector<32x384xbf16>
    %159 = arith.truncf %78 : vector<64x32xf32> to vector<64x32xbf16>
    %cst_94 = arith.constant dense<0.000000e+00> : vector<64x384xf32>
    %160 = tpu.matmul %159, %158, %cst_94 {dimension_numbers = #tpu.dot_dimension_numbers<[1], [0], [0], [1], [0, 0, 1, 1], [], []>} : vector<64x32xbf16>, vector<32x384xbf16>, vector<64x384xf32> -> vector<64x384xf32>
    %c1_95 = arith.constant 1 : index
    %c0_96 = arith.constant 0 : index
    %c0_97 = arith.constant 0 : index
    %161 = vector.load %arg14[%c1_95, %c0_96, %c0_97] : memref<2x32x384xbf16, #tpu.memory_space<vmem>>, vector<1x32x384xbf16>
    %162 = vector.shape_cast %161 : vector<1x32x384xbf16> to vector<32x384xbf16>
    %163 = arith.truncf %156 : vector<64x32xf32> to vector<64x32xbf16>
    %cst_98 = arith.constant dense<0.000000e+00> : vector<64x384xf32>
    %164 = tpu.matmul %163, %162, %cst_98 {dimension_numbers = #tpu.dot_dimension_numbers<[1], [0], [0], [1], [0, 0, 1, 1], [], []>} : vector<64x32xbf16>, vector<32x384xbf16>, vector<64x384xf32> -> vector<64x384xf32>
    %165 = arith.addf %160, %164 : vector<64x384xf32>
    %c0_99 = arith.constant 0 : index
    %c0_100 = arith.constant 0 : index
    %166 = vector.load %arg16[%c0_99, %c0_100] : memref<1x384xf32, #tpu.memory_space<vmem>>, vector<1x384xf32>
    %167 = vector.broadcast %166 : vector<1x384xf32> to vector<64x384xf32>
    %168 = arith.addf %165, %167 : vector<64x384xf32>
    %c0_101 = arith.constant 0 : index
    %c0_102 = arith.constant 0 : index
    %169 = vector.load %arg25[%c0_101, %c0_102] : memref<64x384xf32, #tpu.memory_space<vmem>>, vector<64x384xf32>
    tpu.vector_store %arg25[%c0_101, %c0_102], %168 {strides = array<i32>} : memref<64x384xf32, #tpu.memory_space<vmem>>, vector<64x384xf32>,
    %c0_103 = arith.constant 0 : index
    %c0_104 = arith.constant 0 : index
    %170 = vector.load %arg17[%c0_103, %c0_104] : memref<8x128xf32, #tpu.memory_space<vmem>>, vector<8x128xf32>
    %c0_105 = arith.constant 0 : index
    %c0_106 = arith.constant 0 : index
    %171 = vector.load %arg3[%c0_105, %c0_106] : memref<8x128xf32, #tpu.memory_space<vmem>>, vector<8x128xf32>
    %c0_107 = arith.constant 0 : index
    %c0_108 = arith.constant 0 : index
    %172 = vector.load %arg2[%c0_107, %c0_108] : memref<64x128xf32, #tpu.memory_space<vmem>>, vector<8x128xf32>
    %173 = arith.mulf %171, %172 : vector<8x128xf32>
    %c0_109 = arith.constant 0 : index
    %c0_110 = arith.constant 0 : index
    %174 = vector.load %arg25[%c0_109, %c0_110] : memref<64x384xf32, #tpu.memory_space<vmem>>, vector<8x384xf32>
    %c0_111 = arith.constant 0 : index
    %c0_112 = arith.constant 0 : index
    %175 = vector.load %arg15[%c0_111, %c0_112] : memref<128x384xbf16, #tpu.memory_space<vmem>>, vector<128x384xbf16>
    %176 = arith.truncf %173 : vector<8x128xf32> to vector<8x128xbf16>
    %cst_113 = arith.constant dense<0.000000e+00> : vector<8x384xf32>
    %177 = tpu.matmul %176, %175, %cst_113 {dimension_numbers = #tpu.dot_dimension_numbers<[1], [0], [0], [1], [0, 0, 1, 1], [], []>} : vector<8x128xbf16>, vector<128x384xbf16>, vector<8x384xf32> -> vector<8x384xf32>
    %178 = vector.extract_strided_slice %174 {offsets = [0, 0], sizes = [8, 128], strides = [1, 1]} : vector<8x384xf32> to vector<8x128xf32>
    %179 = vector.extract_strided_slice %177 {offsets = [0, 0], sizes = [8, 128], strides = [1, 1]} : vector<8x384xf32> to vector<8x128xf32>
    %180 = arith.addf %178, %179 : vector<8x128xf32>
    %cst_114 = arith.constant 5.000000e-01 : f32
    %181 = vector.broadcast %cst_114 : f32 to vector<8x128xf32>
    %182 = arith.mulf %181, %180 : vector<8x128xf32>
    %183 = math.tanh %182 : vector<8x128xf32>
    %cst_115 = arith.constant 1.000000e+00 : f32
    %184 = vector.broadcast %cst_115 : f32 to vector<8x128xf32>
    %185 = arith.addf %183, %184 : vector<8x128xf32>
    %cst_116 = arith.constant 5.000000e-01 : f32
    %186 = vector.broadcast %cst_116 : f32 to vector<8x128xf32>
    %187 = arith.mulf %186, %185 : vector<8x128xf32>
    %188 = vector.extract_strided_slice %174 {offsets = [0, 128], sizes = [8, 128], strides = [1, 1]} : vector<8x384xf32> to vector<8x128xf32>
    %189 = vector.extract_strided_slice %177 {offsets = [0, 128], sizes = [8, 128], strides = [1, 1]} : vector<8x384xf32> to vector<8x128xf32>
    %190 = arith.addf %188, %189 : vector<8x128xf32>
    %cst_117 = arith.constant 5.000000e-01 : f32
    %191 = vector.broadcast %cst_117 : f32 to vector<8x128xf32>
    %192 = arith.mulf %191, %190 : vector<8x128xf32>
    %193 = math.tanh %192 : vector<8x128xf32>
    %cst_118 = arith.constant 1.000000e+00 : f32
    %194 = vector.broadcast %cst_118 : f32 to vector<8x128xf32>
    %195 = arith.addf %193, %194 : vector<8x128xf32>
    %cst_119 = arith.constant 5.000000e-01 : f32
    %196 = vector.broadcast %cst_119 : f32 to vector<8x128xf32>
    %197 = arith.mulf %196, %195 : vector<8x128xf32>
    %198 = vector.extract_strided_slice %174 {offsets = [0, 256], sizes = [8, 128], strides = [1, 1]} : vector<8x384xf32> to vector<8x128xf32>
    %199 = vector.extract_strided_slice %177 {offsets = [0, 256], sizes = [8, 128], strides = [1, 1]} : vector<8x384xf32> to vector<8x128xf32>
    %200 = arith.addf %199, %170 : vector<8x128xf32>
    %201 = arith.mulf %187, %200 : vector<8x128xf32>
    %202 = arith.addf %198, %201 : vector<8x128xf32>
    %203 = math.tanh %202 : vector<8x128xf32>
    %cst_120 = arith.constant 1.000000e+00 : f32
    %204 = vector.broadcast %cst_120 : f32 to vector<8x128xf32>
    %205 = arith.subf %204, %197 : vector<8x128xf32>
    %206 = arith.mulf %205, %203 : vector<8x128xf32>
    %207 = arith.mulf %197, %173 : vector<8x128xf32>
    %208 = arith.addf %206, %207 : vector<8x128xf32>
    %c0_121 = arith.constant 0 : index
    %c0_122 = arith.constant 0 : index
    %209 = vector.load %arg26[%c0_121, %c0_122] : memref<64x128xf32, #tpu.memory_space<vmem>>, vector<8x128xf32>
    tpu.vector_store %arg26[%c0_121, %c0_122], %208 {strides = array<i32>} : memref<64x128xf32, #tpu.memory_space<vmem>>, vector<8x128xf32>,
    %c8 = arith.constant 8 : index
    %c0_123 = arith.constant 0 : index
    %210 = vector.load %arg2[%c8, %c0_123] : memref<64x128xf32, #tpu.memory_space<vmem>>, vector<8x128xf32>
    %211 = arith.mulf %208, %210 : vector<8x128xf32>
    %c8_124 = arith.constant 8 : index
    %c0_125 = arith.constant 0 : index
    %212 = vector.load %arg25[%c8_124, %c0_125] : memref<64x384xf32, #tpu.memory_space<vmem>>, vector<8x384xf32>
    %c0_126 = arith.constant 0 : index
    %c0_127 = arith.constant 0 : index
    %213 = vector.load %arg15[%c0_126, %c0_127] : memref<128x384xbf16, #tpu.memory_space<vmem>>, vector<128x384xbf16>
    %214 = arith.truncf %211 : vector<8x128xf32> to vector<8x128xbf16>
    %cst_128 = arith.constant dense<0.000000e+00> : vector<8x384xf32>
    %215 = tpu.matmul %214, %213, %cst_128 {dimension_numbers = #tpu.dot_dimension_numbers<[1], [0], [0], [1], [0, 0, 1, 1], [], []>} : vector<8x128xbf16>, vector<128x384xbf16>, vector<8x384xf32> -> vector<8x384xf32>
    %216 = vector.extract_strided_slice %212 {offsets = [0, 0], sizes = [8, 128], strides = [1, 1]} : vector<8x384xf32> to vector<8x128xf32>
    %217 = vector.extract_strided_slice %215 {offsets = [0, 0], sizes = [8, 128], strides = [1, 1]} : vector<8x384xf32> to vector<8x128xf32>
    %218 = arith.addf %216, %217 : vector<8x128xf32>
    %cst_129 = arith.constant 5.000000e-01 : f32
    %219 = vector.broadcast %cst_129 : f32 to vector<8x128xf32>
    %220 = arith.mulf %219, %218 : vector<8x128xf32>
    %221 = math.tanh %220 : vector<8x128xf32>
    %cst_130 = arith.constant 1.000000e+00 : f32
    %222 = vector.broadcast %cst_130 : f32 to vector<8x128xf32>
    %223 = arith.addf %221, %222 : vector<8x128xf32>
    %cst_131 = arith.constant 5.000000e-01 : f32
    %224 = vector.broadcast %cst_131 : f32 to vector<8x128xf32>
    %225 = arith.mulf %224, %223 : vector<8x128xf32>
    %226 = vector.extract_strided_slice %212 {offsets = [0, 128], sizes = [8, 128], strides = [1, 1]} : vector<8x384xf32> to vector<8x128xf32>
    %227 = vector.extract_strided_slice %215 {offsets = [0, 128], sizes = [8, 128], strides = [1, 1]} : vector<8x384xf32> to vector<8x128xf32>
    %228 = arith.addf %226, %227 : vector<8x128xf32>
    %cst_132 = arith.constant 5.000000e-01 : f32
    %229 = vector.broadcast %cst_132 : f32 to vector<8x128xf32>
    %230 = arith.mulf %229, %228 : vector<8x128xf32>
    %231 = math.tanh %230 : vector<8x128xf32>
    %cst_133 = arith.constant 1.000000e+00 : f32
    %232 = vector.broadcast %cst_133 : f32 to vector<8x128xf32>
    %233 = arith.addf %231, %232 : vector<8x128xf32>
    %cst_134 = arith.constant 5.000000e-01 : f32
    %234 = vector.broadcast %cst_134 : f32 to vector<8x128xf32>
    %235 = arith.mulf %234, %233 : vector<8x128xf32>
    %236 = vector.extract_strided_slice %212 {offsets = [0, 256], sizes = [8, 128], strides = [1, 1]} : vector<8x384xf32> to vector<8x128xf32>
    %237 = vector.extract_strided_slice %215 {offsets = [0, 256], sizes = [8, 128], strides = [1, 1]} : vector<8x384xf32> to vector<8x128xf32>
    %238 = arith.addf %237, %170 : vector<8x128xf32>
    %239 = arith.mulf %225, %238 : vector<8x128xf32>
    %240 = arith.addf %236, %239 : vector<8x128xf32>
    %241 = math.tanh %240 : vector<8x128xf32>
    %cst_135 = arith.constant 1.000000e+00 : f32
    %242 = vector.broadcast %cst_135 : f32 to vector<8x128xf32>
    %243 = arith.subf %242, %235 : vector<8x128xf32>
    %244 = arith.mulf %243, %241 : vector<8x128xf32>
    %245 = arith.mulf %235, %211 : vector<8x128xf32>
    %246 = arith.addf %244, %245 : vector<8x128xf32>
    %c8_136 = arith.constant 8 : index
    %c0_137 = arith.constant 0 : index
    %247 = vector.load %arg26[%c8_136, %c0_137] : memref<64x128xf32, #tpu.memory_space<vmem>>, vector<8x128xf32>
    tpu.vector_store %arg26[%c8_136, %c0_137], %246 {strides = array<i32>} : memref<64x128xf32, #tpu.memory_space<vmem>>, vector<8x128xf32>,
    %c16 = arith.constant 16 : index
    %c0_138 = arith.constant 0 : index
    %248 = vector.load %arg2[%c16, %c0_138] : memref<64x128xf32, #tpu.memory_space<vmem>>, vector<8x128xf32>
    %249 = arith.mulf %246, %248 : vector<8x128xf32>
    %c16_139 = arith.constant 16 : index
    %c0_140 = arith.constant 0 : index
    %250 = vector.load %arg25[%c16_139, %c0_140] : memref<64x384xf32, #tpu.memory_space<vmem>>, vector<8x384xf32>
    %c0_141 = arith.constant 0 : index
    %c0_142 = arith.constant 0 : index
    %251 = vector.load %arg15[%c0_141, %c0_142] : memref<128x384xbf16, #tpu.memory_space<vmem>>, vector<128x384xbf16>
    %252 = arith.truncf %249 : vector<8x128xf32> to vector<8x128xbf16>
    %cst_143 = arith.constant dense<0.000000e+00> : vector<8x384xf32>
    %253 = tpu.matmul %252, %251, %cst_143 {dimension_numbers = #tpu.dot_dimension_numbers<[1], [0], [0], [1], [0, 0, 1, 1], [], []>} : vector<8x128xbf16>, vector<128x384xbf16>, vector<8x384xf32> -> vector<8x384xf32>
    %254 = vector.extract_strided_slice %250 {offsets = [0, 0], sizes = [8, 128], strides = [1, 1]} : vector<8x384xf32> to vector<8x128xf32>
    %255 = vector.extract_strided_slice %253 {offsets = [0, 0], sizes = [8, 128], strides = [1, 1]} : vector<8x384xf32> to vector<8x128xf32>
    %256 = arith.addf %254, %255 : vector<8x128xf32>
    %cst_144 = arith.constant 5.000000e-01 : f32
    %257 = vector.broadcast %cst_144 : f32 to vector<8x128xf32>
    %258 = arith.mulf %257, %256 : vector<8x128xf32>
    %259 = math.tanh %258 : vector<8x128xf32>
    %cst_145 = arith.constant 1.000000e+00 : f32
    %260 = vector.broadcast %cst_145 : f32 to vector<8x128xf32>
    %261 = arith.addf %259, %260 : vector<8x128xf32>
    %cst_146 = arith.constant 5.000000e-01 : f32
    %262 = vector.broadcast %cst_146 : f32 to vector<8x128xf32>
    %263 = arith.mulf %262, %261 : vector<8x128xf32>
    %264 = vector.extract_strided_slice %250 {offsets = [0, 128], sizes = [8, 128], strides = [1, 1]} : vector<8x384xf32> to vector<8x128xf32>
    %265 = vector.extract_strided_slice %253 {offsets = [0, 128], sizes = [8, 128], strides = [1, 1]} : vector<8x384xf32> to vector<8x128xf32>
    %266 = arith.addf %264, %265 : vector<8x128xf32>
    %cst_147 = arith.constant 5.000000e-01 : f32
    %267 = vector.broadcast %cst_147 : f32 to vector<8x128xf32>
    %268 = arith.mulf %267, %266 : vector<8x128xf32>
    %269 = math.tanh %268 : vector<8x128xf32>
    %cst_148 = arith.constant 1.000000e+00 : f32
    %270 = vector.broadcast %cst_148 : f32 to vector<8x128xf32>
    %271 = arith.addf %269, %270 : vector<8x128xf32>
    %cst_149 = arith.constant 5.000000e-01 : f32
    %272 = vector.broadcast %cst_149 : f32 to vector<8x128xf32>
    %273 = arith.mulf %272, %271 : vector<8x128xf32>
    %274 = vector.extract_strided_slice %250 {offsets = [0, 256], sizes = [8, 128], strides = [1, 1]} : vector<8x384xf32> to vector<8x128xf32>
    %275 = vector.extract_strided_slice %253 {offsets = [0, 256], sizes = [8, 128], strides = [1, 1]} : vector<8x384xf32> to vector<8x128xf32>
    %276 = arith.addf %275, %170 : vector<8x128xf32>
    %277 = arith.mulf %263, %276 : vector<8x128xf32>
    %278 = arith.addf %274, %277 : vector<8x128xf32>
    %279 = math.tanh %278 : vector<8x128xf32>
    %cst_150 = arith.constant 1.000000e+00 : f32
    %280 = vector.broadcast %cst_150 : f32 to vector<8x128xf32>
    %281 = arith.subf %280, %273 : vector<8x128xf32>
    %282 = arith.mulf %281, %279 : vector<8x128xf32>
    %283 = arith.mulf %273, %249 : vector<8x128xf32>
    %284 = arith.addf %282, %283 : vector<8x128xf32>
    %c16_151 = arith.constant 16 : index
    %c0_152 = arith.constant 0 : index
    %285 = vector.load %arg26[%c16_151, %c0_152] : memref<64x128xf32, #tpu.memory_space<vmem>>, vector<8x128xf32>
    tpu.vector_store %arg26[%c16_151, %c0_152], %284 {strides = array<i32>} : memref<64x128xf32, #tpu.memory_space<vmem>>, vector<8x128xf32>,
    %c24 = arith.constant 24 : index
    %c0_153 = arith.constant 0 : index
    %286 = vector.load %arg2[%c24, %c0_153] : memref<64x128xf32, #tpu.memory_space<vmem>>, vector<8x128xf32>
    %287 = arith.mulf %284, %286 : vector<8x128xf32>
    %c24_154 = arith.constant 24 : index
    %c0_155 = arith.constant 0 : index
    %288 = vector.load %arg25[%c24_154, %c0_155] : memref<64x384xf32, #tpu.memory_space<vmem>>, vector<8x384xf32>
    %c0_156 = arith.constant 0 : index
    %c0_157 = arith.constant 0 : index
    %289 = vector.load %arg15[%c0_156, %c0_157] : memref<128x384xbf16, #tpu.memory_space<vmem>>, vector<128x384xbf16>
    %290 = arith.truncf %287 : vector<8x128xf32> to vector<8x128xbf16>
    %cst_158 = arith.constant dense<0.000000e+00> : vector<8x384xf32>
    %291 = tpu.matmul %290, %289, %cst_158 {dimension_numbers = #tpu.dot_dimension_numbers<[1], [0], [0], [1], [0, 0, 1, 1], [], []>} : vector<8x128xbf16>, vector<128x384xbf16>, vector<8x384xf32> -> vector<8x384xf32>
    %292 = vector.extract_strided_slice %288 {offsets = [0, 0], sizes = [8, 128], strides = [1, 1]} : vector<8x384xf32> to vector<8x128xf32>
    %293 = vector.extract_strided_slice %291 {offsets = [0, 0], sizes = [8, 128], strides = [1, 1]} : vector<8x384xf32> to vector<8x128xf32>
    %294 = arith.addf %292, %293 : vector<8x128xf32>
    %cst_159 = arith.constant 5.000000e-01 : f32
    %295 = vector.broadcast %cst_159 : f32 to vector<8x128xf32>
    %296 = arith.mulf %295, %294 : vector<8x128xf32>
    %297 = math.tanh %296 : vector<8x128xf32>
    %cst_160 = arith.constant 1.000000e+00 : f32
    %298 = vector.broadcast %cst_160 : f32 to vector<8x128xf32>
    %299 = arith.addf %297, %298 : vector<8x128xf32>
    %cst_161 = arith.constant 5.000000e-01 : f32
    %300 = vector.broadcast %cst_161 : f32 to vector<8x128xf32>
    %301 = arith.mulf %300, %299 : vector<8x128xf32>
    %302 = vector.extract_strided_slice %288 {offsets = [0, 128], sizes = [8, 128], strides = [1, 1]} : vector<8x384xf32> to vector<8x128xf32>
    %303 = vector.extract_strided_slice %291 {offsets = [0, 128], sizes = [8, 128], strides = [1, 1]} : vector<8x384xf32> to vector<8x128xf32>
    %304 = arith.addf %302, %303 : vector<8x128xf32>
    %cst_162 = arith.constant 5.000000e-01 : f32
    %305 = vector.broadcast %cst_162 : f32 to vector<8x128xf32>
    %306 = arith.mulf %305, %304 : vector<8x128xf32>
    %307 = math.tanh %306 : vector<8x128xf32>
    %cst_163 = arith.constant 1.000000e+00 : f32
    %308 = vector.broadcast %cst_163 : f32 to vector<8x128xf32>
    %309 = arith.addf %307, %308 : vector<8x128xf32>
    %cst_164 = arith.constant 5.000000e-01 : f32
    %310 = vector.broadcast %cst_164 : f32 to vector<8x128xf32>
    %311 = arith.mulf %310, %309 : vector<8x128xf32>
    %312 = vector.extract_strided_slice %288 {offsets = [0, 256], sizes = [8, 128], strides = [1, 1]} : vector<8x384xf32> to vector<8x128xf32>
    %313 = vector.extract_strided_slice %291 {offsets = [0, 256], sizes = [8, 128], strides = [1, 1]} : vector<8x384xf32> to vector<8x128xf32>
    %314 = arith.addf %313, %170 : vector<8x128xf32>
    %315 = arith.mulf %301, %314 : vector<8x128xf32>
    %316 = arith.addf %312, %315 : vector<8x128xf32>
    %317 = math.tanh %316 : vector<8x128xf32>
    %cst_165 = arith.constant 1.000000e+00 : f32
    %318 = vector.broadcast %cst_165 : f32 to vector<8x128xf32>
    %319 = arith.subf %318, %311 : vector<8x128xf32>
    %320 = arith.mulf %319, %317 : vector<8x128xf32>
    %321 = arith.mulf %311, %287 : vector<8x128xf32>
    %322 = arith.addf %320, %321 : vector<8x128xf32>
    %c24_166 = arith.constant 24 : index
    %c0_167 = arith.constant 0 : index
    %323 = vector.load %arg26[%c24_166, %c0_167] : memref<64x128xf32, #tpu.memory_space<vmem>>, vector<8x128xf32>
    tpu.vector_store %arg26[%c24_166, %c0_167], %322 {strides = array<i32>} : memref<64x128xf32, #tpu.memory_space<vmem>>, vector<8x128xf32>,
    %c32 = arith.constant 32 : index
    %c0_168 = arith.constant 0 : index
    %324 = vector.load %arg2[%c32, %c0_168] : memref<64x128xf32, #tpu.memory_space<vmem>>, vector<8x128xf32>
    %325 = arith.mulf %322, %324 : vector<8x128xf32>
    %c32_169 = arith.constant 32 : index
    %c0_170 = arith.constant 0 : index
    %326 = vector.load %arg25[%c32_169, %c0_170] : memref<64x384xf32, #tpu.memory_space<vmem>>, vector<8x384xf32>
    %c0_171 = arith.constant 0 : index
    %c0_172 = arith.constant 0 : index
    %327 = vector.load %arg15[%c0_171, %c0_172] : memref<128x384xbf16, #tpu.memory_space<vmem>>, vector<128x384xbf16>
    %328 = arith.truncf %325 : vector<8x128xf32> to vector<8x128xbf16>
    %cst_173 = arith.constant dense<0.000000e+00> : vector<8x384xf32>
    %329 = tpu.matmul %328, %327, %cst_173 {dimension_numbers = #tpu.dot_dimension_numbers<[1], [0], [0], [1], [0, 0, 1, 1], [], []>} : vector<8x128xbf16>, vector<128x384xbf16>, vector<8x384xf32> -> vector<8x384xf32>
    %330 = vector.extract_strided_slice %326 {offsets = [0, 0], sizes = [8, 128], strides = [1, 1]} : vector<8x384xf32> to vector<8x128xf32>
    %331 = vector.extract_strided_slice %329 {offsets = [0, 0], sizes = [8, 128], strides = [1, 1]} : vector<8x384xf32> to vector<8x128xf32>
    %332 = arith.addf %330, %331 : vector<8x128xf32>
    %cst_174 = arith.constant 5.000000e-01 : f32
    %333 = vector.broadcast %cst_174 : f32 to vector<8x128xf32>
    %334 = arith.mulf %333, %332 : vector<8x128xf32>
    %335 = math.tanh %334 : vector<8x128xf32>
    %cst_175 = arith.constant 1.000000e+00 : f32
    %336 = vector.broadcast %cst_175 : f32 to vector<8x128xf32>
    %337 = arith.addf %335, %336 : vector<8x128xf32>
    %cst_176 = arith.constant 5.000000e-01 : f32
    %338 = vector.broadcast %cst_176 : f32 to vector<8x128xf32>
    %339 = arith.mulf %338, %337 : vector<8x128xf32>
    %340 = vector.extract_strided_slice %326 {offsets = [0, 128], sizes = [8, 128], strides = [1, 1]} : vector<8x384xf32> to vector<8x128xf32>
    %341 = vector.extract_strided_slice %329 {offsets = [0, 128], sizes = [8, 128], strides = [1, 1]} : vector<8x384xf32> to vector<8x128xf32>
    %342 = arith.addf %340, %341 : vector<8x128xf32>
    %cst_177 = arith.constant 5.000000e-01 : f32
    %343 = vector.broadcast %cst_177 : f32 to vector<8x128xf32>
    %344 = arith.mulf %343, %342 : vector<8x128xf32>
    %345 = math.tanh %344 : vector<8x128xf32>
    %cst_178 = arith.constant 1.000000e+00 : f32
    %346 = vector.broadcast %cst_178 : f32 to vector<8x128xf32>
    %347 = arith.addf %345, %346 : vector<8x128xf32>
    %cst_179 = arith.constant 5.000000e-01 : f32
    %348 = vector.broadcast %cst_179 : f32 to vector<8x128xf32>
    %349 = arith.mulf %348, %347 : vector<8x128xf32>
    %350 = vector.extract_strided_slice %326 {offsets = [0, 256], sizes = [8, 128], strides = [1, 1]} : vector<8x384xf32> to vector<8x128xf32>
    %351 = vector.extract_strided_slice %329 {offsets = [0, 256], sizes = [8, 128], strides = [1, 1]} : vector<8x384xf32> to vector<8x128xf32>
    %352 = arith.addf %351, %170 : vector<8x128xf32>
    %353 = arith.mulf %339, %352 : vector<8x128xf32>
    %354 = arith.addf %350, %353 : vector<8x128xf32>
    %355 = math.tanh %354 : vector<8x128xf32>
    %cst_180 = arith.constant 1.000000e+00 : f32
    %356 = vector.broadcast %cst_180 : f32 to vector<8x128xf32>
    %357 = arith.subf %356, %349 : vector<8x128xf32>
    %358 = arith.mulf %357, %355 : vector<8x128xf32>
    %359 = arith.mulf %349, %325 : vector<8x128xf32>
    %360 = arith.addf %358, %359 : vector<8x128xf32>
    %c32_181 = arith.constant 32 : index
    %c0_182 = arith.constant 0 : index
    %361 = vector.load %arg26[%c32_181, %c0_182] : memref<64x128xf32, #tpu.memory_space<vmem>>, vector<8x128xf32>
    tpu.vector_store %arg26[%c32_181, %c0_182], %360 {strides = array<i32>} : memref<64x128xf32, #tpu.memory_space<vmem>>, vector<8x128xf32>,
    %c40 = arith.constant 40 : index
    %c0_183 = arith.constant 0 : index
    %362 = vector.load %arg2[%c40, %c0_183] : memref<64x128xf32, #tpu.memory_space<vmem>>, vector<8x128xf32>
    %363 = arith.mulf %360, %362 : vector<8x128xf32>
    %c40_184 = arith.constant 40 : index
    %c0_185 = arith.constant 0 : index
    %364 = vector.load %arg25[%c40_184, %c0_185] : memref<64x384xf32, #tpu.memory_space<vmem>>, vector<8x384xf32>
    %c0_186 = arith.constant 0 : index
    %c0_187 = arith.constant 0 : index
    %365 = vector.load %arg15[%c0_186, %c0_187] : memref<128x384xbf16, #tpu.memory_space<vmem>>, vector<128x384xbf16>
    %366 = arith.truncf %363 : vector<8x128xf32> to vector<8x128xbf16>
    %cst_188 = arith.constant dense<0.000000e+00> : vector<8x384xf32>
    %367 = tpu.matmul %366, %365, %cst_188 {dimension_numbers = #tpu.dot_dimension_numbers<[1], [0], [0], [1], [0, 0, 1, 1], [], []>} : vector<8x128xbf16>, vector<128x384xbf16>, vector<8x384xf32> -> vector<8x384xf32>
    %368 = vector.extract_strided_slice %364 {offsets = [0, 0], sizes = [8, 128], strides = [1, 1]} : vector<8x384xf32> to vector<8x128xf32>
    %369 = vector.extract_strided_slice %367 {offsets = [0, 0], sizes = [8, 128], strides = [1, 1]} : vector<8x384xf32> to vector<8x128xf32>
    %370 = arith.addf %368, %369 : vector<8x128xf32>
    %cst_189 = arith.constant 5.000000e-01 : f32
    %371 = vector.broadcast %cst_189 : f32 to vector<8x128xf32>
    %372 = arith.mulf %371, %370 : vector<8x128xf32>
    %373 = math.tanh %372 : vector<8x128xf32>
    %cst_190 = arith.constant 1.000000e+00 : f32
    %374 = vector.broadcast %cst_190 : f32 to vector<8x128xf32>
    %375 = arith.addf %373, %374 : vector<8x128xf32>
    %cst_191 = arith.constant 5.000000e-01 : f32
    %376 = vector.broadcast %cst_191 : f32 to vector<8x128xf32>
    %377 = arith.mulf %376, %375 : vector<8x128xf32>
    %378 = vector.extract_strided_slice %364 {offsets = [0, 128], sizes = [8, 128], strides = [1, 1]} : vector<8x384xf32> to vector<8x128xf32>
    %379 = vector.extract_strided_slice %367 {offsets = [0, 128], sizes = [8, 128], strides = [1, 1]} : vector<8x384xf32> to vector<8x128xf32>
    %380 = arith.addf %378, %379 : vector<8x128xf32>
    %cst_192 = arith.constant 5.000000e-01 : f32
    %381 = vector.broadcast %cst_192 : f32 to vector<8x128xf32>
    %382 = arith.mulf %381, %380 : vector<8x128xf32>
    %383 = math.tanh %382 : vector<8x128xf32>
    %cst_193 = arith.constant 1.000000e+00 : f32
    %384 = vector.broadcast %cst_193 : f32 to vector<8x128xf32>
    %385 = arith.addf %383, %384 : vector<8x128xf32>
    %cst_194 = arith.constant 5.000000e-01 : f32
    %386 = vector.broadcast %cst_194 : f32 to vector<8x128xf32>
    %387 = arith.mulf %386, %385 : vector<8x128xf32>
    %388 = vector.extract_strided_slice %364 {offsets = [0, 256], sizes = [8, 128], strides = [1, 1]} : vector<8x384xf32> to vector<8x128xf32>
    %389 = vector.extract_strided_slice %367 {offsets = [0, 256], sizes = [8, 128], strides = [1, 1]} : vector<8x384xf32> to vector<8x128xf32>
    %390 = arith.addf %389, %170 : vector<8x128xf32>
    %391 = arith.mulf %377, %390 : vector<8x128xf32>
    %392 = arith.addf %388, %391 : vector<8x128xf32>
    %393 = math.tanh %392 : vector<8x128xf32>
    %cst_195 = arith.constant 1.000000e+00 : f32
    %394 = vector.broadcast %cst_195 : f32 to vector<8x128xf32>
    %395 = arith.subf %394, %387 : vector<8x128xf32>
    %396 = arith.mulf %395, %393 : vector<8x128xf32>
    %397 = arith.mulf %387, %363 : vector<8x128xf32>
    %398 = arith.addf %396, %397 : vector<8x128xf32>
    %c40_196 = arith.constant 40 : index
    %c0_197 = arith.constant 0 : index
    %399 = vector.load %arg26[%c40_196, %c0_197] : memref<64x128xf32, #tpu.memory_space<vmem>>, vector<8x128xf32>
    tpu.vector_store %arg26[%c40_196, %c0_197], %398 {strides = array<i32>} : memref<64x128xf32, #tpu.memory_space<vmem>>, vector<8x128xf32>,
    %c48 = arith.constant 48 : index
    %c0_198 = arith.constant 0 : index
    %400 = vector.load %arg2[%c48, %c0_198] : memref<64x128xf32, #tpu.memory_space<vmem>>, vector<8x128xf32>
    %401 = arith.mulf %398, %400 : vector<8x128xf32>
    %c48_199 = arith.constant 48 : index
    %c0_200 = arith.constant 0 : index
    %402 = vector.load %arg25[%c48_199, %c0_200] : memref<64x384xf32, #tpu.memory_space<vmem>>, vector<8x384xf32>
    %c0_201 = arith.constant 0 : index
    %c0_202 = arith.constant 0 : index
    %403 = vector.load %arg15[%c0_201, %c0_202] : memref<128x384xbf16, #tpu.memory_space<vmem>>, vector<128x384xbf16>
    %404 = arith.truncf %401 : vector<8x128xf32> to vector<8x128xbf16>
    %cst_203 = arith.constant dense<0.000000e+00> : vector<8x384xf32>
    %405 = tpu.matmul %404, %403, %cst_203 {dimension_numbers = #tpu.dot_dimension_numbers<[1], [0], [0], [1], [0, 0, 1, 1], [], []>} : vector<8x128xbf16>, vector<128x384xbf16>, vector<8x384xf32> -> vector<8x384xf32>
    %406 = vector.extract_strided_slice %402 {offsets = [0, 0], sizes = [8, 128], strides = [1, 1]} : vector<8x384xf32> to vector<8x128xf32>
    %407 = vector.extract_strided_slice %405 {offsets = [0, 0], sizes = [8, 128], strides = [1, 1]} : vector<8x384xf32> to vector<8x128xf32>
    %408 = arith.addf %406, %407 : vector<8x128xf32>
    %cst_204 = arith.constant 5.000000e-01 : f32
    %409 = vector.broadcast %cst_204 : f32 to vector<8x128xf32>
    %410 = arith.mulf %409, %408 : vector<8x128xf32>
    %411 = math.tanh %410 : vector<8x128xf32>
    %cst_205 = arith.constant 1.000000e+00 : f32
    %412 = vector.broadcast %cst_205 : f32 to vector<8x128xf32>
    %413 = arith.addf %411, %412 : vector<8x128xf32>
    %cst_206 = arith.constant 5.000000e-01 : f32
    %414 = vector.broadcast %cst_206 : f32 to vector<8x128xf32>
    %415 = arith.mulf %414, %413 : vector<8x128xf32>
    %416 = vector.extract_strided_slice %402 {offsets = [0, 128], sizes = [8, 128], strides = [1, 1]} : vector<8x384xf32> to vector<8x128xf32>
    %417 = vector.extract_strided_slice %405 {offsets = [0, 128], sizes = [8, 128], strides = [1, 1]} : vector<8x384xf32> to vector<8x128xf32>
    %418 = arith.addf %416, %417 : vector<8x128xf32>
    %cst_207 = arith.constant 5.000000e-01 : f32
    %419 = vector.broadcast %cst_207 : f32 to vector<8x128xf32>
    %420 = arith.mulf %419, %418 : vector<8x128xf32>
    %421 = math.tanh %420 : vector<8x128xf32>
    %cst_208 = arith.constant 1.000000e+00 : f32
    %422 = vector.broadcast %cst_208 : f32 to vector<8x128xf32>
    %423 = arith.addf %421, %422 : vector<8x128xf32>
    %cst_209 = arith.constant 5.000000e-01 : f32
    %424 = vector.broadcast %cst_209 : f32 to vector<8x128xf32>
    %425 = arith.mulf %424, %423 : vector<8x128xf32>
    %426 = vector.extract_strided_slice %402 {offsets = [0, 256], sizes = [8, 128], strides = [1, 1]} : vector<8x384xf32> to vector<8x128xf32>
    %427 = vector.extract_strided_slice %405 {offsets = [0, 256], sizes = [8, 128], strides = [1, 1]} : vector<8x384xf32> to vector<8x128xf32>
    %428 = arith.addf %427, %170 : vector<8x128xf32>
    %429 = arith.mulf %415, %428 : vector<8x128xf32>
    %430 = arith.addf %426, %429 : vector<8x128xf32>
    %431 = math.tanh %430 : vector<8x128xf32>
    %cst_210 = arith.constant 1.000000e+00 : f32
    %432 = vector.broadcast %cst_210 : f32 to vector<8x128xf32>
    %433 = arith.subf %432, %425 : vector<8x128xf32>
    %434 = arith.mulf %433, %431 : vector<8x128xf32>
    %435 = arith.mulf %425, %401 : vector<8x128xf32>
    %436 = arith.addf %434, %435 : vector<8x128xf32>
    %c48_211 = arith.constant 48 : index
    %c0_212 = arith.constant 0 : index
    %437 = vector.load %arg26[%c48_211, %c0_212] : memref<64x128xf32, #tpu.memory_space<vmem>>, vector<8x128xf32>
    tpu.vector_store %arg26[%c48_211, %c0_212], %436 {strides = array<i32>} : memref<64x128xf32, #tpu.memory_space<vmem>>, vector<8x128xf32>,
    %c56 = arith.constant 56 : index
    %c0_213 = arith.constant 0 : index
    %438 = vector.load %arg2[%c56, %c0_213] : memref<64x128xf32, #tpu.memory_space<vmem>>, vector<8x128xf32>
    %439 = arith.mulf %436, %438 : vector<8x128xf32>
    %c56_214 = arith.constant 56 : index
    %c0_215 = arith.constant 0 : index
    %440 = vector.load %arg25[%c56_214, %c0_215] : memref<64x384xf32, #tpu.memory_space<vmem>>, vector<8x384xf32>
    %c0_216 = arith.constant 0 : index
    %c0_217 = arith.constant 0 : index
    %441 = vector.load %arg15[%c0_216, %c0_217] : memref<128x384xbf16, #tpu.memory_space<vmem>>, vector<128x384xbf16>
    %442 = arith.truncf %439 : vector<8x128xf32> to vector<8x128xbf16>
    %cst_218 = arith.constant dense<0.000000e+00> : vector<8x384xf32>
    %443 = tpu.matmul %442, %441, %cst_218 {dimension_numbers = #tpu.dot_dimension_numbers<[1], [0], [0], [1], [0, 0, 1, 1], [], []>} : vector<8x128xbf16>, vector<128x384xbf16>, vector<8x384xf32> -> vector<8x384xf32>
    %444 = vector.extract_strided_slice %440 {offsets = [0, 0], sizes = [8, 128], strides = [1, 1]} : vector<8x384xf32> to vector<8x128xf32>
    %445 = vector.extract_strided_slice %443 {offsets = [0, 0], sizes = [8, 128], strides = [1, 1]} : vector<8x384xf32> to vector<8x128xf32>
    %446 = arith.addf %444, %445 : vector<8x128xf32>
    %cst_219 = arith.constant 5.000000e-01 : f32
    %447 = vector.broadcast %cst_219 : f32 to vector<8x128xf32>
    %448 = arith.mulf %447, %446 : vector<8x128xf32>
    %449 = math.tanh %448 : vector<8x128xf32>
    %cst_220 = arith.constant 1.000000e+00 : f32
    %450 = vector.broadcast %cst_220 : f32 to vector<8x128xf32>
    %451 = arith.addf %449, %450 : vector<8x128xf32>
    %cst_221 = arith.constant 5.000000e-01 : f32
    %452 = vector.broadcast %cst_221 : f32 to vector<8x128xf32>
    %453 = arith.mulf %452, %451 : vector<8x128xf32>
    %454 = vector.extract_strided_slice %440 {offsets = [0, 128], sizes = [8, 128], strides = [1, 1]} : vector<8x384xf32> to vector<8x128xf32>
    %455 = vector.extract_strided_slice %443 {offsets = [0, 128], sizes = [8, 128], strides = [1, 1]} : vector<8x384xf32> to vector<8x128xf32>
    %456 = arith.addf %454, %455 : vector<8x128xf32>
    %cst_222 = arith.constant 5.000000e-01 : f32
    %457 = vector.broadcast %cst_222 : f32 to vector<8x128xf32>
    %458 = arith.mulf %457, %456 : vector<8x128xf32>
    %459 = math.tanh %458 : vector<8x128xf32>
    %cst_223 = arith.constant 1.000000e+00 : f32
    %460 = vector.broadcast %cst_223 : f32 to vector<8x128xf32>
    %461 = arith.addf %459, %460 : vector<8x128xf32>
    %cst_224 = arith.constant 5.000000e-01 : f32
    %462 = vector.broadcast %cst_224 : f32 to vector<8x128xf32>
    %463 = arith.mulf %462, %461 : vector<8x128xf32>
    %464 = vector.extract_strided_slice %440 {offsets = [0, 256], sizes = [8, 128], strides = [1, 1]} : vector<8x384xf32> to vector<8x128xf32>
    %465 = vector.extract_strided_slice %443 {offsets = [0, 256], sizes = [8, 128], strides = [1, 1]} : vector<8x384xf32> to vector<8x128xf32>
    %466 = arith.addf %465, %170 : vector<8x128xf32>
    %467 = arith.mulf %453, %466 : vector<8x128xf32>
    %468 = arith.addf %464, %467 : vector<8x128xf32>
    %469 = math.tanh %468 : vector<8x128xf32>
    %cst_225 = arith.constant 1.000000e+00 : f32
    %470 = vector.broadcast %cst_225 : f32 to vector<8x128xf32>
    %471 = arith.subf %470, %463 : vector<8x128xf32>
    %472 = arith.mulf %471, %469 : vector<8x128xf32>
    %473 = arith.mulf %463, %439 : vector<8x128xf32>
    %474 = arith.addf %472, %473 : vector<8x128xf32>
    %c56_226 = arith.constant 56 : index
    %c0_227 = arith.constant 0 : index
    %475 = vector.load %arg26[%c56_226, %c0_227] : memref<64x128xf32, #tpu.memory_space<vmem>>, vector<8x128xf32>
    tpu.vector_store %arg26[%c56_226, %c0_227], %474 {strides = array<i32>} : memref<64x128xf32, #tpu.memory_space<vmem>>, vector<8x128xf32>,
    %c0_228 = arith.constant 0 : index
    %c0_229 = arith.constant 0 : index
    %476 = vector.load %arg24[%c0_228, %c0_229] : memref<8x128xf32, #tpu.memory_space<vmem>>, vector<8x128xf32>
    tpu.vector_store %arg24[%c0_228, %c0_229], %474 {strides = array<i32>} : memref<8x128xf32, #tpu.memory_space<vmem>>, vector<8x128xf32>,
    %c0_230 = arith.constant 0 : index
    %c0_231 = arith.constant 0 : index
    %477 = vector.load %arg26[%c0_230, %c0_231] : memref<64x128xf32, #tpu.memory_space<vmem>>, vector<64x128xf32>
    %478 = vector.extract_strided_slice %477 {offsets = [0, 0], sizes = [64, 32], strides = [1, 1]} : vector<64x128xf32> to vector<64x32xf32>
    %c0_232 = arith.constant 0 : index
    %c0_233 = arith.constant 0 : index
    %c0_234 = arith.constant 0 : index
    %479 = vector.load %arg18[%c0_232, %c0_233, %c0_234] : memref<2x1x32xf32, #tpu.memory_space<vmem>>, vector<1x1x32xf32>
    %480 = vector.shape_cast %479 : vector<1x1x32xf32> to vector<1x32xf32>
    %c0_235 = arith.constant 0 : index
    %c0_236 = arith.constant 0 : index
    %c0_237 = arith.constant 0 : index
    %481 = vector.load %arg19[%c0_235, %c0_236, %c0_237] : memref<2x1x32xf32, #tpu.memory_space<vmem>>, vector<1x1x32xf32>
    %482 = vector.shape_cast %481 : vector<1x1x32xf32> to vector<1x32xf32>
    %cst_238 = arith.constant dense<0.000000e+00> : vector<64xf32>
    %483 = vector.multi_reduction <add>, %478, %cst_238 [1] : vector<64x32xf32> to vector<64xf32>
    %484 = vector.shape_cast %483 : vector<64xf32> to vector<64x1xf32>
    %cst_239 = arith.constant 3.200000e+01 : f32
    %485 = vector.broadcast %cst_239 : f32 to vector<64x1xf32>
    %486 = arith.divf %484, %485 : vector<64x1xf32>
    %487 = vector.broadcast %486 : vector<64x1xf32> to vector<64x32xf32>
    %488 = arith.subf %478, %487 : vector<64x32xf32>
    %489 = arith.mulf %488, %488 : vector<64x32xf32>
    %cst_240 = arith.constant dense<0.000000e+00> : vector<64xf32>
    %490 = vector.multi_reduction <add>, %489, %cst_240 [1] : vector<64x32xf32> to vector<64xf32>
    %491 = vector.shape_cast %490 : vector<64xf32> to vector<64x1xf32>
    %cst_241 = arith.constant 3.200000e+01 : f32
    %492 = vector.broadcast %cst_241 : f32 to vector<64x1xf32>
    %493 = arith.divf %491, %492 : vector<64x1xf32>
    %cst_242 = arith.constant 9.99999974E-6 : f32
    %494 = vector.broadcast %cst_242 : f32 to vector<64x1xf32>
    %495 = arith.addf %493, %494 : vector<64x1xf32>
    %496 = math.rsqrt %495 : vector<64x1xf32>
    %497 = vector.broadcast %496 : vector<64x1xf32> to vector<64x32xf32>
    %498 = arith.mulf %488, %497 : vector<64x32xf32>
    %499 = vector.broadcast %480 : vector<1x32xf32> to vector<64x32xf32>
    %500 = arith.mulf %498, %499 : vector<64x32xf32>
    %501 = vector.broadcast %482 : vector<1x32xf32> to vector<64x32xf32>
    %502 = arith.addf %500, %501 : vector<64x32xf32>
    %503 = vector.extract_strided_slice %477 {offsets = [0, 32], sizes = [64, 32], strides = [1, 1]} : vector<64x128xf32> to vector<64x32xf32>
    %c1_243 = arith.constant 1 : index
    %c0_244 = arith.constant 0 : index
    %c0_245 = arith.constant 0 : index
    %504 = vector.load %arg18[%c1_243, %c0_244, %c0_245] : memref<2x1x32xf32, #tpu.memory_space<vmem>>, vector<1x1x32xf32>
    %505 = vector.shape_cast %504 : vector<1x1x32xf32> to vector<1x32xf32>
    %c1_246 = arith.constant 1 : index
    %c0_247 = arith.constant 0 : index
    %c0_248 = arith.constant 0 : index
    %506 = vector.load %arg19[%c1_246, %c0_247, %c0_248] : memref<2x1x32xf32, #tpu.memory_space<vmem>>, vector<1x1x32xf32>
    %507 = vector.shape_cast %506 : vector<1x1x32xf32> to vector<1x32xf32>
    %cst_249 = arith.constant dense<0.000000e+00> : vector<64xf32>
    %508 = vector.multi_reduction <add>, %503, %cst_249 [1] : vector<64x32xf32> to vector<64xf32>
    %509 = vector.shape_cast %508 : vector<64xf32> to vector<64x1xf32>
    %cst_250 = arith.constant 3.200000e+01 : f32
    %510 = vector.broadcast %cst_250 : f32 to vector<64x1xf32>
    %511 = arith.divf %509, %510 : vector<64x1xf32>
    %512 = vector.broadcast %511 : vector<64x1xf32> to vector<64x32xf32>
    %513 = arith.subf %503, %512 : vector<64x32xf32>
    %514 = arith.mulf %513, %513 : vector<64x32xf32>
    %cst_251 = arith.constant dense<0.000000e+00> : vector<64xf32>
    %515 = vector.multi_reduction <add>, %514, %cst_251 [1] : vector<64x32xf32> to vector<64xf32>
    %516 = vector.shape_cast %515 : vector<64xf32> to vector<64x1xf32>
    %cst_252 = arith.constant 3.200000e+01 : f32
    %517 = vector.broadcast %cst_252 : f32 to vector<64x1xf32>
    %518 = arith.divf %516, %517 : vector<64x1xf32>
    %cst_253 = arith.constant 9.99999974E-6 : f32
    %519 = vector.broadcast %cst_253 : f32 to vector<64x1xf32>
    %520 = arith.addf %518, %519 : vector<64x1xf32>
    %521 = math.rsqrt %520 : vector<64x1xf32>
    %522 = vector.broadcast %521 : vector<64x1xf32> to vector<64x32xf32>
    %523 = arith.mulf %513, %522 : vector<64x32xf32>
    %524 = vector.broadcast %505 : vector<1x32xf32> to vector<64x32xf32>
    %525 = arith.mulf %523, %524 : vector<64x32xf32>
    %526 = vector.broadcast %507 : vector<1x32xf32> to vector<64x32xf32>
    %527 = arith.addf %525, %526 : vector<64x32xf32>
    %c0_254 = arith.constant 0 : index
    %c0_255 = arith.constant 0 : index
    %c0_256 = arith.constant 0 : index
    %528 = vector.load %arg20[%c0_254, %c0_255, %c0_256] : memref<2x32x128xbf16, #tpu.memory_space<vmem>>, vector<1x32x128xbf16>
    %529 = vector.shape_cast %528 : vector<1x32x128xbf16> to vector<32x128xbf16>
    %530 = arith.truncf %502 : vector<64x32xf32> to vector<64x32xbf16>
    %cst_257 = arith.constant dense<0.000000e+00> : vector<64x128xf32>
    %531 = tpu.matmul %530, %529, %cst_257 {dimension_numbers = #tpu.dot_dimension_numbers<[1], [0], [0], [1], [0, 0, 1, 1], [], []>} : vector<64x32xbf16>, vector<32x128xbf16>, vector<64x128xf32> -> vector<64x128xf32>
    %c0_258 = arith.constant 0 : index
    %c0_259 = arith.constant 0 : index
    %c0_260 = arith.constant 0 : index
    %532 = vector.load %arg21[%c0_258, %c0_259, %c0_260] : memref<2x1x128xf32, #tpu.memory_space<vmem>>, vector<1x1x128xf32>
    %533 = vector.shape_cast %532 : vector<1x1x128xf32> to vector<1x128xf32>
    %534 = vector.broadcast %533 : vector<1x128xf32> to vector<64x128xf32>
    %535 = arith.addf %531, %534 : vector<64x128xf32>
    %c0_261 = arith.constant 0 : index
    %c0_262 = arith.constant 0 : index
    %536 = vector.load %arg22[%c0_261, %c0_262] : memref<64x128xf32, #tpu.memory_space<vmem>>, vector<64x128xf32>
    tpu.vector_store %arg22[%c0_261, %c0_262], %535 {strides = array<i32>} : memref<64x128xf32, #tpu.memory_space<vmem>>, vector<64x128xf32>,
    %c1_263 = arith.constant 1 : index
    %c0_264 = arith.constant 0 : index
    %c0_265 = arith.constant 0 : index
    %537 = vector.load %arg20[%c1_263, %c0_264, %c0_265] : memref<2x32x128xbf16, #tpu.memory_space<vmem>>, vector<1x32x128xbf16>
    %538 = vector.shape_cast %537 : vector<1x32x128xbf16> to vector<32x128xbf16>
    %539 = arith.truncf %527 : vector<64x32xf32> to vector<64x32xbf16>
    %cst_266 = arith.constant dense<0.000000e+00> : vector<64x128xf32>
    %540 = tpu.matmul %539, %538, %cst_266 {dimension_numbers = #tpu.dot_dimension_numbers<[1], [0], [0], [1], [0, 0, 1, 1], [], []>} : vector<64x32xbf16>, vector<32x128xbf16>, vector<64x128xf32> -> vector<64x128xf32>
    %c1_267 = arith.constant 1 : index
    %c0_268 = arith.constant 0 : index
    %c0_269 = arith.constant 0 : index
    %541 = vector.load %arg21[%c1_267, %c0_268, %c0_269] : memref<2x1x128xf32, #tpu.memory_space<vmem>>, vector<1x1x128xf32>
    %542 = vector.shape_cast %541 : vector<1x1x128xf32> to vector<1x128xf32>
    %543 = vector.broadcast %542 : vector<1x128xf32> to vector<64x128xf32>
    %544 = arith.addf %540, %543 : vector<64x128xf32>
    %c0_270 = arith.constant 0 : index
    %c0_271 = arith.constant 0 : index
    %545 = vector.load %arg23[%c0_270, %c0_271] : memref<64x128xf32, #tpu.memory_space<vmem>>, vector<64x128xf32>
    tpu.vector_store %arg23[%c0_270, %c0_271], %544 {strides = array<i32>} : memref<64x128xf32, #tpu.memory_space<vmem>>, vector<64x128xf32>,
    return
  }
  func.func @transform_0(%arg0: i32) -> (i32, i32) {
    %c0_i32 = arith.constant 0 : i32
    %c0_i32_0 = arith.constant 0 : i32
    %c0_i32_1 = arith.constant 0 : i32
    return %c0_i32, %c0_i32_0 : i32, i32
  }
  func.func @transform_1(%arg0: i32) -> (i32, i32) {
    %c0_i32 = arith.constant 0 : i32
    %c0_i32_0 = arith.constant 0 : i32
    %c0_i32_1 = arith.constant 0 : i32
    return %c0_i32, %c0_i32_0 : i32, i32
  }
  func.func @transform_2(%arg0: i32) -> (i32, i32) {
    %c0_i32 = arith.constant 0 : i32
    %c0_i32_0 = arith.constant 0 : i32
    %c0_i32_1 = arith.constant 0 : i32
    return %c0_i32, %c0_i32_0 : i32, i32
  }
  func.func @transform_3(%arg0: i32) -> (i32, i32, i32) {
    %c0_i32 = arith.constant 0 : i32
    %c0_i32_0 = arith.constant 0 : i32
    %c0_i32_1 = arith.constant 0 : i32
    %c0_i32_2 = arith.constant 0 : i32
    return %c0_i32, %c0_i32_0, %c0_i32_1 : i32, i32, i32
  }
  func.func @transform_4(%arg0: i32) -> (i32, i32, i32) {
    %c0_i32 = arith.constant 0 : i32
    %c0_i32_0 = arith.constant 0 : i32
    %c0_i32_1 = arith.constant 0 : i32
    %c0_i32_2 = arith.constant 0 : i32
    return %c0_i32, %c0_i32_0, %c0_i32_1 : i32, i32, i32
  }
  func.func @transform_5(%arg0: i32) -> (i32, i32, i32) {
    %c0_i32 = arith.constant 0 : i32
    %c0_i32_0 = arith.constant 0 : i32
    %c0_i32_1 = arith.constant 0 : i32
    %c0_i32_2 = arith.constant 0 : i32
    return %c0_i32, %c0_i32_0, %c0_i32_1 : i32, i32, i32
  }
  func.func @transform_6(%arg0: i32) -> (i32, i32, i32) {
    %c0_i32 = arith.constant 0 : i32
    %c0_i32_0 = arith.constant 0 : i32
    %c0_i32_1 = arith.constant 0 : i32
    %c0_i32_2 = arith.constant 0 : i32
    return %c0_i32, %c0_i32_0, %c0_i32_1 : i32, i32, i32
  }
  func.func @transform_7(%arg0: i32) -> (i32, i32, i32) {
    %c0_i32 = arith.constant 0 : i32
    %c0_i32_0 = arith.constant 0 : i32
    %c0_i32_1 = arith.constant 0 : i32
    %c0_i32_2 = arith.constant 0 : i32
    return %c0_i32, %c0_i32_0, %c0_i32_1 : i32, i32, i32
  }
  func.func @transform_8(%arg0: i32) -> (i32, i32, i32) {
    %c0_i32 = arith.constant 0 : i32
    %c0_i32_0 = arith.constant 0 : i32
    %c0_i32_1 = arith.constant 0 : i32
    %c0_i32_2 = arith.constant 0 : i32
    return %c0_i32, %c0_i32_0, %c0_i32_1 : i32, i32, i32
  }
  func.func @transform_9(%arg0: i32) -> (i32, i32, i32) {
    %c0_i32 = arith.constant 0 : i32
    %c0_i32_0 = arith.constant 0 : i32
    %c0_i32_1 = arith.constant 0 : i32
    %c0_i32_2 = arith.constant 0 : i32
    return %c0_i32, %c0_i32_0, %c0_i32_1 : i32, i32, i32
  }
  func.func @transform_10(%arg0: i32) -> (i32, i32, i32) {
    %c0_i32 = arith.constant 0 : i32
    %c0_i32_0 = arith.constant 0 : i32
    %c0_i32_1 = arith.constant 0 : i32
    %c0_i32_2 = arith.constant 0 : i32
    return %c0_i32, %c0_i32_0, %c0_i32_1 : i32, i32, i32
  }
  func.func @transform_11(%arg0: i32) -> (i32, i32, i32) {
    %c0_i32 = arith.constant 0 : i32
    %c0_i32_0 = arith.constant 0 : i32
    %c0_i32_1 = arith.constant 0 : i32
    %c0_i32_2 = arith.constant 0 : i32
    return %c0_i32, %c0_i32_0, %c0_i32_1 : i32, i32, i32
  }
  func.func @transform_12(%arg0: i32) -> (i32, i32, i32) {
    %c0_i32 = arith.constant 0 : i32
    %c0_i32_0 = arith.constant 0 : i32
    %c0_i32_1 = arith.constant 0 : i32
    %c0_i32_2 = arith.constant 0 : i32
    return %c0_i32, %c0_i32_0, %c0_i32_1 : i32, i32, i32
  }
  func.func @transform_13(%arg0: i32) -> (i32, i32, i32) {
    %c0_i32 = arith.constant 0 : i32
    %c0_i32_0 = arith.constant 0 : i32
    %c0_i32_1 = arith.constant 0 : i32
    %c0_i32_2 = arith.constant 0 : i32
    return %c0_i32, %c0_i32_0, %c0_i32_1 : i32, i32, i32
  }
  func.func @transform_14(%arg0: i32) -> (i32, i32) {
    %c0_i32 = arith.constant 0 : i32
    %c0_i32_0 = arith.constant 0 : i32
    %c0_i32_1 = arith.constant 0 : i32
    return %c0_i32, %c0_i32_0 : i32, i32
  }
  func.func @transform_15(%arg0: i32) -> (i32, i32) {
    %c0_i32 = arith.constant 0 : i32
    %c0_i32_0 = arith.constant 0 : i32
    %c0_i32_1 = arith.constant 0 : i32
    return %c0_i32, %c0_i32_0 : i32, i32
  }
  func.func @transform_16(%arg0: i32) -> (i32, i32) {
    %c0_i32 = arith.constant 0 : i32
    %c0_i32_0 = arith.constant 0 : i32
    %c0_i32_1 = arith.constant 0 : i32
    return %c0_i32, %c0_i32_0 : i32, i32
  }
  func.func @transform_17(%arg0: i32) -> (i32, i32, i32) {
    %c0_i32 = arith.constant 0 : i32
    %c0_i32_0 = arith.constant 0 : i32
    %c0_i32_1 = arith.constant 0 : i32
    %c0_i32_2 = arith.constant 0 : i32
    return %c0_i32, %c0_i32_0, %c0_i32_1 : i32, i32, i32
  }
  func.func @transform_18(%arg0: i32) -> (i32, i32, i32) {
    %c0_i32 = arith.constant 0 : i32
    %c0_i32_0 = arith.constant 0 : i32
    %c0_i32_1 = arith.constant 0 : i32
    %c0_i32_2 = arith.constant 0 : i32
    return %c0_i32, %c0_i32_0, %c0_i32_1 : i32, i32, i32
  }
  func.func @transform_19(%arg0: i32) -> (i32, i32, i32) {
    %c0_i32 = arith.constant 0 : i32
    %c0_i32_0 = arith.constant 0 : i32
    %c0_i32_1 = arith.constant 0 : i32
    %c0_i32_2 = arith.constant 0 : i32
    return %c0_i32, %c0_i32_0, %c0_i32_1 : i32, i32, i32
  }
  func.func @transform_20(%arg0: i32) -> (i32, i32, i32) {
    %c0_i32 = arith.constant 0 : i32
    %c0_i32_0 = arith.constant 0 : i32
    %c0_i32_1 = arith.constant 0 : i32
    %c0_i32_2 = arith.constant 0 : i32
    return %c0_i32, %c0_i32_0, %c0_i32_1 : i32, i32, i32
  }
  func.func @transform_21(%arg0: i32) -> (i32, i32) {
    %c0_i32 = arith.constant 0 : i32
    %c0_i32_0 = arith.constant 0 : i32
    %c0_i32_1 = arith.constant 0 : i32
    return %c0_i32, %c0_i32_0 : i32, i32
  }
  func.func @transform_22(%arg0: i32) -> (i32, i32) {
    %c0_i32 = arith.constant 0 : i32
    %c0_i32_0 = arith.constant 0 : i32
    %c0_i32_1 = arith.constant 0 : i32
    return %c0_i32, %c0_i32_0 : i32, i32
  }
  func.func @transform_23(%arg0: i32) -> (i32, i32) {
    %c0_i32 = arith.constant 0 : i32
    %c0_i32_0 = arith.constant 0 : i32
    %c0_i32_1 = arith.constant 0 : i32
    return %c0_i32, %c0_i32_0 : i32, i32
  }
}

</mosaic_0001>

<llo_original>
// kernel: tpu_custom_call.1
$region0: #{tpu_custom_call.1}
  #allocation0 [shape = 'u32[]', space=smem, size = 0x4, offset = 0x4, fixed_abs, tag = 'smem constant byte address 0x4 - core index']
  #allocation1 [shape = 'u32[144,128]{1,0:T(1,128)}', space=vmem, size = 0x12000, scoped, tag = 'internal scratch']
  #allocation2 [shape = 'f32[64,384]{1,0:T(8,128)}', space=vmem, size = 0x18000, scoped, tag = 'scratch operand']
  #allocation3 [shape = 'f32[64,128]{1,0:T(8,128)}', space=vmem, size = 0x8000, scoped, tag = 'scratch operand']
  %s0 = inlined_call_operand.vmem [shape: f32[64,24], index: 0, kind: input, shape index: {}]
  %s1 = inlined_call_operand.hbm [shape: f32[64,128], index: 1, kind: input, shape index: {}]
  %s2 = inlined_call_operand.vmem [shape: f32[8,128], index: 2, kind: input, shape index: {}]
  %s3 = inlined_call_operand.hbm [shape: bf16[2,24,32], index: 3, kind: input, shape index: {}]
  %s4 = inlined_call_operand.hbm [shape: f32[2,1,32], index: 4, kind: input, shape index: {}]
  %s5 = inlined_call_operand.hbm [shape: bf16[2,32,32], index: 5, kind: input, shape index: {}]
  %s6 = inlined_call_operand.hbm [shape: f32[2,1,32], index: 6, kind: input, shape index: {}]
  %s7 = inlined_call_operand.hbm [shape: f32[2,1,32], index: 7, kind: input, shape index: {}]
  %s8 = inlined_call_operand.hbm [shape: f32[2,1,32], index: 8, kind: input, shape index: {}]
  %s9 = inlined_call_operand.hbm [shape: bf16[2,32,32], index: 9, kind: input, shape index: {}]
  %s10 = inlined_call_operand.hbm [shape: f32[2,1,32], index: 10, kind: input, shape index: {}]
  %s11 = inlined_call_operand.hbm [shape: f32[2,1,32], index: 11, kind: input, shape index: {}]
  %s12 = inlined_call_operand.hbm [shape: f32[2,1,32], index: 12, kind: input, shape index: {}]
  %s13 = inlined_call_operand.vmem [shape: bf16[2,32,384], index: 13, kind: input, shape index: {}]
  %s14 = inlined_call_operand.hbm [shape: bf16[128,384], index: 14, kind: input, shape index: {}]
  %s15 = inlined_call_operand.vmem [shape: f32[1,384], index: 15, kind: input, shape index: {}]
  %s16 = inlined_call_operand.vmem [shape: f32[8,128], index: 16, kind: input, shape index: {}]
  %s17 = inlined_call_operand.vmem [shape: f32[2,1,32], index: 17, kind: input, shape index: {}]
  %s18 = inlined_call_operand.vmem [shape: f32[2,1,32], index: 18, kind: input, shape index: {}]
  %s19 = inlined_call_operand.hbm [shape: bf16[2,32,128], index: 19, kind: input, shape index: {}]
  %s20 = inlined_call_operand.vmem [shape: f32[2,1,128], index: 20, kind: input, shape index: {}]
  %s21 = inlined_call_operand.hbm [shape: f32[64,128], index: 21, kind: output, shape index: {0}]
  %s22 = inlined_call_operand.hbm [shape: f32[64,128], index: 22, kind: output, shape index: {1}]
  %s23 = inlined_call_operand.hbm [shape: f32[8,128], index: 23, kind: output, shape index: {2}]
  %24 = xla_tuple %s21, %s22, %s23
  %s25 = sld [smem:[#allocation0]]
  $region162: #{tpu_custom_call.1} parent=0
    _
  %s27 = ssub.s32 1, %s25
  %s28 = scalar_select 0, %s27, %s25
  $region1: #{tpu_custom_call.1} parent=0
    #allocation4 [shape = 'u8[32768]{0}', space=vmem, size = 0x8000, scoped, tag = 'input window, operand 1, single buffered']
    #allocation5 [shape = 's32[1]{0}', space=sflag, size = 0x4, scoped, tag = 'scoped memory for tpu_custom_call.1']
    #allocation6 [shape = 's32[1]{0}', space=sflag, size = 0x4, scoped, tag = 'scoped memory for tpu_custom_call.1']
    #allocation7 [shape = 'u8[12288]{0}', space=vmem, size = 0x3000, scoped, tag = 'input window, operand 3, single buffered']
    #allocation8 [shape = 's32[1]{0}', space=sflag, size = 0x4, scoped, tag = 'scoped memory for tpu_custom_call.1']
    #allocation9 [shape = 'u8[1024]{0}', space=vmem, size = 0x400, scoped, tag = 'input window, operand 4, single buffered']
    #allocation10 [shape = 'u8[16384]{0}', space=vmem, size = 0x4000, scoped, tag = 'input window, operand 5, single buffered']
    #allocation11 [shape = 's32[1]{0}', space=sflag, size = 0x4, scoped, tag = 'scoped memory for tpu_custom_call.1']
    #allocation12 [shape = 'u8[1024]{0}', space=vmem, size = 0x400, scoped, tag = 'input window, operand 6, single buffered']
    #allocation13 [shape = 'u8[1024]{0}', space=vmem, size = 0x400, scoped, tag = 'input window, operand 7, single buffered']
    #allocation14 [shape = 's32[1]{0}', space=sflag, size = 0x4, scoped, tag = 'scoped memory for tpu_custom_call.1']
    #allocation15 [shape = 'u8[1024]{0}', space=vmem, size = 0x400, scoped, tag = 'input window, operand 8, single buffered']
    #allocation16 [shape = 'u8[16384]{0}', space=vmem, size = 0x4000, scoped, tag = 'input window, operand 9, single buffered']
    #allocation17 [shape = 's32[1]{0}', space=sflag, size = 0x4, scoped, tag = 'scoped memory for tpu_custom_call.1']
    #allocation18 [shape = 'u8[1024]{0}', space=vmem, size = 0x400, scoped, tag = 'input window, operand 10, single buffered']
    #allocation19 [shape = 'u8[1024]{0}', space=vmem, size = 0x400, scoped, tag = 'input window, operand 11, single buffered']
    #allocation20 [shape = 's32[1]{0}', space=sflag, size = 0x4, scoped, tag = 'scoped memory for tpu_custom_call.1']
    #allocation21 [shape = 'u8[1024]{0}', space=vmem, size = 0x400, scoped, tag = 'input window, operand 12, single buffered']
    #allocation22 [shape = 'u8[98304]{0}', space=vmem, size = 0x18000, scoped, tag = 'input window, operand 14, single buffered']
    #allocation23 [shape = 's32[1]{0}', space=sflag, size = 0x4, scoped, tag = 'scoped memory for tpu_custom_call.1']
    #allocation24 [shape = 'u8[16384]{0}', space=vmem, size = 0x4000, scoped, tag = 'input window, operand 19, single buffered']
    #allocation25 [shape = 'u8[32768]{0}', space=vmem, size = 0x8000, scoped, tag = 'output window, operand 0, single buffered']
    #allocation26 [shape = 'u8[32768]{0}', space=vmem, size = 0x8000, scoped, tag = 'output window, operand 1, single buffered']
    #allocation27 [shape = 's32[1]{0}', space=sflag, size = 0x4, scoped, tag = 'scoped memory for tpu_custom_call.1']
    #allocation28 [shape = 'u8[4096]{0}', space=vmem, size = 0x1000, scoped, tag = 'output window, operand 2, single buffered']
    %29 = vsyncpa [#allocation5], 0
    %30 = vsyncpa [#allocation8], 0
    %31 = vsyncpa [#allocation11], 0
    %32 = vsyncpa [#allocation14], 0
    %33 = vsyncpa [#allocation17], 0
    %34 = vsyncpa [#allocation20], 0
    %35 = vsyncpa [#allocation23], 0
    %36 = vsyncpa [#allocation6], 0
    %37 = vsyncpa [#allocation27], 0
    // Predicated region
    $region2: #{tpu_custom_call.1} parent=1 // pred_check
      _
    $region3: #{tpu_custom_call.1} parent=1 // pred_check_branch
      %39 = sbr.rel (0) target = $region5
    $region4: #{tpu_custom_call.1} parent=1 // pred_region
      _
    $region5: #{tpu_custom_call.1} parent=1 // pred_fallthru
      _
    // Predicated region
    $region6: #{tpu_custom_call.1} parent=1 // pred_check
      _
    $region7: #{tpu_custom_call.1} parent=1 // pred_check_branch
      %41 = sbr.rel (0) target = $region9
    $region8: #{tpu_custom_call.1} parent=1 // pred_region
      %s43 = ssub.s32 1024, 1024
      %44 = vsyncadd [#allocation5], %s43
      %s45 = sshll.u32 [#allocation4], 4
      %s46 = int_to_ptr.vmem [resolvable:$true] %s45
      %51 = dma.hbm_to_vmem [thread:$0]  %s1, 1024, %s46, [#allocation5], 128, 128, 8
    $region9: #{tpu_custom_call.1} parent=1 // pred_fallthru
      _
    // Predicated region
    $region10: #{tpu_custom_call.1} parent=1 // pred_check
      _
    $region11: #{tpu_custom_call.1} parent=1 // pred_check_branch
      %53 = sbr.rel (0) target = $region13
    $region12: #{tpu_custom_call.1} parent=1 // pred_region
      _
    $region13: #{tpu_custom_call.1} parent=1 // pred_fallthru
      _
    // Predicated region
    $region14: #{tpu_custom_call.1} parent=1 // pred_check
      _
    $region15: #{tpu_custom_call.1} parent=1 // pred_check_branch
      %55 = sbr.rel (0) target = $region17
    $region16: #{tpu_custom_call.1} parent=1 // pred_region
      %s57 = ssub.s32 384, 384
      %58 = vsyncadd [#allocation8], %s57
      %s59 = sshll.u32 [#allocation7], 4
      %s60 = int_to_ptr.vmem [resolvable:$true] %s59
      %65 = dma.hbm_to_vmem [thread:$0]  %s3, 384, %s60, [#allocation8], 64, 64, 4
    $region17: #{tpu_custom_call.1} parent=1 // pred_fallthru
      _
    // Predicated region
    $region18: #{tpu_custom_call.1} parent=1 // pred_check
      _
    $region19: #{tpu_custom_call.1} parent=1 // pred_check_branch
      %67 = sbr.rel (0) target = $region21
    $region20: #{tpu_custom_call.1} parent=1 // pred_region
      %s69 = ssub.s32 32, 32
      %70 = vsyncadd [#allocation8], %s69
      %s71 = sshll.u32 [#allocation9], 4
      %s72 = int_to_ptr.vmem [resolvable:$true] %s71
      %77 = dma.hbm_to_vmem [thread:$0]  %s4, 32, %s72, [#allocation8], 16, 16, 1
    $region21: #{tpu_custom_call.1} parent=1 // pred_fallthru
      _
    // Predicated region
    $region22: #{tpu_custom_call.1} parent=1 // pred_check
      _
    $region23: #{tpu_custom_call.1} parent=1 // pred_check_branch
      %79 = sbr.rel (0) target = $region25
    $region24: #{tpu_custom_call.1} parent=1 // pred_region
      %s81 = ssub.s32 512, 512
      %82 = vsyncadd [#allocation11], %s81
      %s83 = sshll.u32 [#allocation10], 4
      %s84 = int_to_ptr.vmem [resolvable:$true] %s83
      %89 = dma.hbm_to_vmem [thread:$0]  %s5, 512, %s84, [#allocation11], 64, 64, 4
    $region25: #{tpu_custom_call.1} parent=1 // pred_fallthru
      _
    // Predicated region
    $region26: #{tpu_custom_call.1} parent=1 // pred_check
      _
    $region27: #{tpu_custom_call.1} parent=1 // pred_check_branch
      %91 = sbr.rel (0) target = $region29
    $region28: #{tpu_custom_call.1} parent=1 // pred_region
      %s93 = ssub.s32 32, 32
      %94 = vsyncadd [#allocation11], %s93
      %s95 = sshll.u32 [#allocation12], 4
      %s96 = int_to_ptr.vmem [resolvable:$true] %s95
      %101 = dma.hbm_to_vmem [thread:$0]  %s6, 32, %s96, [#allocation11], 16, 16, 1
    $region29: #{tpu_custom_call.1} parent=1 // pred_fallthru
      _
    // Predicated region
    $region30: #{tpu_custom_call.1} parent=1 // pred_check
      _
    $region31: #{tpu_custom_call.1} parent=1 // pred_check_branch
      %103 = sbr.rel (0) target = $region33
    $region32: #{tpu_custom_call.1} parent=1 // pred_region
      %s105 = ssub.s32 32, 32
      %106 = vsyncadd [#allocation14], %s105
      %s107 = sshll.u32 [#allocation13], 4
      %s108 = int_to_ptr.vmem [resolvable:$true] %s107
      %113 = dma.hbm_to_vmem [thread:$0]  %s7, 32, %s108, [#allocation14], 16, 16, 1
    $region33: #{tpu_custom_call.1} parent=1 // pred_fallthru
      _
    // Predicated region
    $region34: #{tpu_custom_call.1} parent=1 // pred_check
      _
    $region35: #{tpu_custom_call.1} parent=1 // pred_check_branch
      %115 = sbr.rel (0) target = $region37
    $region36: #{tpu_custom_call.1} parent=1 // pred_region
      %s117 = ssub.s32 32, 32
      %118 = vsyncadd [#allocation14], %s117
      %s119 = sshll.u32 [#allocation15], 4
      %s120 = int_to_ptr.vmem [resolvable:$true] %s119
      %125 = dma.hbm_to_vmem [thread:$0]  %s8, 32, %s120, [#allocation14], 16, 16, 1
    $region37: #{tpu_custom_call.1} parent=1 // pred_fallthru
      _
    // Predicated region
    $region38: #{tpu_custom_call.1} parent=1 // pred_check
      _
    $region39: #{tpu_custom_call.1} parent=1 // pred_check_branch
      %127 = sbr.rel (0) target = $region41
    $region40: #{tpu_custom_call.1} parent=1 // pred_region
      %s129 = ssub.s32 512, 512
      %130 = vsyncadd [#allocation17], %s129
      %s131 = sshll.u32 [#allocation16], 4
      %s132 = int_to_ptr.vmem [resolvable:$true] %s131
      %137 = dma.hbm_to_vmem [thread:$0]  %s9, 512, %s132, [#allocation17], 64, 64, 4
    $region41: #{tpu_custom_call.1} parent=1 // pred_fallthru
      _
    // Predicated region
    $region42: #{tpu_custom_call.1} parent=1 // pred_check
      _
    $region43: #{tpu_custom_call.1} parent=1 // pred_check_branch
      %139 = sbr.rel (0) target = $region45
    $region44: #{tpu_custom_call.1} parent=1 // pred_region
      %s141 = ssub.s32 32, 32
      %142 = vsyncadd [#allocation17], %s141
      %s143 = sshll.u32 [#allocation18], 4
      %s144 = int_to_ptr.vmem [resolvable:$true] %s143
      %149 = dma.hbm_to_vmem [thread:$0]  %s10, 32, %s144, [#allocation17], 16, 16, 1
    $region45: #{tpu_custom_call.1} parent=1 // pred_fallthru
      _
    // Predicated region
    $region46: #{tpu_custom_call.1} parent=1 // pred_check
      _
    $region47: #{tpu_custom_call.1} parent=1 // pred_check_branch
      %151 = sbr.rel (0) target = $region49
    $region48: #{tpu_custom_call.1} parent=1 // pred_region
      %s153 = ssub.s32 32, 32
      %154 = vsyncadd [#allocation20], %s153
      %s155 = sshll.u32 [#allocation19], 4
      %s156 = int_to_ptr.vmem [resolvable:$true] %s155
      %161 = dma.hbm_to_vmem [thread:$0]  %s11, 32, %s156, [#allocation20], 16, 16, 1
    $region49: #{tpu_custom_call.1} parent=1 // pred_fallthru
      _
    // Predicated region
    $region50: #{tpu_custom_call.1} parent=1 // pred_check
      _
    $region51: #{tpu_custom_call.1} parent=1 // pred_check_branch
      %163 = sbr.rel (0) target = $region53
    $region52: #{tpu_custom_call.1} parent=1 // pred_region
      %s165 = ssub.s32 32, 32
      %166 = vsyncadd [#allocation20], %s165
      %s167 = sshll.u32 [#allocation21], 4
      %s168 = int_to_ptr.vmem [resolvable:$true] %s167
      %173 = dma.hbm_to_vmem [thread:$0]  %s12, 32, %s168, [#allocation20], 16, 16, 1
    $region53: #{tpu_custom_call.1} parent=1 // pred_fallthru
      _
    // Predicated region
    $region54: #{tpu_custom_call.1} parent=1 // pred_check
      _
    $region55: #{tpu_custom_call.1} parent=1 // pred_check_branch
      %175 = sbr.rel (0) target = $region57
    $region56: #{tpu_custom_call.1} parent=1 // pred_region
      _
    $region57: #{tpu_custom_call.1} parent=1 // pred_fallthru
      _
    // Predicated region
    $region58: #{tpu_custom_call.1} parent=1 // pred_check
      _
    $region59: #{tpu_custom_call.1} parent=1 // pred_check_branch
      %177 = sbr.rel (0) target = $region61
    $region60: #{tpu_custom_call.1} parent=1 // pred_region
      %s179 = ssub.s32 3072, 3072
      %180 = vsyncadd [#allocation23], %s179
      %s181 = sshll.u32 [#allocation22], 4
      %s182 = int_to_ptr.vmem [resolvable:$true] %s181
      %187 = dma.hbm_to_vmem [thread:$0]  %s14, 3072, %s182, [#allocation23], 192, 192, 12
    $region61: #{tpu_custom_call.1} parent=1 // pred_fallthru
      _
    // Predicated region
    $region62: #{tpu_custom_call.1} parent=1 // pred_check
      _
    $region63: #{tpu_custom_call.1} parent=1 // pred_check_branch
      %189 = sbr.rel (0) target = $region65
    $region64: #{tpu_custom_call.1} parent=1 // pred_region
      _
    $region65: #{tpu_custom_call.1} parent=1 // pred_fallthru
      _
    // Predicated region
    $region66: #{tpu_custom_call.1} parent=1 // pred_check
      _
    $region67: #{tpu_custom_call.1} parent=1 // pred_check_branch
      %191 = sbr.rel (0) target = $region69
    $region68: #{tpu_custom_call.1} parent=1 // pred_region
      _
    $region69: #{tpu_custom_call.1} parent=1 // pred_fallthru
      _
    // Predicated region
    $region70: #{tpu_custom_call.1} parent=1 // pred_check
      _
    $region71: #{tpu_custom_call.1} parent=1 // pred_check_branch
      %193 = sbr.rel (0) target = $region73
    $region72: #{tpu_custom_call.1} parent=1 // pred_region
      _
    $region73: #{tpu_custom_call.1} parent=1 // pred_fallthru
      _
    // Predicated region
    $region74: #{tpu_custom_call.1} parent=1 // pred_check
      _
    $region75: #{tpu_custom_call.1} parent=1 // pred_check_branch
      %195 = sbr.rel (0) target = $region77
    $region76: #{tpu_custom_call.1} parent=1 // pred_region
      _
    $region77: #{tpu_custom_call.1} parent=1 // pred_fallthru
      _
    // Predicated region
    $region78: #{tpu_custom_call.1} parent=1 // pred_check
      _
    $region79: #{tpu_custom_call.1} parent=1 // pred_check_branch
      %197 = sbr.rel (0) target = $region81
    $region80: #{tpu_custom_call.1} parent=1 // pred_region
      %s199 = ssub.s32 512, 512
      %200 = vsyncadd [#allocation23], %s199
      %s201 = sshll.u32 [#allocation24], 4
      %s202 = int_to_ptr.vmem [resolvable:$true] %s201
      %207 = dma.hbm_to_vmem [thread:$0]  %s19, 512, %s202, [#allocation23], 64, 64, 4
    $region81: #{tpu_custom_call.1} parent=1 // pred_fallthru
      _
    // Predicated region
    $region82: #{tpu_custom_call.1} parent=1 // pred_check
      _
    $region83: #{tpu_custom_call.1} parent=1 // pred_check_branch
      %209 = sbr.rel (0) target = $region85
    $region84: #{tpu_custom_call.1} parent=1 // pred_region
      _
    $region85: #{tpu_custom_call.1} parent=1 // pred_fallthru
      _
    // Predicated region
    $region86: #{tpu_custom_call.1} parent=1 // pred_check
      _
    $region87: #{tpu_custom_call.1} parent=1 // pred_check_branch
      %211 = sbr.rel (0) target = $region89
    $region88: #{tpu_custom_call.1} parent=1 // pred_region
      %212 = dma.done [#allocation5], 1024
    $region89: #{tpu_custom_call.1} parent=1 // pred_fallthru
      _
    // Predicated region
    $region90: #{tpu_custom_call.1} parent=1 // pred_check
      _
    $region91: #{tpu_custom_call.1} parent=1 // pred_check_branch
      %214 = sbr.rel (0) target = $region93
    $region92: #{tpu_custom_call.1} parent=1 // pred_region
      %215 = dma.done [#allocation8], 384
    $region93: #{tpu_custom_call.1} parent=1 // pred_fallthru
      _
    // Predicated region
    $region94: #{tpu_custom_call.1} parent=1 // pred_check
      _
    $region95: #{tpu_custom_call.1} parent=1 // pred_check_branch
      %217 = sbr.rel (0) target = $region97
    $region96: #{tpu_custom_call.1} parent=1 // pred_region
      %218 = dma.done [#allocation8], 32
    $region97: #{tpu_custom_call.1} parent=1 // pred_fallthru
      _
    // Predicated region
    $region98: #{tpu_custom_call.1} parent=1 // pred_check
      _
    $region99: #{tpu_custom_call.1} parent=1 // pred_check_branch
      %220 = sbr.rel (0) target = $region101
    $region100: #{tpu_custom_call.1} parent=1 // pred_region
      %221 = dma.done [#allocation11], 512
    $region101: #{tpu_custom_call.1} parent=1 // pred_fallthru
      _
    // Predicated region
    $region102: #{tpu_custom_call.1} parent=1 // pred_check
      _
    $region103: #{tpu_custom_call.1} parent=1 // pred_check_branch
      %223 = sbr.rel (0) target = $region105
    $region104: #{tpu_custom_call.1} parent=1 // pred_region
      %224 = dma.done [#allocation11], 32
    $region105: #{tpu_custom_call.1} parent=1 // pred_fallthru
      _
    // Predicated region
    $region106: #{tpu_custom_call.1} parent=1 // pred_check
      _
    $region107: #{tpu_custom_call.1} parent=1 // pred_check_branch
      %226 = sbr.rel (0) target = $region109
    $region108: #{tpu_custom_call.1} parent=1 // pred_region
      %227 = dma.done [#allocation14], 32
    $region109: #{tpu_custom_call.1} parent=1 // pred_fallthru
      _
    // Predicated region
    $region110: #{tpu_custom_call.1} parent=1 // pred_check
      _
    $region111: #{tpu_custom_call.1} parent=1 // pred_check_branch
      %229 = sbr.rel (0) target = $region113
    $region112: #{tpu_custom_call.1} parent=1 // pred_region
      %230 = dma.done [#allocation14], 32
    $region113: #{tpu_custom_call.1} parent=1 // pred_fallthru
      _
    // Predicated region
    $region114: #{tpu_custom_call.1} parent=1 // pred_check
      _
    $region115: #{tpu_custom_call.1} parent=1 // pred_check_branch
      %232 = sbr.rel (0) target = $region117
    $region116: #{tpu_custom_call.1} parent=1 // pred_region
      %233 = dma.done [#allocation17], 512
    $region117: #{tpu_custom_call.1} parent=1 // pred_fallthru
      _
    // Predicated region
    $region118: #{tpu_custom_call.1} parent=1 // pred_check
      _
    $region119: #{tpu_custom_call.1} parent=1 // pred_check_branch
      %235 = sbr.rel (0) target = $region121
    $region120: #{tpu_custom_call.1} parent=1 // pred_region
      %236 = dma.done [#allocation17], 32
    $region121: #{tpu_custom_call.1} parent=1 // pred_fallthru
      _
    // Predicated region
    $region122: #{tpu_custom_call.1} parent=1 // pred_check
      _
    $region123: #{tpu_custom_call.1} parent=1 // pred_check_branch
      %238 = sbr.rel (0) target = $region125
    $region124: #{tpu_custom_call.1} parent=1 // pred_region
      %239 = dma.done [#allocation20], 32
    $region125: #{tpu_custom_call.1} parent=1 // pred_fallthru
      _
    // Predicated region
    $region126: #{tpu_custom_call.1} parent=1 // pred_check
      _
    $region127: #{tpu_custom_call.1} parent=1 // pred_check_branch
      %241 = sbr.rel (0) target = $region129
    $region128: #{tpu_custom_call.1} parent=1 // pred_region
      %242 = dma.done [#allocation20], 32
    $region129: #{tpu_custom_call.1} parent=1 // pred_fallthru
      _
    // Predicated region
    $region130: #{tpu_custom_call.1} parent=1 // pred_check
      _
    $region131: #{tpu_custom_call.1} parent=1 // pred_check_branch
      %244 = sbr.rel (0) target = $region133
    $region132: #{tpu_custom_call.1} parent=1 // pred_region
      %245 = dma.done [#allocation23], 3072
    $region133: #{tpu_custom_call.1} parent=1 // pred_fallthru
      _
    // Predicated region
    $region134: #{tpu_custom_call.1} parent=1 // pred_check
      _
    $region135: #{tpu_custom_call.1} parent=1 // pred_check_branch
      %247 = sbr.rel (0) target = $region137
    $region136: #{tpu_custom_call.1} parent=1 // pred_region
      %248 = dma.done [#allocation23], 512
    $region137: #{tpu_custom_call.1} parent=1 // pred_fallthru
      _
    %v250 = vld [vmem:[%s0] sm:$0xff]
    %v251 = vld [vmem:[%s0 + $0x8] sm:$0xff]
    %v252 = vld [vmem:[%s0 + $0x10] sm:$0xff]
    %v253 = vld [vmem:[%s0 + $0x18] sm:$0xff]
    %v254 = vld [vmem:[%s0 + $0x20] sm:$0xff]
    %v255 = vld [vmem:[%s0 + $0x28] sm:$0xff]
    %v256 = vld [vmem:[%s0 + $0x30] sm:$0xff]
    %v257 = vld [vmem:[%s0 + $0x38] sm:$0xff]
    %v258 = vld [vmem:[#allocation7] sm:$0xf]
    %v259 = vld [vmem:[#allocation7 + $0x4] sm:$0xf]
    %v260 = vld [vmem:[#allocation7 + $0x8] sm:$0xf]
    %v261 = vpack.c.bf16 %v251, %v250
    %v262 = vpack.c.bf16 %v253, %v252
    %v263 = vpack.c.bf16 %v255, %v254
    %v264 = vpack.c.bf16 %v257, %v256
    %v265 = vld [vmem:[#allocation9] sm:$0x1]
    %v267 = vlaneseq
    %v268 = vshrl.u32 %v267, 7
    %v269 = vsub.s32 0, %v268
    %v270 = vrot.slane %v265, %v269
    %v275 = vunpack.c.l.b16 %v258
    %v276 = vunpack.c.l.b16 %v259
    %v277 = vunpack.c.l.b16 %v260
    %v278 = vpack.c.b16 %v276, %v275
    %v279 = vpack.c.b16 %v277, %v277
    %vm281 = vcmask 195584
    %v283 = vsel %vm281, %v261, 0
    %v286 = vsel %vm281, %v262, 0
    %v289 = vsel %vm281, %v263, 0
    %v292 = vsel %vm281, %v264, 0
    %vm294 = vcmask 1043456
    %v296 = vsel %vm294, %v279, 0
    %298 = vmatprep.subr.bf16.mxu0 0
    %299 = vmatpush1.bf16.msra.mxu0 0
    %300 = vmatprep.subr.bf16.mxu0 0
    %301 = vmatpush1.bf16.msra.mxu0 0
    %302 = vmatprep.subr.bf16.mxu0 0
    %303 = vmatpush1.bf16.msra.mxu0 0
    %304 = vmatprep.subr.bf16.mxu0 0
    %305 = vmatpush1.bf16.msra.mxu0 0
    %306 = vmatprep.subr.bf16.mxu0 0
    %307 = vmatpush1.bf16.msra.mxu0 0
    %308 = vmatprep.subr.bf16.mxu0 0
    %309 = vmatpush1.bf16.msra.mxu0 0
    %310 = vmatprep.subr.bf16.mxu0 0
    %311 = vmatpush1.bf16.msra.mxu0 %v296
    %312 = vmatprep.subr.bf16.mxu0 0
    %313 = vmatpush1.bf16.msra.mxu0 %v278
    %314 = vmatprep.subr.bf16.mxu0 0
    %315 = vmatpush2.bf16.msra.mxu0 0
    %316 = vmatprep.subr.bf16.mxu0 0
    %317 = vmatpush2.bf16.msra.mxu0 0
    %318 = vmatprep.subr.bf16.mxu0 0
    %319 = vmatpush2.bf16.msra.mxu0 0
    %320 = vmatprep.subr.bf16.mxu0 0
    %321 = vmatpush2.bf16.msra.mxu0 0
    %322 = vmatprep.subr.bf16.mxu0 0
    %323 = vmatpush2.bf16.msra.mxu0 0
    %324 = vmatprep.subr.bf16.mxu0 0
    %325 = vmatpush2.bf16.msra.mxu0 0
    %326 = vmatprep.subr.bf16.mxu0 0
    %327 = vmatpush2.bf16.msra.mxu0 0
    %328 = vmatprep.subr.bf16.mxu0 0
    %329 = vmatpush2.bf16.msra.mxu0 0
    %330 = vmatprep.mubr.bf16.mxu0 0
    %331 = vmatmul.mubr.bf16.gmra.mxu0 %v283
    %v332 = vpop.f32.mrf.mxu0
    %v333 = vadd.f32 %v270, %v332
    %v334 = vpop.f32.mrf.mxu0
    %v335 = vpop.f32.mrf.mxu0
    %v336 = vadd.f32 %v270, %v335
    %v337 = vpop.f32.mrf.mxu0
    %338 = vmatprep.mubr.bf16.mxu0 0
    %339 = vmatmul.mubr.bf16.gmra.mxu0 %v286
    %v340 = vpop.f32.mrf.mxu0
    %v341 = vadd.f32 %v270, %v340
    %v342 = vpop.f32.mrf.mxu0
    %v343 = vpop.f32.mrf.mxu0
    %v344 = vadd.f32 %v270, %v343
    %v345 = vpop.f32.mrf.mxu0
    %346 = vmatprep.mubr.bf16.mxu0 0
    %347 = vmatmul.mubr.bf16.gmra.mxu0 %v289
    %v348 = vpop.f32.mrf.mxu0
    %v349 = vadd.f32 %v270, %v348
    %v350 = vpop.f32.mrf.mxu0
    %v351 = vpop.f32.mrf.mxu0
    %v352 = vadd.f32 %v270, %v351
    %v353 = vpop.f32.mrf.mxu0
    %354 = vmatprep.mubr.bf16.mxu0 0
    %355 = vmatmul.mubr.bf16.gmra.mxu0 %v292
    %v356 = vpop.f32.mrf.mxu0
    %v357 = vadd.f32 %v270, %v356
    %v358 = vpop.f32.mrf.mxu0
    %v359 = vpop.f32.mrf.mxu0
    %v360 = vadd.f32 %v270, %v359
    %v361 = vpop.f32.mrf.mxu0
    %362 = vdwg.mxu0
    %v363 = vmax.f32 %v333, 0.0
    %v364 = vmax.f32 %v336, 0.0
    %v365 = vmax.f32 %v341, 0.0
    %v366 = vmax.f32 %v344, 0.0
    %v367 = vmax.f32 %v349, 0.0
    %v368 = vmax.f32 %v352, 0.0
    %v369 = vmax.f32 %v357, 0.0
    %v370 = vmax.f32 %v360, 0.0
    %v371 = vld [vmem:[#allocation10] sm:$0xf]
    %v372 = vld [vmem:[#allocation10 + $0x4] sm:$0xf]
    %v373 = vld [vmem:[#allocation10 + $0x8] sm:$0xf]
    %v374 = vld [vmem:[#allocation10 + $0xc] sm:$0xf]
    %v375 = vpack.c.bf16 %v364, %v363
    %v376 = vpack.c.bf16 %v366, %v365
    %v377 = vpack.c.bf16 %v368, %v367
    %v378 = vpack.c.bf16 %v370, %v369
    %v379 = vld [vmem:[#allocation12] sm:$0x1]
    %v381 = vlaneseq
    %v382 = vshrl.u32 %v381, 7
    %v383 = vsub.s32 0, %v382
    %v384 = vrot.slane %v379, %v383
    %v390 = vunpack.c.l.b16 %v371
    %v391 = vunpack.c.l.b16 %v372
    %v392 = vunpack.c.l.b16 %v373
    %v393 = vunpack.c.l.b16 %v374
    %v394 = vpack.c.b16 %v391, %v390
    %v395 = vpack.c.b16 %v393, %v392
    %vm398 = vcmask 261120
    %v400 = vsel %vm398, %v375, 0
    %v403 = vsel %vm398, %v376, 0
    %v406 = vsel %vm398, %v377, 0
    %v409 = vsel %vm398, %v378, 0
    %411 = vmatprep.subr.bf16.mxu0 0
    %412 = vmatpush1.bf16.msra.mxu0 0
    %413 = vmatprep.subr.bf16.mxu0 0
    %414 = vmatpush1.bf16.msra.mxu0 0
    %415 = vmatprep.subr.bf16.mxu0 0
    %416 = vmatpush1.bf16.msra.mxu0 0
    %417 = vmatprep.subr.bf16.mxu0 0
    %418 = vmatpush1.bf16.msra.mxu0 0
    %419 = vmatprep.subr.bf16.mxu0 0
    %420 = vmatpush1.bf16.msra.mxu0 0
    %421 = vmatprep.subr.bf16.mxu0 0
    %422 = vmatpush1.bf16.msra.mxu0 0
    %423 = vmatprep.subr.bf16.mxu0 0
    %424 = vmatpush1.bf16.msra.mxu0 %v395
    %425 = vmatprep.subr.bf16.mxu0 0
    %426 = vmatpush1.bf16.msra.mxu0 %v394
    %427 = vmatprep.subr.bf16.mxu0 0
    %428 = vmatpush2.bf16.msra.mxu0 0
    %429 = vmatprep.subr.bf16.mxu0 0
    %430 = vmatpush2.bf16.msra.mxu0 0
    %431 = vmatprep.subr.bf16.mxu0 0
    %432 = vmatpush2.bf16.msra.mxu0 0
    %433 = vmatprep.subr.bf16.mxu0 0
    %434 = vmatpush2.bf16.msra.mxu0 0
    %435 = vmatprep.subr.bf16.mxu0 0
    %436 = vmatpush2.bf16.msra.mxu0 0
    %437 = vmatprep.subr.bf16.mxu0 0
    %438 = vmatpush2.bf16.msra.mxu0 0
    %439 = vmatprep.subr.bf16.mxu0 0
    %440 = vmatpush2.bf16.msra.mxu0 0
    %441 = vmatprep.subr.bf16.mxu0 0
    %442 = vmatpush2.bf16.msra.mxu0 0
    %443 = vmatprep.mubr.bf16.mxu0 0
    %444 = vmatmul.mubr.bf16.gmra.mxu0 %v400
    %v445 = vpop.f32.mrf.mxu0
    %v446 = vadd.f32 %v384, %v445
    %v447 = vpop.f32.mrf.mxu0
    %v448 = vpop.f32.mrf.mxu0
    %v449 = vadd.f32 %v384, %v448
    %v450 = vpop.f32.mrf.mxu0
    %451 = vmatprep.mubr.bf16.mxu0 0
    %452 = vmatmul.mubr.bf16.gmra.mxu0 %v403
    %v453 = vpop.f32.mrf.mxu0
    %v454 = vadd.f32 %v384, %v453
    %v455 = vpop.f32.mrf.mxu0
    %v456 = vpop.f32.mrf.mxu0
    %v457 = vadd.f32 %v384, %v456
    %v458 = vpop.f32.mrf.mxu0
    %459 = vmatprep.mubr.bf16.mxu0 0
    %460 = vmatmul.mubr.bf16.gmra.mxu0 %v406
    %v461 = vpop.f32.mrf.mxu0
    %v462 = vadd.f32 %v384, %v461
    %v463 = vpop.f32.mrf.mxu0
    %v464 = vpop.f32.mrf.mxu0
    %v465 = vadd.f32 %v384, %v464
    %v466 = vpop.f32.mrf.mxu0
    %467 = vmatprep.mubr.bf16.mxu0 0
    %468 = vmatmul.mubr.bf16.gmra.mxu0 %v409
    %v469 = vpop.f32.mrf.mxu0
    %v470 = vadd.f32 %v384, %v469
    %v471 = vpop.f32.mrf.mxu0
    %v472 = vpop.f32.mrf.mxu0
    %v473 = vadd.f32 %v384, %v472
    %v474 = vpop.f32.mrf.mxu0
    %475 = vdwg.mxu0
    %v476 = vmax.f32 %v446, 0.0
    %v477 = vmax.f32 %v449, 0.0
    %v478 = vmax.f32 %v454, 0.0
    %v479 = vmax.f32 %v457, 0.0
    %v480 = vmax.f32 %v462, 0.0
    %v481 = vmax.f32 %v465, 0.0
    %v482 = vmax.f32 %v470, 0.0
    %v483 = vmax.f32 %v473, 0.0
    %v484 = vld [vmem:[#allocation13] sm:$0x1]
    %v485 = vld [vmem:[#allocation15] sm:$0x1]
    %v486 = vsel %vm398, %v476, 0.0
    %487 = vadd.xlane.f32.xlu0 %v486
    %v488 = vpop.xlane.xlu0 %487
    %v489 = vsel %vm398, %v477, 0.0
    %490 = vadd.xlane.f32.xlu0 %v489
    %v491 = vpop.xlane.xlu0 %490
    %v492 = vsel %vm398, %v478, 0.0
    %493 = vadd.xlane.f32.xlu0 %v492
    %v494 = vpop.xlane.xlu0 %493
    %v495 = vsel %vm398, %v479, 0.0
    %496 = vadd.xlane.f32.xlu0 %v495
    %v497 = vpop.xlane.xlu0 %496
    %v498 = vsel %vm398, %v480, 0.0
    %499 = vadd.xlane.f32.xlu0 %v498
    %v500 = vpop.xlane.xlu0 %499
    %v501 = vsel %vm398, %v481, 0.0
    %502 = vadd.xlane.f32.xlu0 %v501
    %v503 = vpop.xlane.xlu0 %502
    %v504 = vsel %vm398, %v482, 0.0
    %505 = vadd.xlane.f32.xlu0 %v504
    %v506 = vpop.xlane.xlu0 %505
    %v507 = vsel %vm398, %v483, 0.0
    %508 = vadd.xlane.f32.xlu0 %v507
    %v509 = vpop.xlane.xlu0 %508
    %v510 = vrcp.pop 32.0
    %v511 = vmul.f32 %v488, %v510
    %v512 = vmul.f32 %v491, %v510
    %v513 = vmul.f32 %v494, %v510
    %v514 = vmul.f32 %v497, %v510
    %v515 = vmul.f32 %v500, %v510
    %v516 = vmul.f32 %v503, %v510
    %v517 = vmul.f32 %v506, %v510
    %v518 = vmul.f32 %v509, %v510
    %v519 = vsub.f32 %v476, %v511
    %v520 = vsub.f32 %v477, %v512
    %v521 = vsub.f32 %v478, %v513
    %v522 = vsub.f32 %v479, %v514
    %v523 = vsub.f32 %v480, %v515
    %v524 = vsub.f32 %v481, %v516
    %v525 = vsub.f32 %v482, %v517
    %v526 = vsub.f32 %v483, %v518
    %v527 = vmul.f32 %v519, %v519
    %v528 = vmul.f32 %v520, %v520
    %v529 = vmul.f32 %v521, %v521
    %v530 = vmul.f32 %v522, %v522
    %v531 = vmul.f32 %v523, %v523
    %v532 = vmul.f32 %v524, %v524
    %v533 = vmul.f32 %v525, %v525
    %v534 = vmul.f32 %v526, %v526
    %v535 = vsel %vm398, %v527, 0.0
    %536 = vadd.xlane.f32.xlu0 %v535
    %v537 = vpop.xlane.xlu0 %536
    %v538 = vsel %vm398, %v528, 0.0
    %539 = vadd.xlane.f32.xlu0 %v538
    %v540 = vpop.xlane.xlu0 %539
    %v541 = vsel %vm398, %v529, 0.0
    %542 = vadd.xlane.f32.xlu0 %v541
    %v543 = vpop.xlane.xlu0 %542
    %v544 = vsel %vm398, %v530, 0.0
    %545 = vadd.xlane.f32.xlu0 %v544
    %v546 = vpop.xlane.xlu0 %545
    %v547 = vsel %vm398, %v531, 0.0
    %548 = vadd.xlane.f32.xlu0 %v547
    %v549 = vpop.xlane.xlu0 %548
    %v550 = vsel %vm398, %v532, 0.0
    %551 = vadd.xlane.f32.xlu0 %v550
    %v552 = vpop.xlane.xlu0 %551
    %v553 = vsel %vm398, %v533, 0.0
    %554 = vadd.xlane.f32.xlu0 %v553
    %v555 = vpop.xlane.xlu0 %554
    %v556 = vsel %vm398, %v534, 0.0
    %557 = vadd.xlane.f32.xlu0 %v556
    %v558 = vpop.xlane.xlu0 %557
    %v559 = vmul.f32 %v537, %v510
    %v560 = vmul.f32 %v540, %v510
    %v561 = vmul.f32 %v543, %v510
    %v562 = vmul.f32 %v546, %v510
    %v563 = vmul.f32 %v549, %v510
    %v564 = vmul.f32 %v552, %v510
    %v565 = vmul.f32 %v555, %v510
    %v566 = vmul.f32 %v558, %v510
    %v567 = vadd.f32 %v559, 1e-05
    %v568 = vadd.f32 %v560, 1e-05
    %v569 = vadd.f32 %v561, 1e-05
    %v570 = vadd.f32 %v562, 1e-05
    %v571 = vadd.f32 %v563, 1e-05
    %v572 = vadd.f32 %v564, 1e-05
    %v573 = vadd.f32 %v565, 1e-05
    %v574 = vadd.f32 %v566, 1e-05
    %v575 = vrsqrt.pop %v567
    %v576 = vrsqrt.pop %v568
    %v577 = vrsqrt.pop %v569
    %v578 = vrsqrt.pop %v570
    %v579 = vrsqrt.pop %v571
    %v580 = vrsqrt.pop %v572
    %v581 = vrsqrt.pop %v573
    %v582 = vrsqrt.pop %v574
    %v583 = vmul.f32 %v519, %v575
    %v584 = vmul.f32 %v520, %v576
    %v585 = vmul.f32 %v521, %v577
    %v586 = vmul.f32 %v522, %v578
    %v587 = vmul.f32 %v523, %v579
    %v588 = vmul.f32 %v524, %v580
    %v589 = vmul.f32 %v525, %v581
    %v590 = vmul.f32 %v526, %v582
    %v592 = vlaneseq
    %v593 = vshrl.u32 %v592, 7
    %v594 = vsub.s32 0, %v593
    %v595 = vrot.slane %v484, %v594
    %v597 = vmul.f32 %v583, %v595
    %v598 = vmul.f32 %v584, %v595
    %v599 = vmul.f32 %v585, %v595
    %v600 = vmul.f32 %v586, %v595
    %v601 = vmul.f32 %v587, %v595
    %v602 = vmul.f32 %v588, %v595
    %v603 = vmul.f32 %v589, %v595
    %v604 = vmul.f32 %v590, %v595
    %v606 = vlaneseq
    %v607 = vshrl.u32 %v606, 7
    %v608 = vsub.s32 0, %v607
    %v609 = vrot.slane %v485, %v608
    %v611 = vadd.f32 %v597, %v609
    %v612 = vadd.f32 %v598, %v609
    %v613 = vadd.f32 %v599, %v609
    %v614 = vadd.f32 %v600, %v609
    %v615 = vadd.f32 %v601, %v609
    %v616 = vadd.f32 %v602, %v609
    %v617 = vadd.f32 %v603, %v609
    %v618 = vadd.f32 %v604, %v609
    %v619 = vld [vmem:[#allocation16] sm:$0xf]
    %v620 = vld [vmem:[#allocation16 + $0x4] sm:$0xf]
    %v621 = vld [vmem:[#allocation16 + $0x8] sm:$0xf]
    %v622 = vld [vmem:[#allocation16 + $0xc] sm:$0xf]
    %v623 = vpack.c.bf16 %v612, %v611
    %v624 = vpack.c.bf16 %v614, %v613
    %v625 = vpack.c.bf16 %v616, %v615
    %v626 = vpack.c.bf16 %v618, %v617
    %v627 = vld [vmem:[#allocation18] sm:$0x1]
    %v629 = vlaneseq
    %v630 = vshrl.u32 %v629, 7
    %v631 = vsub.s32 0, %v630
    %v632 = vrot.slane %v627, %v631
    %v638 = vunpack.c.l.b16 %v619
    %v639 = vunpack.c.l.b16 %v620
    %v640 = vunpack.c.l.b16 %v621
    %v641 = vunpack.c.l.b16 %v622
    %v642 = vpack.c.b16 %v639, %v638
    %v643 = vpack.c.b16 %v641, %v640
    %v647 = vsel %vm398, %v623, 0
    %v650 = vsel %vm398, %v624, 0
    %v653 = vsel %vm398, %v625, 0
    %v656 = vsel %vm398, %v626, 0
    %658 = vmatprep.subr.bf16.mxu0 0
    %659 = vmatpush1.bf16.msra.mxu0 0
    %660 = vmatprep.subr.bf16.mxu0 0
    %661 = vmatpush1.bf16.msra.mxu0 0
    %662 = vmatprep.subr.bf16.mxu0 0
    %663 = vmatpush1.bf16.msra.mxu0 0
    %664 = vmatprep.subr.bf16.mxu0 0
    %665 = vmatpush1.bf16.msra.mxu0 0
    %666 = vmatprep.subr.bf16.mxu0 0
    %667 = vmatpush1.bf16.msra.mxu0 0
    %668 = vmatprep.subr.bf16.mxu0 0
    %669 = vmatpush1.bf16.msra.mxu0 0
    %670 = vmatprep.subr.bf16.mxu0 0
    %671 = vmatpush1.bf16.msra.mxu0 %v643
    %672 = vmatprep.subr.bf16.mxu0 0
    %673 = vmatpush1.bf16.msra.mxu0 %v642
    %674 = vmatprep.subr.bf16.mxu0 0
    %675 = vmatpush2.bf16.msra.mxu0 0
    %676 = vmatprep.subr.bf16.mxu0 0
    %677 = vmatpush2.bf16.msra.mxu0 0
    %678 = vmatprep.subr.bf16.mxu0 0
    %679 = vmatpush2.bf16.msra.mxu0 0
    %680 = vmatprep.subr.bf16.mxu0 0
    %681 = vmatpush2.bf16.msra.mxu0 0
    %682 = vmatprep.subr.bf16.mxu0 0
    %683 = vmatpush2.bf16.msra.mxu0 0
    %684 = vmatprep.subr.bf16.mxu0 0
    %685 = vmatpush2.bf16.msra.mxu0 0
    %686 = vmatprep.subr.bf16.mxu0 0
    %687 = vmatpush2.bf16.msra.mxu0 0
    %688 = vmatprep.subr.bf16.mxu0 0
    %689 = vmatpush2.bf16.msra.mxu0 0
    %690 = vmatprep.mubr.bf16.mxu0 0
    %691 = vmatmul.mubr.bf16.gmra.mxu0 %v647
    %v692 = vpop.f32.mrf.mxu0
    %v693 = vadd.f32 %v632, %v692
    %v694 = vpop.f32.mrf.mxu0
    %v695 = vpop.f32.mrf.mxu0
    %v696 = vadd.f32 %v632, %v695
    %v697 = vpop.f32.mrf.mxu0
    %698 = vmatprep.mubr.bf16.mxu0 0
    %699 = vmatmul.mubr.bf16.gmra.mxu0 %v650
    %v700 = vpop.f32.mrf.mxu0
    %v701 = vadd.f32 %v632, %v700
    %v702 = vpop.f32.mrf.mxu0
    %v703 = vpop.f32.mrf.mxu0
    %v704 = vadd.f32 %v632, %v703
    %v705 = vpop.f32.mrf.mxu0
    %706 = vmatprep.mubr.bf16.mxu0 0
    %707 = vmatmul.mubr.bf16.gmra.mxu0 %v653
    %v708 = vpop.f32.mrf.mxu0
    %v709 = vadd.f32 %v632, %v708
    %v710 = vpop.f32.mrf.mxu0
    %v711 = vpop.f32.mrf.mxu0
    %v712 = vadd.f32 %v632, %v711
    %v713 = vpop.f32.mrf.mxu0
    %714 = vmatprep.mubr.bf16.mxu0 0
    %715 = vmatmul.mubr.bf16.gmra.mxu0 %v656
    %v716 = vpop.f32.mrf.mxu0
    %v717 = vadd.f32 %v632, %v716
    %v718 = vpop.f32.mrf.mxu0
    %v719 = vpop.f32.mrf.mxu0
    %v720 = vadd.f32 %v632, %v719
    %v721 = vpop.f32.mrf.mxu0
    %722 = vdwg.mxu0
    %v723 = vmax.f32 %v693, 0.0
    %v724 = vmax.f32 %v696, 0.0
    %v725 = vmax.f32 %v701, 0.0
    %v726 = vmax.f32 %v704, 0.0
    %v727 = vmax.f32 %v709, 0.0
    %v728 = vmax.f32 %v712, 0.0
    %v729 = vmax.f32 %v717, 0.0
    %v730 = vmax.f32 %v720, 0.0
    %v731 = vld [vmem:[#allocation19] sm:$0x1]
    %v732 = vld [vmem:[#allocation21] sm:$0x1]
    %v733 = vsel %vm398, %v723, 0.0
    %734 = vadd.xlane.f32.xlu0 %v733
    %v735 = vpop.xlane.xlu0 %734
    %v736 = vsel %vm398, %v724, 0.0
    %737 = vadd.xlane.f32.xlu0 %v736
    %v738 = vpop.xlane.xlu0 %737
    %v739 = vsel %vm398, %v725, 0.0
    %740 = vadd.xlane.f32.xlu0 %v739
    %v741 = vpop.xlane.xlu0 %740
    %v742 = vsel %vm398, %v726, 0.0
    %743 = vadd.xlane.f32.xlu0 %v742
    %v744 = vpop.xlane.xlu0 %743
    %v745 = vsel %vm398, %v727, 0.0
    %746 = vadd.xlane.f32.xlu0 %v745
    %v747 = vpop.xlane.xlu0 %746
    %v748 = vsel %vm398, %v728, 0.0
    %749 = vadd.xlane.f32.xlu0 %v748
    %v750 = vpop.xlane.xlu0 %749
    %v751 = vsel %vm398, %v729, 0.0
    %752 = vadd.xlane.f32.xlu0 %v751
    %v753 = vpop.xlane.xlu0 %752
    %v754 = vsel %vm398, %v730, 0.0
    %755 = vadd.xlane.f32.xlu0 %v754
    %v756 = vpop.xlane.xlu0 %755
    %v757 = vmul.f32 %v735, %v510
    %v758 = vmul.f32 %v738, %v510
    %v759 = vmul.f32 %v741, %v510
    %v760 = vmul.f32 %v744, %v510
    %v761 = vmul.f32 %v747, %v510
    %v762 = vmul.f32 %v750, %v510
    %v763 = vmul.f32 %v753, %v510
    %v764 = vmul.f32 %v756, %v510
    %v765 = vsub.f32 %v723, %v757
    %v766 = vsub.f32 %v724, %v758
    %v767 = vsub.f32 %v725, %v759
    %v768 = vsub.f32 %v726, %v760
    %v769 = vsub.f32 %v727, %v761
    %v770 = vsub.f32 %v728, %v762
    %v771 = vsub.f32 %v729, %v763
    %v772 = vsub.f32 %v730, %v764
    %v773 = vmul.f32 %v765, %v765
    %v774 = vmul.f32 %v766, %v766
    %v775 = vmul.f32 %v767, %v767
    %v776 = vmul.f32 %v768, %v768
    %v777 = vmul.f32 %v769, %v769
    %v778 = vmul.f32 %v770, %v770
    %v779 = vmul.f32 %v771, %v771
    %v780 = vmul.f32 %v772, %v772
    %v781 = vsel %vm398, %v773, 0.0
    %782 = vadd.xlane.f32.xlu0 %v781
    %v783 = vpop.xlane.xlu0 %782
    %v784 = vsel %vm398, %v774, 0.0
    %785 = vadd.xlane.f32.xlu0 %v784
    %v786 = vpop.xlane.xlu0 %785
    %v787 = vsel %vm398, %v775, 0.0
    %788 = vadd.xlane.f32.xlu0 %v787
    %v789 = vpop.xlane.xlu0 %788
    %v790 = vsel %vm398, %v776, 0.0
    %791 = vadd.xlane.f32.xlu0 %v790
    %v792 = vpop.xlane.xlu0 %791
    %v793 = vsel %vm398, %v777, 0.0
    %794 = vadd.xlane.f32.xlu0 %v793
    %v795 = vpop.xlane.xlu0 %794
    %v796 = vsel %vm398, %v778, 0.0
    %797 = vadd.xlane.f32.xlu0 %v796
    %v798 = vpop.xlane.xlu0 %797
    %v799 = vsel %vm398, %v779, 0.0
    %800 = vadd.xlane.f32.xlu0 %v799
    %v801 = vpop.xlane.xlu0 %800
    %v802 = vsel %vm398, %v780, 0.0
    %803 = vadd.xlane.f32.xlu0 %v802
    %v804 = vpop.xlane.xlu0 %803
    %v805 = vmul.f32 %v783, %v510
    %v806 = vmul.f32 %v786, %v510
    %v807 = vmul.f32 %v789, %v510
    %v808 = vmul.f32 %v792, %v510
    %v809 = vmul.f32 %v795, %v510
    %v810 = vmul.f32 %v798, %v510
    %v811 = vmul.f32 %v801, %v510
    %v812 = vmul.f32 %v804, %v510
    %v813 = vadd.f32 %v805, 1e-05
    %v814 = vadd.f32 %v806, 1e-05
    %v815 = vadd.f32 %v807, 1e-05
    %v816 = vadd.f32 %v808, 1e-05
    %v817 = vadd.f32 %v809, 1e-05
    %v818 = vadd.f32 %v810, 1e-05
    %v819 = vadd.f32 %v811, 1e-05
    %v820 = vadd.f32 %v812, 1e-05
    %v821 = vrsqrt.pop %v813
    %v822 = vrsqrt.pop %v814
    %v823 = vrsqrt.pop %v815
    %v824 = vrsqrt.pop %v816
    %v825 = vrsqrt.pop %v817
    %v826 = vrsqrt.pop %v818
    %v827 = vrsqrt.pop %v819
    %v828 = vrsqrt.pop %v820
    %v829 = vmul.f32 %v765, %v821
    %v830 = vmul.f32 %v766, %v822
    %v831 = vmul.f32 %v767, %v823
    %v832 = vmul.f32 %v768, %v824
    %v833 = vmul.f32 %v769, %v825
    %v834 = vmul.f32 %v770, %v826
    %v835 = vmul.f32 %v771, %v827
    %v836 = vmul.f32 %v772, %v828
    %v838 = vlaneseq
    %v839 = vshrl.u32 %v838, 7
    %v840 = vsub.s32 0, %v839
    %v841 = vrot.slane %v731, %v840
    %v843 = vmul.f32 %v829, %v841
    %v844 = vmul.f32 %v830, %v841
    %v845 = vmul.f32 %v831, %v841
    %v846 = vmul.f32 %v832, %v841
    %v847 = vmul.f32 %v833, %v841
    %v848 = vmul.f32 %v834, %v841
    %v849 = vmul.f32 %v835, %v841
    %v850 = vmul.f32 %v836, %v841
    %v852 = vlaneseq
    %v853 = vshrl.u32 %v852, 7
    %v854 = vsub.s32 0, %v853
    %v855 = vrot.slane %v732, %v854
    %v857 = vadd.f32 %v843, %v855
    %v858 = vadd.f32 %v844, %v855
    %v859 = vadd.f32 %v845, %v855
    %v860 = vadd.f32 %v846, %v855
    %v861 = vadd.f32 %v847, %v855
    %v862 = vadd.f32 %v848, %v855
    %v863 = vadd.f32 %v849, %v855
    %v864 = vadd.f32 %v850, %v855
    %s865 = scalar_lea.vmem [#allocation7], 12
    %v866 = vld [vmem:[%s865] sm:$0xf]
    %v867 = vld [vmem:[%s865 + $0x4] sm:$0xf]
    %v868 = vld [vmem:[%s865 + $0x8] sm:$0xf]
    %s869 = scalar_lea.vmem [#allocation9], 1
    %v870 = vld [vmem:[%s869] sm:$0x1]
    %v872 = vlaneseq
    %v873 = vshrl.u32 %v872, 7
    %v874 = vsub.s32 0, %v873
    %v875 = vrot.slane %v870, %v874
    %v880 = vunpack.c.l.b16 %v866
    %v881 = vunpack.c.l.b16 %v867
    %v882 = vunpack.c.l.b16 %v868
    %v883 = vpack.c.b16 %v881, %v880
    %v884 = vpack.c.b16 %v882, %v882
    %v887 = vsel %vm294, %v884, 0
    %889 = vmatprep.subr.bf16.mxu0 0
    %890 = vmatpush1.bf16.msra.mxu0 0
    %891 = vmatprep.subr.bf16.mxu0 0
    %892 = vmatpush1.bf16.msra.mxu0 0
    %893 = vmatprep.subr.bf16.mxu0 0
    %894 = vmatpush1.bf16.msra.mxu0 0
    %895 = vmatprep.subr.bf16.mxu0 0
    %896 = vmatpush1.bf16.msra.mxu0 0
    %897 = vmatprep.subr.bf16.mxu0 0
    %898 = vmatpush1.bf16.msra.mxu0 0
    %899 = vmatprep.subr.bf16.mxu0 0
    %900 = vmatpush1.bf16.msra.mxu0 0
    %901 = vmatprep.subr.bf16.mxu0 0
    %902 = vmatpush1.bf16.msra.mxu0 %v887
    %903 = vmatprep.subr.bf16.mxu0 0
    %904 = vmatpush1.bf16.msra.mxu0 %v883
    %905 = vmatprep.subr.bf16.mxu0 0
    %906 = vmatpush2.bf16.msra.mxu0 0
    %907 = vmatprep.subr.bf16.mxu0 0
    %908 = vmatpush2.bf16.msra.mxu0 0
    %909 = vmatprep.subr.bf16.mxu0 0
    %910 = vmatpush2.bf16.msra.mxu0 0
    %911 = vmatprep.subr.bf16.mxu0 0
    %912 = vmatpush2.bf16.msra.mxu0 0
    %913 = vmatprep.subr.bf16.mxu0 0
    %914 = vmatpush2.bf16.msra.mxu0 0
    %915 = vmatprep.subr.bf16.mxu0 0
    %916 = vmatpush2.bf16.msra.mxu0 0
    %917 = vmatprep.subr.bf16.mxu0 0
    %918 = vmatpush2.bf16.msra.mxu0 0
    %919 = vmatprep.subr.bf16.mxu0 0
    %920 = vmatpush2.bf16.msra.mxu0 0
    %921 = vmatprep.mubr.bf16.mxu0 0
    %922 = vmatmul.mubr.bf16.gmra.mxu0 %v283
    %v923 = vpop.f32.mrf.mxu0
    %v924 = vadd.f32 %v875, %v923
    %v925 = vpop.f32.mrf.mxu0
    %v926 = vpop.f32.mrf.mxu0
    %v927 = vadd.f32 %v875, %v926
    %v928 = vpop.f32.mrf.mxu0
    %929 = vmatprep.mubr.bf16.mxu0 0
    %930 = vmatmul.mubr.bf16.gmra.mxu0 %v286
    %v931 = vpop.f32.mrf.mxu0
    %v932 = vadd.f32 %v875, %v931
    %v933 = vpop.f32.mrf.mxu0
    %v934 = vpop.f32.mrf.mxu0
    %v935 = vadd.f32 %v875, %v934
    %v936 = vpop.f32.mrf.mxu0
    %937 = vmatprep.mubr.bf16.mxu0 0
    %938 = vmatmul.mubr.bf16.gmra.mxu0 %v289
    %v939 = vpop.f32.mrf.mxu0
    %v940 = vadd.f32 %v875, %v939
    %v941 = vpop.f32.mrf.mxu0
    %v942 = vpop.f32.mrf.mxu0
    %v943 = vadd.f32 %v875, %v942
    %v944 = vpop.f32.mrf.mxu0
    %945 = vmatprep.mubr.bf16.mxu0 0
    %946 = vmatmul.mubr.bf16.gmra.mxu0 %v292
    %v947 = vpop.f32.mrf.mxu0
    %v948 = vadd.f32 %v875, %v947
    %v949 = vpop.f32.mrf.mxu0
    %v950 = vpop.f32.mrf.mxu0
    %v951 = vadd.f32 %v875, %v950
    %v952 = vpop.f32.mrf.mxu0
    %953 = vdwg.mxu0
    %v954 = vmax.f32 %v924, 0.0
    %v955 = vmax.f32 %v927, 0.0
    %v956 = vmax.f32 %v932, 0.0
    %v957 = vmax.f32 %v935, 0.0
    %v958 = vmax.f32 %v940, 0.0
    %v959 = vmax.f32 %v943, 0.0
    %v960 = vmax.f32 %v948, 0.0
    %v961 = vmax.f32 %v951, 0.0
    %s962 = scalar_lea.vmem [#allocation10], 16
    %v963 = vld [vmem:[%s962] sm:$0xf]
    %v964 = vld [vmem:[%s962 + $0x4] sm:$0xf]
    %v965 = vld [vmem:[%s962 + $0x8] sm:$0xf]
    %v966 = vld [vmem:[%s962 + $0xc] sm:$0xf]
    %v967 = vpack.c.bf16 %v955, %v954
    %v968 = vpack.c.bf16 %v957, %v956
    %v969 = vpack.c.bf16 %v959, %v958
    %v970 = vpack.c.bf16 %v961, %v960
    %s971 = scalar_lea.vmem [#allocation12], 1
    %v972 = vld [vmem:[%s971] sm:$0x1]
    %v974 = vlaneseq
    %v975 = vshrl.u32 %v974, 7
    %v976 = vsub.s32 0, %v975
    %v977 = vrot.slane %v972, %v976
    %v983 = vunpack.c.l.b16 %v963
    %v984 = vunpack.c.l.b16 %v964
    %v985 = vunpack.c.l.b16 %v965
    %v986 = vunpack.c.l.b16 %v966
    %v987 = vpack.c.b16 %v984, %v983
    %v988 = vpack.c.b16 %v986, %v985
    %v992 = vsel %vm398, %v967, 0
    %v995 = vsel %vm398, %v968, 0
    %v998 = vsel %vm398, %v969, 0
    %v1001 = vsel %vm398, %v970, 0
    %1003 = vmatprep.subr.bf16.mxu0 0
    %1004 = vmatpush1.bf16.msra.mxu0 0
    %1005 = vmatprep.subr.bf16.mxu0 0
    %1006 = vmatpush1.bf16.msra.mxu0 0
    %1007 = vmatprep.subr.bf16.mxu0 0
    %1008 = vmatpush1.bf16.msra.mxu0 0
    %1009 = vmatprep.subr.bf16.mxu0 0
    %1010 = vmatpush1.bf16.msra.mxu0 0
    %1011 = vmatprep.subr.bf16.mxu0 0
    %1012 = vmatpush1.bf16.msra.mxu0 0
    %1013 = vmatprep.subr.bf16.mxu0 0
    %1014 = vmatpush1.bf16.msra.mxu0 0
    %1015 = vmatprep.subr.bf16.mxu0 0
    %1016 = vmatpush1.bf16.msra.mxu0 %v988
    %1017 = vmatprep.subr.bf16.mxu0 0
    %1018 = vmatpush1.bf16.msra.mxu0 %v987
    %1019 = vmatprep.subr.bf16.mxu0 0
    %1020 = vmatpush2.bf16.msra.mxu0 0
    %1021 = vmatprep.subr.bf16.mxu0 0
    %1022 = vmatpush2.bf16.msra.mxu0 0
    %1023 = vmatprep.subr.bf16.mxu0 0
    %1024 = vmatpush2.bf16.msra.mxu0 0
    %1025 = vmatprep.subr.bf16.mxu0 0
    %1026 = vmatpush2.bf16.msra.mxu0 0
    %1027 = vmatprep.subr.bf16.mxu0 0
    %1028 = vmatpush2.bf16.msra.mxu0 0
    %1029 = vmatprep.subr.bf16.mxu0 0
    %1030 = vmatpush2.bf16.msra.mxu0 0
    %1031 = vmatprep.subr.bf16.mxu0 0
    %1032 = vmatpush2.bf16.msra.mxu0 0
    %1033 = vmatprep.subr.bf16.mxu0 0
    %1034 = vmatpush2.bf16.msra.mxu0 0
    %1035 = vmatprep.mubr.bf16.mxu0 0
    %1036 = vmatmul.mubr.bf16.gmra.mxu0 %v992
    %v1037 = vpop.f32.mrf.mxu0
    %v1038 = vadd.f32 %v977, %v1037
    %v1039 = vpop.f32.mrf.mxu0
    %v1040 = vpop.f32.mrf.mxu0
    %v1041 = vadd.f32 %v977, %v1040
    %v1042 = vpop.f32.mrf.mxu0
    %1043 = vmatprep.mubr.bf16.mxu0 0
    %1044 = vmatmul.mubr.bf16.gmra.mxu0 %v995
    %v1045 = vpop.f32.mrf.mxu0
    %v1046 = vadd.f32 %v977, %v1045
    %v1047 = vpop.f32.mrf.mxu0
    %v1048 = vpop.f32.mrf.mxu0
    %v1049 = vadd.f32 %v977, %v1048
    %v1050 = vpop.f32.mrf.mxu0
    %1051 = vmatprep.mubr.bf16.mxu0 0
    %1052 = vmatmul.mubr.bf16.gmra.mxu0 %v998
    %v1053 = vpop.f32.mrf.mxu0
    %v1054 = vadd.f32 %v977, %v1053
    %v1055 = vpop.f32.mrf.mxu0
    %v1056 = vpop.f32.mrf.mxu0
    %v1057 = vadd.f32 %v977, %v1056
    %v1058 = vpop.f32.mrf.mxu0
    %1059 = vmatprep.mubr.bf16.mxu0 0
    %1060 = vmatmul.mubr.bf16.gmra.mxu0 %v1001
    %v1061 = vpop.f32.mrf.mxu0
    %v1062 = vadd.f32 %v977, %v1061
    %v1063 = vpop.f32.mrf.mxu0
    %v1064 = vpop.f32.mrf.mxu0
    %v1065 = vadd.f32 %v977, %v1064
    %v1066 = vpop.f32.mrf.mxu0
    %1067 = vdwg.mxu0
    %v1068 = vmax.f32 %v1038, 0.0
    %v1069 = vmax.f32 %v1041, 0.0
    %v1070 = vmax.f32 %v1046, 0.0
    %v1071 = vmax.f32 %v1049, 0.0
    %v1072 = vmax.f32 %v1054, 0.0
    %v1073 = vmax.f32 %v1057, 0.0
    %v1074 = vmax.f32 %v1062, 0.0
    %v1075 = vmax.f32 %v1065, 0.0
    %s1076 = scalar_lea.vmem [#allocation13], 1
    %v1077 = vld [vmem:[%s1076] sm:$0x1]
    %s1078 = scalar_lea.vmem [#allocation15], 1
    %v1079 = vld [vmem:[%s1078] sm:$0x1]
    %v1080 = vsel %vm398, %v1068, 0.0
    %1081 = vadd.xlane.f32.xlu0 %v1080
    %v1082 = vpop.xlane.xlu0 %1081
    %v1083 = vsel %vm398, %v1069, 0.0
    %1084 = vadd.xlane.f32.xlu0 %v1083
    %v1085 = vpop.xlane.xlu0 %1084
    %v1086 = vsel %vm398, %v1070, 0.0
    %1087 = vadd.xlane.f32.xlu0 %v1086
    %v1088 = vpop.xlane.xlu0 %1087
    %v1089 = vsel %vm398, %v1071, 0.0
    %1090 = vadd.xlane.f32.xlu0 %v1089
    %v1091 = vpop.xlane.xlu0 %1090
    %v1092 = vsel %vm398, %v1072, 0.0
    %1093 = vadd.xlane.f32.xlu0 %v1092
    %v1094 = vpop.xlane.xlu0 %1093
    %v1095 = vsel %vm398, %v1073, 0.0
    %1096 = vadd.xlane.f32.xlu0 %v1095
    %v1097 = vpop.xlane.xlu0 %1096
    %v1098 = vsel %vm398, %v1074, 0.0
    %1099 = vadd.xlane.f32.xlu0 %v1098
    %v1100 = vpop.xlane.xlu0 %1099
    %v1101 = vsel %vm398, %v1075, 0.0
    %1102 = vadd.xlane.f32.xlu0 %v1101
    %v1103 = vpop.xlane.xlu0 %1102
    %v1104 = vmul.f32 %v1082, %v510
    %v1105 = vmul.f32 %v1085, %v510
    %v1106 = vmul.f32 %v1088, %v510
    %v1107 = vmul.f32 %v1091, %v510
    %v1108 = vmul.f32 %v1094, %v510
    %v1109 = vmul.f32 %v1097, %v510
    %v1110 = vmul.f32 %v1100, %v510
    %v1111 = vmul.f32 %v1103, %v510
    %v1112 = vsub.f32 %v1068, %v1104
    %v1113 = vsub.f32 %v1069, %v1105
    %v1114 = vsub.f32 %v1070, %v1106
    %v1115 = vsub.f32 %v1071, %v1107
    %v1116 = vsub.f32 %v1072, %v1108
    %v1117 = vsub.f32 %v1073, %v1109
    %v1118 = vsub.f32 %v1074, %v1110
    %v1119 = vsub.f32 %v1075, %v1111
    %v1120 = vmul.f32 %v1112, %v1112
    %v1121 = vmul.f32 %v1113, %v1113
    %v1122 = vmul.f32 %v1114, %v1114
    %v1123 = vmul.f32 %v1115, %v1115
    %v1124 = vmul.f32 %v1116, %v1116
    %v1125 = vmul.f32 %v1117, %v1117
    %v1126 = vmul.f32 %v1118, %v1118
    %v1127 = vmul.f32 %v1119, %v1119
    %v1128 = vsel %vm398, %v1120, 0.0
    %1129 = vadd.xlane.f32.xlu0 %v1128
    %v1130 = vpop.xlane.xlu0 %1129
    %v1131 = vsel %vm398, %v1121, 0.0
    %1132 = vadd.xlane.f32.xlu0 %v1131
    %v1133 = vpop.xlane.xlu0 %1132
    %v1134 = vsel %vm398, %v1122, 0.0
    %1135 = vadd.xlane.f32.xlu0 %v1134
    %v1136 = vpop.xlane.xlu0 %1135
    %v1137 = vsel %vm398, %v1123, 0.0
    %1138 = vadd.xlane.f32.xlu0 %v1137
    %v1139 = vpop.xlane.xlu0 %1138
    %v1140 = vsel %vm398, %v1124, 0.0
    %1141 = vadd.xlane.f32.xlu0 %v1140
    %v1142 = vpop.xlane.xlu0 %1141
    %v1143 = vsel %vm398, %v1125, 0.0
    %1144 = vadd.xlane.f32.xlu0 %v1143
    %v1145 = vpop.xlane.xlu0 %1144
    %v1146 = vsel %vm398, %v1126, 0.0
    %1147 = vadd.xlane.f32.xlu0 %v1146
    %v1148 = vpop.xlane.xlu0 %1147
    %v1149 = vsel %vm398, %v1127, 0.0
    %1150 = vadd.xlane.f32.xlu0 %v1149
    %v1151 = vpop.xlane.xlu0 %1150
    %v1152 = vmul.f32 %v1130, %v510
    %v1153 = vmul.f32 %v1133, %v510
    %v1154 = vmul.f32 %v1136, %v510
    %v1155 = vmul.f32 %v1139, %v510
    %v1156 = vmul.f32 %v1142, %v510
    %v1157 = vmul.f32 %v1145, %v510
    %v1158 = vmul.f32 %v1148, %v510
    %v1159 = vmul.f32 %v1151, %v510
    %v1160 = vadd.f32 %v1152, 1e-05
    %v1161 = vadd.f32 %v1153, 1e-05
    %v1162 = vadd.f32 %v1154, 1e-05
    %v1163 = vadd.f32 %v1155, 1e-05
    %v1164 = vadd.f32 %v1156, 1e-05
    %v1165 = vadd.f32 %v1157, 1e-05
    %v1166 = vadd.f32 %v1158, 1e-05
    %v1167 = vadd.f32 %v1159, 1e-05
    %v1168 = vrsqrt.pop %v1160
    %v1169 = vrsqrt.pop %v1161
    %v1170 = vrsqrt.pop %v1162
    %v1171 = vrsqrt.pop %v1163
    %v1172 = vrsqrt.pop %v1164
    %v1173 = vrsqrt.pop %v1165
    %v1174 = vrsqrt.pop %v1166
    %v1175 = vrsqrt.pop %v1167
    %v1176 = vmul.f32 %v1112, %v1168
    %v1177 = vmul.f32 %v1113, %v1169
    %v1178 = vmul.f32 %v1114, %v1170
    %v1179 = vmul.f32 %v1115, %v1171
    %v1180 = vmul.f32 %v1116, %v1172
    %v1181 = vmul.f32 %v1117, %v1173
    %v1182 = vmul.f32 %v1118, %v1174
    %v1183 = vmul.f32 %v1119, %v1175
    %v1185 = vlaneseq
    %v1186 = vshrl.u32 %v1185, 7
    %v1187 = vsub.s32 0, %v1186
    %v1188 = vrot.slane %v1077, %v1187
    %v1190 = vmul.f32 %v1176, %v1188
    %v1191 = vmul.f32 %v1177, %v1188
    %v1192 = vmul.f32 %v1178, %v1188
    %v1193 = vmul.f32 %v1179, %v1188
    %v1194 = vmul.f32 %v1180, %v1188
    %v1195 = vmul.f32 %v1181, %v1188
    %v1196 = vmul.f32 %v1182, %v1188
    %v1197 = vmul.f32 %v1183, %v1188
    %v1199 = vlaneseq
    %v1200 = vshrl.u32 %v1199, 7
    %v1201 = vsub.s32 0, %v1200
    %v1202 = vrot.slane %v1079, %v1201
    %v1204 = vadd.f32 %v1190, %v1202
    %v1205 = vadd.f32 %v1191, %v1202
    %v1206 = vadd.f32 %v1192, %v1202
    %v1207 = vadd.f32 %v1193, %v1202
    %v1208 = vadd.f32 %v1194, %v1202
    %v1209 = vadd.f32 %v1195, %v1202
    %v1210 = vadd.f32 %v1196, %v1202
    %v1211 = vadd.f32 %v1197, %v1202
    %s1212 = scalar_lea.vmem [#allocation16], 16
    %v1213 = vld [vmem:[%s1212] sm:$0xf]
    %v1214 = vld [vmem:[%s1212 + $0x4] sm:$0xf]
    %v1215 = vld [vmem:[%s1212 + $0x8] sm:$0xf]
    %v1216 = vld [vmem:[%s1212 + $0xc] sm:$0xf]
    %v1217 = vpack.c.bf16 %v1205, %v1204
    %v1218 = vpack.c.bf16 %v1207, %v1206
    %v1219 = vpack.c.bf16 %v1209, %v1208
    %v1220 = vpack.c.bf16 %v1211, %v1210
    %s1221 = scalar_lea.vmem [#allocation18], 1
    %v1222 = vld [vmem:[%s1221] sm:$0x1]
    %v1224 = vlaneseq
    %v1225 = vshrl.u32 %v1224, 7
    %v1226 = vsub.s32 0, %v1225
    %v1227 = vrot.slane %v1222, %v1226
    %v1233 = vunpack.c.l.b16 %v1213
    %v1234 = vunpack.c.l.b16 %v1214
    %v1235 = vunpack.c.l.b16 %v1215
    %v1236 = vunpack.c.l.b16 %v1216
    %v1237 = vpack.c.b16 %v1234, %v1233
    %v1238 = vpack.c.b16 %v1236, %v1235
    %v1242 = vsel %vm398, %v1217, 0
    %v1245 = vsel %vm398, %v1218, 0
    %v1248 = vsel %vm398, %v1219, 0
    %v1251 = vsel %vm398, %v1220, 0
    %1253 = vmatprep.subr.bf16.mxu0 0
    %1254 = vmatpush1.bf16.msra.mxu0 0
    %1255 = vmatprep.subr.bf16.mxu0 0
    %1256 = vmatpush1.bf16.msra.mxu0 0
    %1257 = vmatprep.subr.bf16.mxu0 0
    %1258 = vmatpush1.bf16.msra.mxu0 0
    %1259 = vmatprep.subr.bf16.mxu0 0
    %1260 = vmatpush1.bf16.msra.mxu0 0
    %1261 = vmatprep.subr.bf16.mxu0 0
    %1262 = vmatpush1.bf16.msra.mxu0 0
    %1263 = vmatprep.subr.bf16.mxu0 0
    %1264 = vmatpush1.bf16.msra.mxu0 0
    %1265 = vmatprep.subr.bf16.mxu0 0
    %1266 = vmatpush1.bf16.msra.mxu0 %v1238
    %1267 = vmatprep.subr.bf16.mxu0 0
    %1268 = vmatpush1.bf16.msra.mxu0 %v1237
    %1269 = vmatprep.subr.bf16.mxu0 0
    %1270 = vmatpush2.bf16.msra.mxu0 0
    %1271 = vmatprep.subr.bf16.mxu0 0
    %1272 = vmatpush2.bf16.msra.mxu0 0
    %1273 = vmatprep.subr.bf16.mxu0 0
    %1274 = vmatpush2.bf16.msra.mxu0 0
    %1275 = vmatprep.subr.bf16.mxu0 0
    %1276 = vmatpush2.bf16.msra.mxu0 0
    %1277 = vmatprep.subr.bf16.mxu0 0
    %1278 = vmatpush2.bf16.msra.mxu0 0
    %1279 = vmatprep.subr.bf16.mxu0 0
    %1280 = vmatpush2.bf16.msra.mxu0 0
    %1281 = vmatprep.subr.bf16.mxu0 0
    %1282 = vmatpush2.bf16.msra.mxu0 0
    %1283 = vmatprep.subr.bf16.mxu0 0
    %1284 = vmatpush2.bf16.msra.mxu0 0
    %1285 = vmatprep.mubr.bf16.mxu0 0
    %1286 = vmatmul.mubr.bf16.gmra.mxu0 %v1242
    %v1287 = vpop.f32.mrf.mxu0
    %v1288 = vadd.f32 %v1227, %v1287
    %v1289 = vpop.f32.mrf.mxu0
    %v1290 = vpop.f32.mrf.mxu0
    %v1291 = vadd.f32 %v1227, %v1290
    %v1292 = vpop.f32.mrf.mxu0
    %1293 = vmatprep.mubr.bf16.mxu0 0
    %1294 = vmatmul.mubr.bf16.gmra.mxu0 %v1245
    %v1295 = vpop.f32.mrf.mxu0
    %v1296 = vadd.f32 %v1227, %v1295
    %v1297 = vpop.f32.mrf.mxu0
    %v1298 = vpop.f32.mrf.mxu0
    %v1299 = vadd.f32 %v1227, %v1298
    %v1300 = vpop.f32.mrf.mxu0
    %1301 = vmatprep.mubr.bf16.mxu0 0
    %1302 = vmatmul.mubr.bf16.gmra.mxu0 %v1248
    %v1303 = vpop.f32.mrf.mxu0
    %v1304 = vadd.f32 %v1227, %v1303
    %v1305 = vpop.f32.mrf.mxu0
    %v1306 = vpop.f32.mrf.mxu0
    %v1307 = vadd.f32 %v1227, %v1306
    %v1308 = vpop.f32.mrf.mxu0
    %1309 = vmatprep.mubr.bf16.mxu0 0
    %1310 = vmatmul.mubr.bf16.gmra.mxu0 %v1251
    %v1311 = vpop.f32.mrf.mxu0
    %v1312 = vadd.f32 %v1227, %v1311
    %v1313 = vpop.f32.mrf.mxu0
    %v1314 = vpop.f32.mrf.mxu0
    %v1315 = vadd.f32 %v1227, %v1314
    %v1316 = vpop.f32.mrf.mxu0
    %1317 = vdwg.mxu0
    %v1318 = vmax.f32 %v1288, 0.0
    %v1319 = vmax.f32 %v1291, 0.0
    %v1320 = vmax.f32 %v1296, 0.0
    %v1321 = vmax.f32 %v1299, 0.0
    %v1322 = vmax.f32 %v1304, 0.0
    %v1323 = vmax.f32 %v1307, 0.0
    %v1324 = vmax.f32 %v1312, 0.0
    %v1325 = vmax.f32 %v1315, 0.0
    %s1326 = scalar_lea.vmem [#allocation19], 1
    %v1327 = vld [vmem:[%s1326] sm:$0x1]
    %s1328 = scalar_lea.vmem [#allocation21], 1
    %v1329 = vld [vmem:[%s1328] sm:$0x1]
    %v1330 = vsel %vm398, %v1318, 0.0
    %1331 = vadd.xlane.f32.xlu0 %v1330
    %v1332 = vpop.xlane.xlu0 %1331
    %v1333 = vsel %vm398, %v1319, 0.0
    %1334 = vadd.xlane.f32.xlu0 %v1333
    %v1335 = vpop.xlane.xlu0 %1334
    %v1336 = vsel %vm398, %v1320, 0.0
    %1337 = vadd.xlane.f32.xlu0 %v1336
    %v1338 = vpop.xlane.xlu0 %1337
    %v1339 = vsel %vm398, %v1321, 0.0
    %1340 = vadd.xlane.f32.xlu0 %v1339
    %v1341 = vpop.xlane.xlu0 %1340
    %v1342 = vsel %vm398, %v1322, 0.0
    %1343 = vadd.xlane.f32.xlu0 %v1342
    %v1344 = vpop.xlane.xlu0 %1343
    %v1345 = vsel %vm398, %v1323, 0.0
    %1346 = vadd.xlane.f32.xlu0 %v1345
    %v1347 = vpop.xlane.xlu0 %1346
    %v1348 = vsel %vm398, %v1324, 0.0
    %1349 = vadd.xlane.f32.xlu0 %v1348
    %v1350 = vpop.xlane.xlu0 %1349
    %v1351 = vsel %vm398, %v1325, 0.0
    %1352 = vadd.xlane.f32.xlu0 %v1351
    %v1353 = vpop.xlane.xlu0 %1352
    %v1354 = vmul.f32 %v1332, %v510
    %v1355 = vmul.f32 %v1335, %v510
    %v1356 = vmul.f32 %v1338, %v510
    %v1357 = vmul.f32 %v1341, %v510
    %v1358 = vmul.f32 %v1344, %v510
    %v1359 = vmul.f32 %v1347, %v510
    %v1360 = vmul.f32 %v1350, %v510
    %v1361 = vmul.f32 %v1353, %v510
    %v1362 = vsub.f32 %v1318, %v1354
    %v1363 = vsub.f32 %v1319, %v1355
    %v1364 = vsub.f32 %v1320, %v1356
    %v1365 = vsub.f32 %v1321, %v1357
    %v1366 = vsub.f32 %v1322, %v1358
    %v1367 = vsub.f32 %v1323, %v1359
    %v1368 = vsub.f32 %v1324, %v1360
    %v1369 = vsub.f32 %v1325, %v1361
    %v1370 = vmul.f32 %v1362, %v1362
    %v1371 = vmul.f32 %v1363, %v1363
    %v1372 = vmul.f32 %v1364, %v1364
    %v1373 = vmul.f32 %v1365, %v1365
    %v1374 = vmul.f32 %v1366, %v1366
    %v1375 = vmul.f32 %v1367, %v1367
    %v1376 = vmul.f32 %v1368, %v1368
    %v1377 = vmul.f32 %v1369, %v1369
    %v1378 = vsel %vm398, %v1370, 0.0
    %1379 = vadd.xlane.f32.xlu0 %v1378
    %v1380 = vpop.xlane.xlu0 %1379
    %v1381 = vsel %vm398, %v1371, 0.0
    %1382 = vadd.xlane.f32.xlu0 %v1381
    %v1383 = vpop.xlane.xlu0 %1382
    %v1384 = vsel %vm398, %v1372, 0.0
    %1385 = vadd.xlane.f32.xlu0 %v1384
    %v1386 = vpop.xlane.xlu0 %1385
    %v1387 = vsel %vm398, %v1373, 0.0
    %1388 = vadd.xlane.f32.xlu0 %v1387
    %v1389 = vpop.xlane.xlu0 %1388
    %v1390 = vsel %vm398, %v1374, 0.0
    %1391 = vadd.xlane.f32.xlu0 %v1390
    %v1392 = vpop.xlane.xlu0 %1391
    %v1393 = vsel %vm398, %v1375, 0.0
    %1394 = vadd.xlane.f32.xlu0 %v1393
    %v1395 = vpop.xlane.xlu0 %1394
    %v1396 = vsel %vm398, %v1376, 0.0
    %1397 = vadd.xlane.f32.xlu0 %v1396
    %v1398 = vpop.xlane.xlu0 %1397
    %v1399 = vsel %vm398, %v1377, 0.0
    %1400 = vadd.xlane.f32.xlu0 %v1399
    %v1401 = vpop.xlane.xlu0 %1400
    %v1402 = vmul.f32 %v1380, %v510
    %v1403 = vmul.f32 %v1383, %v510
    %v1404 = vmul.f32 %v1386, %v510
    %v1405 = vmul.f32 %v1389, %v510
    %v1406 = vmul.f32 %v1392, %v510
    %v1407 = vmul.f32 %v1395, %v510
    %v1408 = vmul.f32 %v1398, %v510
    %v1409 = vmul.f32 %v1401, %v510
    %v1410 = vadd.f32 %v1402, 1e-05
    %v1411 = vadd.f32 %v1403, 1e-05
    %v1412 = vadd.f32 %v1404, 1e-05
    %v1413 = vadd.f32 %v1405, 1e-05
    %v1414 = vadd.f32 %v1406, 1e-05
    %v1415 = vadd.f32 %v1407, 1e-05
    %v1416 = vadd.f32 %v1408, 1e-05
    %v1417 = vadd.f32 %v1409, 1e-05
    %v1418 = vrsqrt.pop %v1410
    %v1419 = vrsqrt.pop %v1411
    %v1420 = vrsqrt.pop %v1412
    %v1421 = vrsqrt.pop %v1413
    %v1422 = vrsqrt.pop %v1414
    %v1423 = vrsqrt.pop %v1415
    %v1424 = vrsqrt.pop %v1416
    %v1425 = vrsqrt.pop %v1417
    %v1426 = vmul.f32 %v1362, %v1418
    %v1427 = vmul.f32 %v1363, %v1419
    %v1428 = vmul.f32 %v1364, %v1420
    %v1429 = vmul.f32 %v1365, %v1421
    %v1430 = vmul.f32 %v1366, %v1422
    %v1431 = vmul.f32 %v1367, %v1423
    %v1432 = vmul.f32 %v1368, %v1424
    %v1433 = vmul.f32 %v1369, %v1425
    %v1435 = vlaneseq
    %v1436 = vshrl.u32 %v1435, 7
    %v1437 = vsub.s32 0, %v1436
    %v1438 = vrot.slane %v1327, %v1437
    %v1440 = vmul.f32 %v1426, %v1438
    %v1441 = vmul.f32 %v1427, %v1438
    %v1442 = vmul.f32 %v1428, %v1438
    %v1443 = vmul.f32 %v1429, %v1438
    %v1444 = vmul.f32 %v1430, %v1438
    %v1445 = vmul.f32 %v1431, %v1438
    %v1446 = vmul.f32 %v1432, %v1438
    %v1447 = vmul.f32 %v1433, %v1438
    %v1449 = vlaneseq
    %v1450 = vshrl.u32 %v1449, 7
    %v1451 = vsub.s32 0, %v1450
    %v1452 = vrot.slane %v1329, %v1451
    %v1454 = vadd.f32 %v1440, %v1452
    %v1455 = vadd.f32 %v1441, %v1452
    %v1456 = vadd.f32 %v1442, %v1452
    %v1457 = vadd.f32 %v1443, %v1452
    %v1458 = vadd.f32 %v1444, %v1452
    %v1459 = vadd.f32 %v1445, %v1452
    %v1460 = vadd.f32 %v1446, %v1452
    %v1461 = vadd.f32 %v1447, %v1452
    %v1462 = vld [vmem:[%s13] sm:$0xff]
    %v1463 = vld [vmem:[%s13 + $0x8] sm:$0xf]
    %v1464 = vld [vmem:[%s13 + $0xc] sm:$0xff]
    %v1465 = vld [vmem:[%s13 + $0x14] sm:$0xf]
    %v1466 = vld [vmem:[%s13 + $0x18] sm:$0xff]
    %v1467 = vld [vmem:[%s13 + $0x20] sm:$0xf]
    %v1468 = vld [vmem:[%s13 + $0x24] sm:$0xff]
    %v1469 = vld [vmem:[%s13 + $0x2c] sm:$0xf]
    %v1470 = vpack.c.bf16 %v858, %v857
    %v1471 = vpack.c.bf16 %v860, %v859
    %v1472 = vpack.c.bf16 %v862, %v861
    %v1473 = vpack.c.bf16 %v864, %v863
    %s1474 = scalar_lea.vmem %s13, 48
    %v1475 = vld [vmem:[%s1474] sm:$0xff]
    %v1476 = vld [vmem:[%s1474 + $0x8] sm:$0xf]
    %v1477 = vld [vmem:[%s1474 + $0xc] sm:$0xff]
    %v1478 = vld [vmem:[%s1474 + $0x14] sm:$0xf]
    %v1479 = vld [vmem:[%s1474 + $0x18] sm:$0xff]
    %v1480 = vld [vmem:[%s1474 + $0x20] sm:$0xf]
    %v1481 = vld [vmem:[%s1474 + $0x24] sm:$0xff]
    %v1482 = vld [vmem:[%s1474 + $0x2c] sm:$0xf]
    %v1483 = vpack.c.bf16 %v1455, %v1454
    %v1484 = vpack.c.bf16 %v1457, %v1456
    %v1485 = vpack.c.bf16 %v1459, %v1458
    %v1486 = vpack.c.bf16 %v1461, %v1460
    %v1495 = vunpack.c.l.b16 %v1475
    %v1496 = vunpack.c.h.b16 %v1475
    %v1497 = vunpack.c.l.b16 %v1476
    %v1498 = vunpack.c.l.b16 %v1477
    %v1499 = vunpack.c.h.b16 %v1477
    %v1500 = vunpack.c.l.b16 %v1478
    %v1501 = vunpack.c.l.b16 %v1479
    %v1502 = vunpack.c.h.b16 %v1479
    %v1503 = vunpack.c.l.b16 %v1480
    %v1504 = vunpack.c.l.b16 %v1481
    %v1505 = vunpack.c.h.b16 %v1481
    %v1506 = vunpack.c.l.b16 %v1482
    %v1507 = vpack.c.b16 %v1498, %v1495
    %v1508 = vpack.c.b16 %v1499, %v1496
    %v1509 = vpack.c.b16 %v1500, %v1497
    %v1510 = vpack.c.b16 %v1504, %v1501
    %v1511 = vpack.c.b16 %v1505, %v1502
    %v1512 = vpack.c.b16 %v1506, %v1503
    %v1520 = vsel %vm398, %v1483, 0
    %v1523 = vsel %vm398, %v1484, 0
    %v1526 = vsel %vm398, %v1485, 0
    %v1529 = vsel %vm398, %v1486, 0
    %1531 = vmatprep.subr.bf16.mxu0 0
    %1532 = vmatpush1.bf16.msra.mxu0 0
    %1533 = vmatprep.subr.bf16.mxu0 0
    %1534 = vmatpush1.bf16.msra.mxu0 0
    %1535 = vmatprep.subr.bf16.mxu0 0
    %1536 = vmatpush1.bf16.msra.mxu0 0
    %1537 = vmatprep.subr.bf16.mxu0 0
    %1538 = vmatpush1.bf16.msra.mxu0 0
    %1539 = vmatprep.subr.bf16.mxu0 0
    %1540 = vmatpush1.bf16.msra.mxu0 0
    %1541 = vmatprep.subr.bf16.mxu0 0
    %1542 = vmatpush1.bf16.msra.mxu0 0
    %1543 = vmatprep.subr.bf16.mxu0 %v1511
    %1544 = vmatpush1.bf16.msra.mxu0 %v1510
    %1545 = vmatprep.subr.bf16.mxu0 %v1508
    %1546 = vmatpush1.bf16.msra.mxu0 %v1507
    %1547 = vmatprep.subr.bf16.mxu0 0
    %1548 = vmatpush2.bf16.msra.mxu0 0
    %1549 = vmatprep.subr.bf16.mxu0 0
    %1550 = vmatpush2.bf16.msra.mxu0 0
    %1551 = vmatprep.subr.bf16.mxu0 0
    %1552 = vmatpush2.bf16.msra.mxu0 0
    %1553 = vmatprep.subr.bf16.mxu0 0
    %1554 = vmatpush2.bf16.msra.mxu0 0
    %1555 = vmatprep.subr.bf16.mxu0 0
    %1556 = vmatpush2.bf16.msra.mxu0 0
    %1557 = vmatprep.subr.bf16.mxu0 0
    %1558 = vmatpush2.bf16.msra.mxu0 0
    %1559 = vmatprep.subr.bf16.mxu0 0
    %1560 = vmatpush2.bf16.msra.mxu0 0
    %1561 = vmatprep.subr.bf16.mxu0 0
    %1562 = vmatpush2.bf16.msra.mxu0 0
    %1563 = vmatprep.mubr.bf16.mxu0 0
    %1564 = vmatmul.mubr.bf16.gmra.mxu0 %v1520
    %v1565 = vpop.f32.mrf.mxu0
    %v1566 = vadd.f32 0.0, %v1565
    %v1567 = vpop.f32.mrf.mxu0
    %v1568 = vadd.f32 0.0, %v1567
    %v1569 = vpop.f32.mrf.mxu0
    %v1570 = vadd.f32 0.0, %v1569
    %v1571 = vpop.f32.mrf.mxu0
    %v1572 = vadd.f32 0.0, %v1571
    %1573 = vmatprep.mubr.bf16.mxu0 0
    %1574 = vmatmul.mubr.bf16.gmra.mxu0 %v1523
    %v1575 = vpop.f32.mrf.mxu0
    %v1576 = vadd.f32 0.0, %v1575
    %v1577 = vpop.f32.mrf.mxu0
    %v1578 = vadd.f32 0.0, %v1577
    %v1579 = vpop.f32.mrf.mxu0
    %v1580 = vadd.f32 0.0, %v1579
    %v1581 = vpop.f32.mrf.mxu0
    %v1582 = vadd.f32 0.0, %v1581
    %1583 = vmatprep.mubr.bf16.mxu0 0
    %1584 = vmatmul.mubr.bf16.gmra.mxu0 %v1526
    %v1585 = vpop.f32.mrf.mxu0
    %v1586 = vadd.f32 0.0, %v1585
    %v1587 = vpop.f32.mrf.mxu0
    %v1588 = vadd.f32 0.0, %v1587
    %v1589 = vpop.f32.mrf.mxu0
    %v1590 = vadd.f32 0.0, %v1589
    %v1591 = vpop.f32.mrf.mxu0
    %v1592 = vadd.f32 0.0, %v1591
    %1593 = vmatprep.mubr.bf16.mxu0 0
    %1594 = vmatmul.mubr.bf16.gmra.mxu0 %v1529
    %v1595 = vpop.f32.mrf.mxu0
    %v1596 = vadd.f32 0.0, %v1595
    %v1597 = vpop.f32.mrf.mxu0
    %v1598 = vadd.f32 0.0, %v1597
    %v1599 = vpop.f32.mrf.mxu0
    %v1600 = vadd.f32 0.0, %v1599
    %v1601 = vpop.f32.mrf.mxu0
    %v1602 = vadd.f32 0.0, %v1601
    %1603 = vdwg.mxu0
    %1604 = vmatprep.subr.bf16.mxu0 0
    %1605 = vmatpush1.bf16.msra.mxu0 0
    %1606 = vmatprep.subr.bf16.mxu0 0
    %1607 = vmatpush1.bf16.msra.mxu0 0
    %1608 = vmatprep.subr.bf16.mxu0 0
    %1609 = vmatpush1.bf16.msra.mxu0 0
    %1610 = vmatprep.subr.bf16.mxu0 0
    %1611 = vmatpush1.bf16.msra.mxu0 0
    %1612 = vmatprep.subr.bf16.mxu0 0
    %1613 = vmatpush1.bf16.msra.mxu0 0
    %1614 = vmatprep.subr.bf16.mxu0 0
    %1615 = vmatpush1.bf16.msra.mxu0 0
    %1616 = vmatprep.subr.bf16.mxu0 0
    %1617 = vmatpush1.bf16.msra.mxu0 %v1512
    %1618 = vmatprep.subr.bf16.mxu0 0
    %1619 = vmatpush1.bf16.msra.mxu0 %v1509
    %1620 = vmatprep.subr.bf16.mxu0 0
    %1621 = vmatpush2.bf16.msra.mxu0 0
    %1622 = vmatprep.subr.bf16.mxu0 0
    %1623 = vmatpush2.bf16.msra.mxu0 0
    %1624 = vmatprep.subr.bf16.mxu0 0
    %1625 = vmatpush2.bf16.msra.mxu0 0
    %1626 = vmatprep.subr.bf16.mxu0 0
    %1627 = vmatpush2.bf16.msra.mxu0 0
    %1628 = vmatprep.subr.bf16.mxu0 0
    %1629 = vmatpush2.bf16.msra.mxu0 0
    %1630 = vmatprep.subr.bf16.mxu0 0
    %1631 = vmatpush2.bf16.msra.mxu0 0
    %1632 = vmatprep.subr.bf16.mxu0 0
    %1633 = vmatpush2.bf16.msra.mxu0 0
    %1634 = vmatprep.subr.bf16.mxu0 0
    %1635 = vmatpush2.bf16.msra.mxu0 0
    %1636 = vmatprep.mubr.bf16.mxu0 0
    %1637 = vmatmul.mubr.bf16.gmra.mxu0 %v1520
    %v1638 = vpop.f32.mrf.mxu0
    %v1639 = vadd.f32 0.0, %v1638
    %v1640 = vpop.f32.mrf.mxu0
    %v1641 = vpop.f32.mrf.mxu0
    %v1642 = vadd.f32 0.0, %v1641
    %v1643 = vpop.f32.mrf.mxu0
    %1644 = vmatprep.mubr.bf16.mxu0 0
    %1645 = vmatmul.mubr.bf16.gmra.mxu0 %v1523
    %v1646 = vpop.f32.mrf.mxu0
    %v1647 = vadd.f32 0.0, %v1646
    %v1648 = vpop.f32.mrf.mxu0
    %v1649 = vpop.f32.mrf.mxu0
    %v1650 = vadd.f32 0.0, %v1649
    %v1651 = vpop.f32.mrf.mxu0
    %1652 = vmatprep.mubr.bf16.mxu0 0
    %1653 = vmatmul.mubr.bf16.gmra.mxu0 %v1526
    %v1654 = vpop.f32.mrf.mxu0
    %v1655 = vadd.f32 0.0, %v1654
    %v1656 = vpop.f32.mrf.mxu0
    %v1657 = vpop.f32.mrf.mxu0
    %v1658 = vadd.f32 0.0, %v1657
    %v1659 = vpop.f32.mrf.mxu0
    %1660 = vmatprep.mubr.bf16.mxu0 0
    %1661 = vmatmul.mubr.bf16.gmra.mxu0 %v1529
    %v1662 = vpop.f32.mrf.mxu0
    %v1663 = vadd.f32 0.0, %v1662
    %v1664 = vpop.f32.mrf.mxu0
    %v1665 = vpop.f32.mrf.mxu0
    %v1666 = vadd.f32 0.0, %v1665
    %v1667 = vpop.f32.mrf.mxu0
    %1668 = vdwg.mxu0
    %v1677 = vunpack.c.l.b16 %v1462
    %v1678 = vunpack.c.h.b16 %v1462
    %v1679 = vunpack.c.l.b16 %v1463
    %v1680 = vunpack.c.l.b16 %v1464
    %v1681 = vunpack.c.h.b16 %v1464
    %v1682 = vunpack.c.l.b16 %v1465
    %v1683 = vunpack.c.l.b16 %v1466
    %v1684 = vunpack.c.h.b16 %v1466
    %v1685 = vunpack.c.l.b16 %v1467
    %v1686 = vunpack.c.l.b16 %v1468
    %v1687 = vunpack.c.h.b16 %v1468
    %v1688 = vunpack.c.l.b16 %v1469
    %v1689 = vpack.c.b16 %v1680, %v1677
    %v1690 = vpack.c.b16 %v1681, %v1678
    %v1691 = vpack.c.b16 %v1682, %v1679
    %v1692 = vpack.c.b16 %v1686, %v1683
    %v1693 = vpack.c.b16 %v1687, %v1684
    %v1694 = vpack.c.b16 %v1688, %v1685
    %v1702 = vsel %vm398, %v1470, 0
    %v1705 = vsel %vm398, %v1471, 0
    %v1708 = vsel %vm398, %v1472, 0
    %v1711 = vsel %vm398, %v1473, 0
    %1713 = vmatprep.subr.bf16.mxu0 0
    %1714 = vmatpush1.bf16.msra.mxu0 0
    %1715 = vmatprep.subr.bf16.mxu0 0
    %1716 = vmatpush1.bf16.msra.mxu0 0
    %1717 = vmatprep.subr.bf16.mxu0 0
    %1718 = vmatpush1.bf16.msra.mxu0 0
    %1719 = vmatprep.subr.bf16.mxu0 0
    %1720 = vmatpush1.bf16.msra.mxu0 0
    %1721 = vmatprep.subr.bf16.mxu0 0
    %1722 = vmatpush1.bf16.msra.mxu0 0
    %1723 = vmatprep.subr.bf16.mxu0 0
    %1724 = vmatpush1.bf16.msra.mxu0 0
    %1725 = vmatprep.subr.bf16.mxu0 %v1693
    %1726 = vmatpush1.bf16.msra.mxu0 %v1692
    %1727 = vmatprep.subr.bf16.mxu0 %v1690
    %1728 = vmatpush1.bf16.msra.mxu0 %v1689
    %1729 = vmatprep.subr.bf16.mxu0 0
    %1730 = vmatpush2.bf16.msra.mxu0 0
    %1731 = vmatprep.subr.bf16.mxu0 0
    %1732 = vmatpush2.bf16.msra.mxu0 0
    %1733 = vmatprep.subr.bf16.mxu0 0
    %1734 = vmatpush2.bf16.msra.mxu0 0
    %1735 = vmatprep.subr.bf16.mxu0 0
    %1736 = vmatpush2.bf16.msra.mxu0 0
    %1737 = vmatprep.subr.bf16.mxu0 0
    %1738 = vmatpush2.bf16.msra.mxu0 0
    %1739 = vmatprep.subr.bf16.mxu0 0
    %1740 = vmatpush2.bf16.msra.mxu0 0
    %1741 = vmatprep.subr.bf16.mxu0 0
    %1742 = vmatpush2.bf16.msra.mxu0 0
    %1743 = vmatprep.subr.bf16.mxu0 0
    %1744 = vmatpush2.bf16.msra.mxu0 0
    %1745 = vmatprep.mubr.bf16.mxu0 0
    %1746 = vmatmul.mubr.bf16.gmra.mxu0 %v1702
    %v1747 = vpop.f32.mrf.mxu0
    %v1748 = vadd.f32 %v1566, %v1747
    %v1749 = vpop.f32.mrf.mxu0
    %v1750 = vadd.f32 %v1568, %v1749
    %v1751 = vpop.f32.mrf.mxu0
    %v1752 = vadd.f32 %v1570, %v1751
    %v1753 = vpop.f32.mrf.mxu0
    %v1754 = vadd.f32 %v1572, %v1753
    %1755 = vmatprep.mubr.bf16.mxu0 0
    %1756 = vmatmul.mubr.bf16.gmra.mxu0 %v1705
    %v1757 = vpop.f32.mrf.mxu0
    %v1758 = vadd.f32 %v1576, %v1757
    %v1759 = vpop.f32.mrf.mxu0
    %v1760 = vadd.f32 %v1578, %v1759
    %v1761 = vpop.f32.mrf.mxu0
    %v1762 = vadd.f32 %v1580, %v1761
    %v1763 = vpop.f32.mrf.mxu0
    %v1764 = vadd.f32 %v1582, %v1763
    %1765 = vmatprep.mubr.bf16.mxu0 0
    %1766 = vmatmul.mubr.bf16.gmra.mxu0 %v1708
    %v1767 = vpop.f32.mrf.mxu0
    %v1768 = vadd.f32 %v1586, %v1767
    %v1769 = vpop.f32.mrf.mxu0
    %v1770 = vadd.f32 %v1588, %v1769
    %v1771 = vpop.f32.mrf.mxu0
    %v1772 = vadd.f32 %v1590, %v1771
    %v1773 = vpop.f32.mrf.mxu0
    %v1774 = vadd.f32 %v1592, %v1773
    %1775 = vmatprep.mubr.bf16.mxu0 0
    %1776 = vmatmul.mubr.bf16.gmra.mxu0 %v1711
    %v1777 = vpop.f32.mrf.mxu0
    %v1778 = vadd.f32 %v1596, %v1777
    %v1779 = vpop.f32.mrf.mxu0
    %v1780 = vadd.f32 %v1598, %v1779
    %v1781 = vpop.f32.mrf.mxu0
    %v1782 = vadd.f32 %v1600, %v1781
    %v1783 = vpop.f32.mrf.mxu0
    %v1784 = vadd.f32 %v1602, %v1783
    %1785 = vdwg.mxu0
    %1786 = vmatprep.subr.bf16.mxu0 0
    %1787 = vmatpush1.bf16.msra.mxu0 0
    %1788 = vmatprep.subr.bf16.mxu0 0
    %1789 = vmatpush1.bf16.msra.mxu0 0
    %1790 = vmatprep.subr.bf16.mxu0 0
    %1791 = vmatpush1.bf16.msra.mxu0 0
    %1792 = vmatprep.subr.bf16.mxu0 0
    %1793 = vmatpush1.bf16.msra.mxu0 0
    %1794 = vmatprep.subr.bf16.mxu0 0
    %1795 = vmatpush1.bf16.msra.mxu0 0
    %1796 = vmatprep.subr.bf16.mxu0 0
    %1797 = vmatpush1.bf16.msra.mxu0 0
    %1798 = vmatprep.subr.bf16.mxu0 0
    %1799 = vmatpush1.bf16.msra.mxu0 %v1694
    %1800 = vmatprep.subr.bf16.mxu0 0
    %1801 = vmatpush1.bf16.msra.mxu0 %v1691
    %1802 = vmatprep.subr.bf16.mxu0 0
    %1803 = vmatpush2.bf16.msra.mxu0 0
    %1804 = vmatprep.subr.bf16.mxu0 0
    %1805 = vmatpush2.bf16.msra.mxu0 0
    %1806 = vmatprep.subr.bf16.mxu0 0
    %1807 = vmatpush2.bf16.msra.mxu0 0
    %1808 = vmatprep.subr.bf16.mxu0 0
    %1809 = vmatpush2.bf16.msra.mxu0 0
    %1810 = vmatprep.subr.bf16.mxu0 0
    %1811 = vmatpush2.bf16.msra.mxu0 0
    %1812 = vmatprep.subr.bf16.mxu0 0
    %1813 = vmatpush2.bf16.msra.mxu0 0
    %1814 = vmatprep.subr.bf16.mxu0 0
    %1815 = vmatpush2.bf16.msra.mxu0 0
    %1816 = vmatprep.subr.bf16.mxu0 0
    %1817 = vmatpush2.bf16.msra.mxu0 0
    %1818 = vmatprep.mubr.bf16.mxu0 0
    %1819 = vmatmul.mubr.bf16.gmra.mxu0 %v1702
    %v1820 = vpop.f32.mrf.mxu0
    %v1821 = vadd.f32 %v1639, %v1820
    %v1822 = vpop.f32.mrf.mxu0
    %v1823 = vpop.f32.mrf.mxu0
    %v1824 = vadd.f32 %v1642, %v1823
    %v1825 = vpop.f32.mrf.mxu0
    %1826 = vmatprep.mubr.bf16.mxu0 0
    %1827 = vmatmul.mubr.bf16.gmra.mxu0 %v1705
    %v1828 = vpop.f32.mrf.mxu0
    %v1829 = vadd.f32 %v1647, %v1828
    %v1830 = vpop.f32.mrf.mxu0
    %v1831 = vpop.f32.mrf.mxu0
    %v1832 = vadd.f32 %v1650, %v1831
    %v1833 = vpop.f32.mrf.mxu0
    %1834 = vmatprep.mubr.bf16.mxu0 0
    %1835 = vmatmul.mubr.bf16.gmra.mxu0 %v1708
    %v1836 = vpop.f32.mrf.mxu0
    %v1837 = vadd.f32 %v1655, %v1836
    %v1838 = vpop.f32.mrf.mxu0
    %v1839 = vpop.f32.mrf.mxu0
    %v1840 = vadd.f32 %v1658, %v1839
    %v1841 = vpop.f32.mrf.mxu0
    %1842 = vmatprep.mubr.bf16.mxu0 0
    %1843 = vmatmul.mubr.bf16.gmra.mxu0 %v1711
    %v1844 = vpop.f32.mrf.mxu0
    %v1845 = vadd.f32 %v1663, %v1844
    %v1846 = vpop.f32.mrf.mxu0
    %v1847 = vpop.f32.mrf.mxu0
    %v1848 = vadd.f32 %v1666, %v1847
    %v1849 = vpop.f32.mrf.mxu0
    %1850 = vdwg.mxu0
    %v1851 = vld [vmem:[%s15] sm:$0x7]
    %v1853 = vlaneseq
    %v1854 = vshrl.u32 %v1853, 7
    %v1855 = vsub.s32 0, %v1854
    %v1856 = vrot.slane %v1851, %v1855
    %v1857 = vlaneseq
    %v1858 = vshrl.u32 %v1857, 7
    %v1859 = vsub.s32 1, %v1858
    %v1860 = vrot.slane %v1851, %v1859
    %v1861 = vlaneseq
    %v1862 = vshrl.u32 %v1861, 7
    %v1863 = vsub.s32 2, %v1862
    %v1864 = vrot.slane %v1851, %v1863
    %v1868 = vadd.f32 %v1748, %v1856
    %v1869 = vadd.f32 %v1750, %v1860
    %v1870 = vadd.f32 %v1821, %v1864
    %v1871 = vadd.f32 %v1752, %v1856
    %v1872 = vadd.f32 %v1754, %v1860
    %v1873 = vadd.f32 %v1824, %v1864
    %v1874 = vadd.f32 %v1758, %v1856
    %v1875 = vadd.f32 %v1760, %v1860
    %v1876 = vadd.f32 %v1829, %v1864
    %v1877 = vadd.f32 %v1762, %v1856
    %v1878 = vadd.f32 %v1764, %v1860
    %v1879 = vadd.f32 %v1832, %v1864
    %v1880 = vadd.f32 %v1768, %v1856
    %v1881 = vadd.f32 %v1770, %v1860
    %v1882 = vadd.f32 %v1837, %v1864
    %v1883 = vadd.f32 %v1772, %v1856
    %v1884 = vadd.f32 %v1774, %v1860
    %v1885 = vadd.f32 %v1840, %v1864
    %v1886 = vadd.f32 %v1778, %v1856
    %v1887 = vadd.f32 %v1780, %v1860
    %v1888 = vadd.f32 %v1845, %v1864
    %v1889 = vadd.f32 %v1782, %v1856
    %v1890 = vadd.f32 %v1784, %v1860
    %v1891 = vadd.f32 %v1848, %v1864
    %1892 = vst [vmem:[#allocation2] sm:$0xff] %v1868
    %1893 = vst [vmem:[#allocation2 + $0x8] sm:$0xff] %v1869
    %1894 = vst [vmem:[#allocation2 + $0x10] sm:$0xff] %v1870
    %1895 = vst [vmem:[#allocation2 + $0x18] sm:$0xff] %v1871
    %1896 = vst [vmem:[#allocation2 + $0x20] sm:$0xff] %v1872
    %1897 = vst [vmem:[#allocation2 + $0x28] sm:$0xff] %v1873
    %1898 = vst [vmem:[#allocation2 + $0x30] sm:$0xff] %v1874
    %1899 = vst [vmem:[#allocation2 + $0x38] sm:$0xff] %v1875
    %1900 = vst [vmem:[#allocation2 + $0x40] sm:$0xff] %v1876
    %1901 = vst [vmem:[#allocation2 + $0x48] sm:$0xff] %v1877
    %1902 = vst [vmem:[#allocation2 + $0x50] sm:$0xff] %v1878
    %1903 = vst [vmem:[#allocation2 + $0x58] sm:$0xff] %v1879
    %1904 = vst [vmem:[#allocation2 + $0x60] sm:$0xff] %v1880
    %1905 = vst [vmem:[#allocation2 + $0x68] sm:$0xff] %v1881
    %1906 = vst [vmem:[#allocation2 + $0x70] sm:$0xff] %v1882
    %1907 = vst [vmem:[#allocation2 + $0x78] sm:$0xff] %v1883
    %1908 = vst [vmem:[#allocation2 + $0x80] sm:$0xff] %v1884
    %1909 = vst [vmem:[#allocation2 + $0x88] sm:$0xff] %v1885
    %1910 = vst [vmem:[#allocation2 + $0x90] sm:$0xff] %v1886
    %1911 = vst [vmem:[#allocation2 + $0x98] sm:$0xff] %v1887
    %1912 = vst [vmem:[#allocation2 + $0xa0] sm:$0xff] %v1888
    %1913 = vst [vmem:[#allocation2 + $0xa8] sm:$0xff] %v1889
    %1914 = vst [vmem:[#allocation2 + $0xb0] sm:$0xff] %v1890
    %1915 = vst [vmem:[#allocation2 + $0xb8] sm:$0xff] %v1891
    %v1916 = vld [vmem:[%s16] sm:$0xff]
    %v1917 = vld [vmem:[%s2] sm:$0xff]
    %v1918 = vld [vmem:[#allocation4] sm:$0xff]
    %v1919 = vmul.f32 %v1917, %v1918
    %v1920 = vld [vmem:[#allocation2] sm:$0xff]
    %v1921 = vld [vmem:[#allocation2 + $0x8] sm:$0xff]
    %v1922 = vld [vmem:[#allocation2 + $0x10] sm:$0xff]
    %v1923 = vld [vmem:[#allocation22] sm:$0xff]
    %v1924 = vld [vmem:[#allocation22 + $0x8] sm:$0xf]
    %v1925 = vld [vmem:[#allocation22 + $0xc] sm:$0xff]
    %v1926 = vld [vmem:[#allocation22 + $0x14] sm:$0xf]
    %v1927 = vld [vmem:[#allocation22 + $0x18] sm:$0xff]
    %v1928 = vld [vmem:[#allocation22 + $0x20] sm:$0xf]
    %v1929 = vld [vmem:[#allocation22 + $0x24] sm:$0xff]
    %v1930 = vld [vmem:[#allocation22 + $0x2c] sm:$0xf]
    %v1931 = vld [vmem:[#allocation22 + $0x30] sm:$0xff]
    %v1932 = vld [vmem:[#allocation22 + $0x38] sm:$0xf]
    %v1933 = vld [vmem:[#allocation22 + $0x3c] sm:$0xff]
    %v1934 = vld [vmem:[#allocation22 + $0x44] sm:$0xf]
    %v1935 = vld [vmem:[#allocation22 + $0x48] sm:$0xff]
    %v1936 = vld [vmem:[#allocation22 + $0x50] sm:$0xf]
    %v1937 = vld [vmem:[#allocation22 + $0x54] sm:$0xff]
    %v1938 = vld [vmem:[#allocation22 + $0x5c] sm:$0xf]
    %v1939 = vld [vmem:[#allocation22 + $0x60] sm:$0xff]
    %v1940 = vld [vmem:[#allocation22 + $0x68] sm:$0xf]
    %v1941 = vld [vmem:[#allocation22 + $0x6c] sm:$0xff]
    %v1942 = vld [vmem:[#allocation22 + $0x74] sm:$0xf]
    %v1943 = vld [vmem:[#allocation22 + $0x78] sm:$0xff]
    %v1944 = vld [vmem:[#allocation22 + $0x80] sm:$0xf]
    %v1945 = vld [vmem:[#allocation22 + $0x84] sm:$0xff]
    %v1946 = vld [vmem:[#allocation22 + $0x8c] sm:$0xf]
    %v1947 = vld [vmem:[#allocation22 + $0x90] sm:$0xff]
    %v1948 = vld [vmem:[#allocation22 + $0x98] sm:$0xf]
    %v1949 = vld [vmem:[#allocation22 + $0x9c] sm:$0xff]
    %v1950 = vld [vmem:[#allocation22 + $0xa4] sm:$0xf]
    %v1951 = vld [vmem:[#allocation22 + $0xa8] sm:$0xff]
    %v1952 = vld [vmem:[#allocation22 + $0xb0] sm:$0xf]
    %v1953 = vld [vmem:[#allocation22 + $0xb4] sm:$0xff]
    %v1954 = vld [vmem:[#allocation22 + $0xbc] sm:$0xf]
    %v1955 = vpack.c.bf16 %v1919, %v1919
    %v1988 = vunpack.c.l.b16 %v1923
    %v1989 = vunpack.c.h.b16 %v1923
    %v1990 = vunpack.c.l.b16 %v1924
    %v1991 = vunpack.c.l.b16 %v1925
    %v1992 = vunpack.c.h.b16 %v1925
    %v1993 = vunpack.c.l.b16 %v1926
    %v1994 = vunpack.c.l.b16 %v1927
    %v1995 = vunpack.c.h.b16 %v1927
    %v1996 = vunpack.c.l.b16 %v1928
    %v1997 = vunpack.c.l.b16 %v1929
    %v1998 = vunpack.c.h.b16 %v1929
    %v1999 = vunpack.c.l.b16 %v1930
    %v2000 = vunpack.c.l.b16 %v1931
    %v2001 = vunpack.c.h.b16 %v1931
    %v2002 = vunpack.c.l.b16 %v1932
    %v2003 = vunpack.c.l.b16 %v1933
    %v2004 = vunpack.c.h.b16 %v1933
    %v2005 = vunpack.c.l.b16 %v1934
    %v2006 = vunpack.c.l.b16 %v1935
    %v2007 = vunpack.c.h.b16 %v1935
    %v2008 = vunpack.c.l.b16 %v1936
    %v2009 = vunpack.c.l.b16 %v1937
    %v2010 = vunpack.c.h.b16 %v1937
    %v2011 = vunpack.c.l.b16 %v1938
    %v2012 = vunpack.c.l.b16 %v1939
    %v2013 = vunpack.c.h.b16 %v1939
    %v2014 = vunpack.c.l.b16 %v1940
    %v2015 = vunpack.c.l.b16 %v1941
    %v2016 = vunpack.c.h.b16 %v1941
    %v2017 = vunpack.c.l.b16 %v1942
    %v2018 = vunpack.c.l.b16 %v1943
    %v2019 = vunpack.c.h.b16 %v1943
    %v2020 = vunpack.c.l.b16 %v1944
    %v2021 = vunpack.c.l.b16 %v1945
    %v2022 = vunpack.c.h.b16 %v1945
    %v2023 = vunpack.c.l.b16 %v1946
    %v2024 = vunpack.c.l.b16 %v1947
    %v2025 = vunpack.c.h.b16 %v1947
    %v2026 = vunpack.c.l.b16 %v1948
    %v2027 = vunpack.c.l.b16 %v1949
    %v2028 = vunpack.c.h.b16 %v1949
    %v2029 = vunpack.c.l.b16 %v1950
    %v2030 = vunpack.c.l.b16 %v1951
    %v2031 = vunpack.c.h.b16 %v1951
    %v2032 = vunpack.c.l.b16 %v1952
    %v2033 = vunpack.c.l.b16 %v1953
    %v2034 = vunpack.c.h.b16 %v1953
    %v2035 = vunpack.c.l.b16 %v1954
    %v2036 = vpack.c.b16 %v1991, %v1988
    %v2037 = vpack.c.b16 %v1992, %v1989
    %v2038 = vpack.c.b16 %v1993, %v1990
    %v2039 = vpack.c.b16 %v1997, %v1994
    %v2040 = vpack.c.b16 %v1998, %v1995
    %v2041 = vpack.c.b16 %v1999, %v1996
    %v2042 = vpack.c.b16 %v2003, %v2000
    %v2043 = vpack.c.b16 %v2004, %v2001
    %v2044 = vpack.c.b16 %v2005, %v2002
    %v2045 = vpack.c.b16 %v2009, %v2006
    %v2046 = vpack.c.b16 %v2010, %v2007
    %v2047 = vpack.c.b16 %v2011, %v2008
    %v2048 = vpack.c.b16 %v2015, %v2012
    %v2049 = vpack.c.b16 %v2016, %v2013
    %v2050 = vpack.c.b16 %v2017, %v2014
    %v2051 = vpack.c.b16 %v2021, %v2018
    %v2052 = vpack.c.b16 %v2022, %v2019
    %v2053 = vpack.c.b16 %v2023, %v2020
    %v2054 = vpack.c.b16 %v2027, %v2024
    %v2055 = vpack.c.b16 %v2028, %v2025
    %v2056 = vpack.c.b16 %v2029, %v2026
    %v2057 = vpack.c.b16 %v2033, %v2030
    %v2058 = vpack.c.b16 %v2034, %v2031
    %v2059 = vpack.c.b16 %v2035, %v2032
    %2084 = vmatprep.subr.bf16.mxu0 %v2058
    %2085 = vmatpush1.bf16.msra.mxu0 %v2057
    %2086 = vmatprep.subr.bf16.mxu0 %v2055
    %2087 = vmatpush1.bf16.msra.mxu0 %v2054
    %2088 = vmatprep.subr.bf16.mxu0 %v2052
    %2089 = vmatpush1.bf16.msra.mxu0 %v2051
    %2090 = vmatprep.subr.bf16.mxu0 %v2049
    %2091 = vmatpush1.bf16.msra.mxu0 %v2048
    %2092 = vmatprep.subr.bf16.mxu0 %v2046
    %2093 = vmatpush1.bf16.msra.mxu0 %v2045
    %2094 = vmatprep.subr.bf16.mxu0 %v2043
    %2095 = vmatpush1.bf16.msra.mxu0 %v2042
    %2096 = vmatprep.subr.bf16.mxu0 %v2040
    %2097 = vmatpush1.bf16.msra.mxu0 %v2039
    %2098 = vmatprep.subr.bf16.mxu0 %v2037
    %2099 = vmatpush1.bf16.msra.mxu0 %v2036
    %2100 = vmatprep.subr.bf16.mxu0 0
    %2101 = vmatpush2.bf16.msra.mxu0 0
    %2102 = vmatprep.subr.bf16.mxu0 0
    %2103 = vmatpush2.bf16.msra.mxu0 0
    %2104 = vmatprep.subr.bf16.mxu0 0
    %2105 = vmatpush2.bf16.msra.mxu0 0
    %2106 = vmatprep.subr.bf16.mxu0 0
    %2107 = vmatpush2.bf16.msra.mxu0 0
    %2108 = vmatprep.subr.bf16.mxu0 0
    %2109 = vmatpush2.bf16.msra.mxu0 0
    %2110 = vmatprep.subr.bf16.mxu0 0
    %2111 = vmatpush2.bf16.msra.mxu0 0
    %2112 = vmatprep.subr.bf16.mxu0 0
    %2113 = vmatpush2.bf16.msra.mxu0 0
    %2114 = vmatprep.subr.bf16.mxu0 0
    %2115 = vmatpush2.bf16.msra.mxu0 0
    %2116 = vmatprep.mubr.bf16.mxu0 0
    %2117 = vmatmul.mubr.bf16.gmra.mxu0 %v1955
    %v2118 = vpop.f32.mrf.mxu0
    %v2119 = vadd.f32 0.0, %v2118
    %v2120 = vpop.f32.mrf.mxu0
    %v2121 = vadd.f32 0.0, %v2120
    %v2122 = vpop.f32.mrf.mxu0
    %v2123 = vpop.f32.mrf.mxu0
    %2124 = vdwg.mxu0
    %2125 = vmatprep.subr.bf16.mxu0 0
    %2126 = vmatpush1.bf16.msra.mxu0 %v2059
    %2127 = vmatprep.subr.bf16.mxu0 0
    %2128 = vmatpush1.bf16.msra.mxu0 %v2056
    %2129 = vmatprep.subr.bf16.mxu0 0
    %2130 = vmatpush1.bf16.msra.mxu0 %v2053
    %2131 = vmatprep.subr.bf16.mxu0 0
    %2132 = vmatpush1.bf16.msra.mxu0 %v2050
    %2133 = vmatprep.subr.bf16.mxu0 0
    %2134 = vmatpush1.bf16.msra.mxu0 %v2047
    %2135 = vmatprep.subr.bf16.mxu0 0
    %2136 = vmatpush1.bf16.msra.mxu0 %v2044
    %2137 = vmatprep.subr.bf16.mxu0 0
    %2138 = vmatpush1.bf16.msra.mxu0 %v2041
    %2139 = vmatprep.subr.bf16.mxu0 0
    %2140 = vmatpush1.bf16.msra.mxu0 %v2038
    %2141 = vmatprep.subr.bf16.mxu0 0
    %2142 = vmatpush2.bf16.msra.mxu0 0
    %2143 = vmatprep.subr.bf16.mxu0 0
    %2144 = vmatpush2.bf16.msra.mxu0 0
    %2145 = vmatprep.subr.bf16.mxu0 0
    %2146 = vmatpush2.bf16.msra.mxu0 0
    %2147 = vmatprep.subr.bf16.mxu0 0
    %2148 = vmatpush2.bf16.msra.mxu0 0
    %2149 = vmatprep.subr.bf16.mxu0 0
    %2150 = vmatpush2.bf16.msra.mxu0 0
    %2151 = vmatprep.subr.bf16.mxu0 0
    %2152 = vmatpush2.bf16.msra.mxu0 0
    %2153 = vmatprep.subr.bf16.mxu0 0
    %2154 = vmatpush2.bf16.msra.mxu0 0
    %2155 = vmatprep.subr.bf16.mxu0 0
    %2156 = vmatpush2.bf16.msra.mxu0 0
    %2157 = vmatprep.mubr.bf16.mxu0 0
    %2158 = vmatmul.mubr.bf16.gmra.mxu0 %v1955
    %v2159 = vpop.f32.mrf.mxu0
    %v2160 = vadd.f32 0.0, %v2159
    %v2161 = vpop.f32.mrf.mxu0
    %v2162 = vpop.f32.mrf.mxu0
    %v2163 = vpop.f32.mrf.mxu0
    %2164 = vdwg.mxu0
    %v2165 = vadd.f32 %v1920, %v2119
    %v2166 = vmul.f32 %v2165, 0.5
    %v2167 = vtanh.pop %v2166
    %v2168 = vadd.f32 %v2167, 1.0
    %v2169 = vmul.f32 %v2168, 0.5
    %v2170 = vadd.f32 %v1921, %v2121
    %v2171 = vmul.f32 %v2170, 0.5
    %v2172 = vtanh.pop %v2171
    %v2173 = vadd.f32 %v2172, 1.0
    %v2174 = vmul.f32 %v2173, 0.5
    %v2175 = vadd.f32 %v2160, %v1916
    %v2176 = vmul.f32 %v2169, %v2175
    %v2177 = vadd.f32 %v1922, %v2176
    %v2178 = vtanh.pop %v2177
    %v2179 = vsub.f32 1.0, %v2174
    %v2180 = vmul.f32 %v2179, %v2178
    %v2181 = vmul.f32 %v2174, %v1919
    %v2182 = vadd.f32 %v2180, %v2181
    %2183 = vst [vmem:[#allocation3] sm:$0xff] %v2182
    %v2184 = vld [vmem:[#allocation4 + $0x8] sm:$0xff]
    %v2185 = vmul.f32 %v2182, %v2184
    %v2186 = vld [vmem:[#allocation2 + $0x18] sm:$0xff]
    %v2187 = vld [vmem:[#allocation2 + $0x20] sm:$0xff]
    %v2188 = vld [vmem:[#allocation2 + $0x28] sm:$0xff]
    %v2189 = vld [vmem:[#allocation22] sm:$0xff]
    %v2190 = vld [vmem:[#allocation22 + $0x8] sm:$0xf]
    %v2191 = vld [vmem:[#allocation22 + $0xc] sm:$0xff]
    %v2192 = vld [vmem:[#allocation22 + $0x14] sm:$0xf]
    %v2193 = vld [vmem:[#allocation22 + $0x18] sm:$0xff]
    %v2194 = vld [vmem:[#allocation22 + $0x20] sm:$0xf]
    %v2195 = vld [vmem:[#allocation22 + $0x24] sm:$0xff]
    %v2196 = vld [vmem:[#allocation22 + $0x2c] sm:$0xf]
    %v2197 = vld [vmem:[#allocation22 + $0x30] sm:$0xff]
    %v2198 = vld [vmem:[#allocation22 + $0x38] sm:$0xf]
    %v2199 = vld [vmem:[#allocation22 + $0x3c] sm:$0xff]
    %v2200 = vld [vmem:[#allocation22 + $0x44] sm:$0xf]
    %v2201 = vld [vmem:[#allocation22 + $0x48] sm:$0xff]
    %v2202 = vld [vmem:[#allocation22 + $0x50] sm:$0xf]
    %v2203 = vld [vmem:[#allocation22 + $0x54] sm:$0xff]
    %v2204 = vld [vmem:[#allocation22 + $0x5c] sm:$0xf]
    %v2205 = vld [vmem:[#allocation22 + $0x60] sm:$0xff]
    %v2206 = vld [vmem:[#allocation22 + $0x68] sm:$0xf]
    %v2207 = vld [vmem:[#allocation22 + $0x6c] sm:$0xff]
    %v2208 = vld [vmem:[#allocation22 + $0x74] sm:$0xf]
    %v2209 = vld [vmem:[#allocation22 + $0x78] sm:$0xff]
    %v2210 = vld [vmem:[#allocation22 + $0x80] sm:$0xf]
    %v2211 = vld [vmem:[#allocation22 + $0x84] sm:$0xff]
    %v2212 = vld [vmem:[#allocation22 + $0x8c] sm:$0xf]
    %v2213 = vld [vmem:[#allocation22 + $0x90] sm:$0xff]
    %v2214 = vld [vmem:[#allocation22 + $0x98] sm:$0xf]
    %v2215 = vld [vmem:[#allocation22 + $0x9c] sm:$0xff]
    %v2216 = vld [vmem:[#allocation22 + $0xa4] sm:$0xf]
    %v2217 = vld [vmem:[#allocation22 + $0xa8] sm:$0xff]
    %v2218 = vld [vmem:[#allocation22 + $0xb0] sm:$0xf]
    %v2219 = vld [vmem:[#allocation22 + $0xb4] sm:$0xff]
    %v2220 = vld [vmem:[#allocation22 + $0xbc] sm:$0xf]
    %v2221 = vpack.c.bf16 %v2185, %v2185
    %v2254 = vunpack.c.l.b16 %v2189
    %v2255 = vunpack.c.h.b16 %v2189
    %v2256 = vunpack.c.l.b16 %v2190
    %v2257 = vunpack.c.l.b16 %v2191
    %v2258 = vunpack.c.h.b16 %v2191
    %v2259 = vunpack.c.l.b16 %v2192
    %v2260 = vunpack.c.l.b16 %v2193
    %v2261 = vunpack.c.h.b16 %v2193
    %v2262 = vunpack.c.l.b16 %v2194
    %v2263 = vunpack.c.l.b16 %v2195
    %v2264 = vunpack.c.h.b16 %v2195
    %v2265 = vunpack.c.l.b16 %v2196
    %v2266 = vunpack.c.l.b16 %v2197
    %v2267 = vunpack.c.h.b16 %v2197
    %v2268 = vunpack.c.l.b16 %v2198
    %v2269 = vunpack.c.l.b16 %v2199
    %v2270 = vunpack.c.h.b16 %v2199
    %v2271 = vunpack.c.l.b16 %v2200
    %v2272 = vunpack.c.l.b16 %v2201
    %v2273 = vunpack.c.h.b16 %v2201
    %v2274 = vunpack.c.l.b16 %v2202
    %v2275 = vunpack.c.l.b16 %v2203
    %v2276 = vunpack.c.h.b16 %v2203
    %v2277 = vunpack.c.l.b16 %v2204
    %v2278 = vunpack.c.l.b16 %v2205
    %v2279 = vunpack.c.h.b16 %v2205
    %v2280 = vunpack.c.l.b16 %v2206
    %v2281 = vunpack.c.l.b16 %v2207
    %v2282 = vunpack.c.h.b16 %v2207
    %v2283 = vunpack.c.l.b16 %v2208
    %v2284 = vunpack.c.l.b16 %v2209
    %v2285 = vunpack.c.h.b16 %v2209
    %v2286 = vunpack.c.l.b16 %v2210
    %v2287 = vunpack.c.l.b16 %v2211
    %v2288 = vunpack.c.h.b16 %v2211
    %v2289 = vunpack.c.l.b16 %v2212
    %v2290 = vunpack.c.l.b16 %v2213
    %v2291 = vunpack.c.h.b16 %v2213
    %v2292 = vunpack.c.l.b16 %v2214
    %v2293 = vunpack.c.l.b16 %v2215
    %v2294 = vunpack.c.h.b16 %v2215
    %v2295 = vunpack.c.l.b16 %v2216
    %v2296 = vunpack.c.l.b16 %v2217
    %v2297 = vunpack.c.h.b16 %v2217
    %v2298 = vunpack.c.l.b16 %v2218
    %v2299 = vunpack.c.l.b16 %v2219
    %v2300 = vunpack.c.h.b16 %v2219
    %v2301 = vunpack.c.l.b16 %v2220
    %v2302 = vpack.c.b16 %v2257, %v2254
    %v2303 = vpack.c.b16 %v2258, %v2255
    %v2304 = vpack.c.b16 %v2259, %v2256
    %v2305 = vpack.c.b16 %v2263, %v2260
    %v2306 = vpack.c.b16 %v2264, %v2261
    %v2307 = vpack.c.b16 %v2265, %v2262
    %v2308 = vpack.c.b16 %v2269, %v2266
    %v2309 = vpack.c.b16 %v2270, %v2267
    %v2310 = vpack.c.b16 %v2271, %v2268
    %v2311 = vpack.c.b16 %v2275, %v2272
    %v2312 = vpack.c.b16 %v2276, %v2273
    %v2313 = vpack.c.b16 %v2277, %v2274
    %v2314 = vpack.c.b16 %v2281, %v2278
    %v2315 = vpack.c.b16 %v2282, %v2279
    %v2316 = vpack.c.b16 %v2283, %v2280
    %v2317 = vpack.c.b16 %v2287, %v2284
    %v2318 = vpack.c.b16 %v2288, %v2285
    %v2319 = vpack.c.b16 %v2289, %v2286
    %v2320 = vpack.c.b16 %v2293, %v2290
    %v2321 = vpack.c.b16 %v2294, %v2291
    %v2322 = vpack.c.b16 %v2295, %v2292
    %v2323 = vpack.c.b16 %v2299, %v2296
    %v2324 = vpack.c.b16 %v2300, %v2297
    %v2325 = vpack.c.b16 %v2301, %v2298
    %2350 = vmatprep.subr.bf16.mxu0 %v2324
    %2351 = vmatpush1.bf16.msra.mxu0 %v2323
    %2352 = vmatprep.subr.bf16.mxu0 %v2321
    %2353 = vmatpush1.bf16.msra.mxu0 %v2320
    %2354 = vmatprep.subr.bf16.mxu0 %v2318
    %2355 = vmatpush1.bf16.msra.mxu0 %v2317
    %2356 = vmatprep.subr.bf16.mxu0 %v2315
    %2357 = vmatpush1.bf16.msra.mxu0 %v2314
    %2358 = vmatprep.subr.bf16.mxu0 %v2312
    %2359 = vmatpush1.bf16.msra.mxu0 %v2311
    %2360 = vmatprep.subr.bf16.mxu0 %v2309
    %2361 = vmatpush1.bf16.msra.mxu0 %v2308
    %2362 = vmatprep.subr.bf16.mxu0 %v2306
    %2363 = vmatpush1.bf16.msra.mxu0 %v2305
    %2364 = vmatprep.subr.bf16.mxu0 %v2303
    %2365 = vmatpush1.bf16.msra.mxu0 %v2302
    %2366 = vmatprep.subr.bf16.mxu0 0
    %2367 = vmatpush2.bf16.msra.mxu0 0
    %2368 = vmatprep.subr.bf16.mxu0 0
    %2369 = vmatpush2.bf16.msra.mxu0 0
    %2370 = vmatprep.subr.bf16.mxu0 0
    %2371 = vmatpush2.bf16.msra.mxu0 0
    %2372 = vmatprep.subr.bf16.mxu0 0
    %2373 = vmatpush2.bf16.msra.mxu0 0
    %2374 = vmatprep.subr.bf16.mxu0 0
    %2375 = vmatpush2.bf16.msra.mxu0 0
    %2376 = vmatprep.subr.bf16.mxu0 0
    %2377 = vmatpush2.bf16.msra.mxu0 0
    %2378 = vmatprep.subr.bf16.mxu0 0
    %2379 = vmatpush2.bf16.msra.mxu0 0
    %2380 = vmatprep.subr.bf16.mxu0 0
    %2381 = vmatpush2.bf16.msra.mxu0 0
    %2382 = vmatprep.mubr.bf16.mxu0 0
    %2383 = vmatmul.mubr.bf16.gmra.mxu0 %v2221
    %v2384 = vpop.f32.mrf.mxu0
    %v2385 = vadd.f32 0.0, %v2384
    %v2386 = vpop.f32.mrf.mxu0
    %v2387 = vadd.f32 0.0, %v2386
    %v2388 = vpop.f32.mrf.mxu0
    %v2389 = vpop.f32.mrf.mxu0
    %2390 = vdwg.mxu0
    %2391 = vmatprep.subr.bf16.mxu0 0
    %2392 = vmatpush1.bf16.msra.mxu0 %v2325
    %2393 = vmatprep.subr.bf16.mxu0 0
    %2394 = vmatpush1.bf16.msra.mxu0 %v2322
    %2395 = vmatprep.subr.bf16.mxu0 0
    %2396 = vmatpush1.bf16.msra.mxu0 %v2319
    %2397 = vmatprep.subr.bf16.mxu0 0
    %2398 = vmatpush1.bf16.msra.mxu0 %v2316
    %2399 = vmatprep.subr.bf16.mxu0 0
    %2400 = vmatpush1.bf16.msra.mxu0 %v2313
    %2401 = vmatprep.subr.bf16.mxu0 0
    %2402 = vmatpush1.bf16.msra.mxu0 %v2310
    %2403 = vmatprep.subr.bf16.mxu0 0
    %2404 = vmatpush1.bf16.msra.mxu0 %v2307
    %2405 = vmatprep.subr.bf16.mxu0 0
    %2406 = vmatpush1.bf16.msra.mxu0 %v2304
    %2407 = vmatprep.subr.bf16.mxu0 0
    %2408 = vmatpush2.bf16.msra.mxu0 0
    %2409 = vmatprep.subr.bf16.mxu0 0
    %2410 = vmatpush2.bf16.msra.mxu0 0
    %2411 = vmatprep.subr.bf16.mxu0 0
    %2412 = vmatpush2.bf16.msra.mxu0 0
    %2413 = vmatprep.subr.bf16.mxu0 0
    %2414 = vmatpush2.bf16.msra.mxu0 0
    %2415 = vmatprep.subr.bf16.mxu0 0
    %2416 = vmatpush2.bf16.msra.mxu0 0
    %2417 = vmatprep.subr.bf16.mxu0 0
    %2418 = vmatpush2.bf16.msra.mxu0 0
    %2419 = vmatprep.subr.bf16.mxu0 0
    %2420 = vmatpush2.bf16.msra.mxu0 0
    %2421 = vmatprep.subr.bf16.mxu0 0
    %2422 = vmatpush2.bf16.msra.mxu0 0
    %2423 = vmatprep.mubr.bf16.mxu0 0
    %2424 = vmatmul.mubr.bf16.gmra.mxu0 %v2221
    %v2425 = vpop.f32.mrf.mxu0
    %v2426 = vadd.f32 0.0, %v2425
    %v2427 = vpop.f32.mrf.mxu0
    %v2428 = vpop.f32.mrf.mxu0
    %v2429 = vpop.f32.mrf.mxu0
    %2430 = vdwg.mxu0
    %v2431 = vadd.f32 %v2186, %v2385
    %v2432 = vmul.f32 %v2431, 0.5
    %v2433 = vtanh.pop %v2432
    %v2434 = vadd.f32 %v2433, 1.0
    %v2435 = vmul.f32 %v2434, 0.5
    %v2436 = vadd.f32 %v2187, %v2387
    %v2437 = vmul.f32 %v2436, 0.5
    %v2438 = vtanh.pop %v2437
    %v2439 = vadd.f32 %v2438, 1.0
    %v2440 = vmul.f32 %v2439, 0.5
    %v2441 = vadd.f32 %v2426, %v1916
    %v2442 = vmul.f32 %v2435, %v2441
    %v2443 = vadd.f32 %v2188, %v2442
    %v2444 = vtanh.pop %v2443
    %v2445 = vsub.f32 1.0, %v2440
    %v2446 = vmul.f32 %v2445, %v2444
    %v2447 = vmul.f32 %v2440, %v2185
    %v2448 = vadd.f32 %v2446, %v2447
    %2449 = vst [vmem:[#allocation3 + $0x8] sm:$0xff] %v2448
    %v2450 = vld [vmem:[#allocation4 + $0x10] sm:$0xff]
    %v2451 = vmul.f32 %v2448, %v2450
    %v2452 = vld [vmem:[#allocation2 + $0x30] sm:$0xff]
    %v2453 = vld [vmem:[#allocation2 + $0x38] sm:$0xff]
    %v2454 = vld [vmem:[#allocation2 + $0x40] sm:$0xff]
    %v2455 = vld [vmem:[#allocation22] sm:$0xff]
    %v2456 = vld [vmem:[#allocation22 + $0x8] sm:$0xf]
    %v2457 = vld [vmem:[#allocation22 + $0xc] sm:$0xff]
    %v2458 = vld [vmem:[#allocation22 + $0x14] sm:$0xf]
    %v2459 = vld [vmem:[#allocation22 + $0x18] sm:$0xff]
    %v2460 = vld [vmem:[#allocation22 + $0x20] sm:$0xf]
    %v2461 = vld [vmem:[#allocation22 + $0x24] sm:$0xff]
    %v2462 = vld [vmem:[#allocation22 + $0x2c] sm:$0xf]
    %v2463 = vld [vmem:[#allocation22 + $0x30] sm:$0xff]
    %v2464 = vld [vmem:[#allocation22 + $0x38] sm:$0xf]
    %v2465 = vld [vmem:[#allocation22 + $0x3c] sm:$0xff]
    %v2466 = vld [vmem:[#allocation22 + $0x44] sm:$0xf]
    %v2467 = vld [vmem:[#allocation22 + $0x48] sm:$0xff]
    %v2468 = vld [vmem:[#allocation22 + $0x50] sm:$0xf]
    %v2469 = vld [vmem:[#allocation22 + $0x54] sm:$0xff]
    %v2470 = vld [vmem:[#allocation22 + $0x5c] sm:$0xf]
    %v2471 = vld [vmem:[#allocation22 + $0x60] sm:$0xff]
    %v2472 = vld [vmem:[#allocation22 + $0x68] sm:$0xf]
    %v2473 = vld [vmem:[#allocation22 + $0x6c] sm:$0xff]
    %v2474 = vld [vmem:[#allocation22 + $0x74] sm:$0xf]
    %v2475 = vld [vmem:[#allocation22 + $0x78] sm:$0xff]
    %v2476 = vld [vmem:[#allocation22 + $0x80] sm:$0xf]
    %v2477 = vld [vmem:[#allocation22 + $0x84] sm:$0xff]
    %v2478 = vld [vmem:[#allocation22 + $0x8c] sm:$0xf]
    %v2479 = vld [vmem:[#allocation22 + $0x90] sm:$0xff]
    %v2480 = vld [vmem:[#allocation22 + $0x98] sm:$0xf]
    %v2481 = vld [vmem:[#allocation22 + $0x9c] sm:$0xff]
    %v2482 = vld [vmem:[#allocation22 + $0xa4] sm:$0xf]
    %v2483 = vld [vmem:[#allocation22 + $0xa8] sm:$0xff]
    %v2484 = vld [vmem:[#allocation22 + $0xb0] sm:$0xf]
    %v2485 = vld [vmem:[#allocation22 + $0xb4] sm:$0xff]
    %v2486 = vld [vmem:[#allocation22 + $0xbc] sm:$0xf]
    %v2487 = vpack.c.bf16 %v2451, %v2451
    %v2520 = vunpack.c.l.b16 %v2455
    %v2521 = vunpack.c.h.b16 %v2455
    %v2522 = vunpack.c.l.b16 %v2456
    %v2523 = vunpack.c.l.b16 %v2457
    %v2524 = vunpack.c.h.b16 %v2457
    %v2525 = vunpack.c.l.b16 %v2458
    %v2526 = vunpack.c.l.b16 %v2459
    %v2527 = vunpack.c.h.b16 %v2459
    %v2528 = vunpack.c.l.b16 %v2460
    %v2529 = vunpack.c.l.b16 %v2461
    %v2530 = vunpack.c.h.b16 %v2461
    %v2531 = vunpack.c.l.b16 %v2462
    %v2532 = vunpack.c.l.b16 %v2463
    %v2533 = vunpack.c.h.b16 %v2463
    %v2534 = vunpack.c.l.b16 %v2464
    %v2535 = vunpack.c.l.b16 %v2465
    %v2536 = vunpack.c.h.b16 %v2465
    %v2537 = vunpack.c.l.b16 %v2466
    %v2538 = vunpack.c.l.b16 %v2467
    %v2539 = vunpack.c.h.b16 %v2467
    %v2540 = vunpack.c.l.b16 %v2468
    %v2541 = vunpack.c.l.b16 %v2469
    %v2542 = vunpack.c.h.b16 %v2469
    %v2543 = vunpack.c.l.b16 %v2470
    %v2544 = vunpack.c.l.b16 %v2471
    %v2545 = vunpack.c.h.b16 %v2471
    %v2546 = vunpack.c.l.b16 %v2472
    %v2547 = vunpack.c.l.b16 %v2473
    %v2548 = vunpack.c.h.b16 %v2473
    %v2549 = vunpack.c.l.b16 %v2474
    %v2550 = vunpack.c.l.b16 %v2475
    %v2551 = vunpack.c.h.b16 %v2475
    %v2552 = vunpack.c.l.b16 %v2476
    %v2553 = vunpack.c.l.b16 %v2477
    %v2554 = vunpack.c.h.b16 %v2477
    %v2555 = vunpack.c.l.b16 %v2478
    %v2556 = vunpack.c.l.b16 %v2479
    %v2557 = vunpack.c.h.b16 %v2479
    %v2558 = vunpack.c.l.b16 %v2480
    %v2559 = vunpack.c.l.b16 %v2481
    %v2560 = vunpack.c.h.b16 %v2481
    %v2561 = vunpack.c.l.b16 %v2482
    %v2562 = vunpack.c.l.b16 %v2483
    %v2563 = vunpack.c.h.b16 %v2483
    %v2564 = vunpack.c.l.b16 %v2484
    %v2565 = vunpack.c.l.b16 %v2485
    %v2566 = vunpack.c.h.b16 %v2485
    %v2567 = vunpack.c.l.b16 %v2486
    %v2568 = vpack.c.b16 %v2523, %v2520
    %v2569 = vpack.c.b16 %v2524, %v2521
    %v2570 = vpack.c.b16 %v2525, %v2522
    %v2571 = vpack.c.b16 %v2529, %v2526
    %v2572 = vpack.c.b16 %v2530, %v2527
    %v2573 = vpack.c.b16 %v2531, %v2528
    %v2574 = vpack.c.b16 %v2535, %v2532
    %v2575 = vpack.c.b16 %v2536, %v2533
    %v2576 = vpack.c.b16 %v2537, %v2534
    %v2577 = vpack.c.b16 %v2541, %v2538
    %v2578 = vpack.c.b16 %v2542, %v2539
    %v2579 = vpack.c.b16 %v2543, %v2540
    %v2580 = vpack.c.b16 %v2547, %v2544
    %v2581 = vpack.c.b16 %v2548, %v2545
    %v2582 = vpack.c.b16 %v2549, %v2546
    %v2583 = vpack.c.b16 %v2553, %v2550
    %v2584 = vpack.c.b16 %v2554, %v2551
    %v2585 = vpack.c.b16 %v2555, %v2552
    %v2586 = vpack.c.b16 %v2559, %v2556
    %v2587 = vpack.c.b16 %v2560, %v2557
    %v2588 = vpack.c.b16 %v2561, %v2558
    %v2589 = vpack.c.b16 %v2565, %v2562
    %v2590 = vpack.c.b16 %v2566, %v2563
    %v2591 = vpack.c.b16 %v2567, %v2564
    %2616 = vmatprep.subr.bf16.mxu0 %v2590
    %2617 = vmatpush1.bf16.msra.mxu0 %v2589
    %2618 = vmatprep.subr.bf16.mxu0 %v2587
    %2619 = vmatpush1.bf16.msra.mxu0 %v2586
    %2620 = vmatprep.subr.bf16.mxu0 %v2584
    %2621 = vmatpush1.bf16.msra.mxu0 %v2583
    %2622 = vmatprep.subr.bf16.mxu0 %v2581
    %2623 = vmatpush1.bf16.msra.mxu0 %v2580
    %2624 = vmatprep.subr.bf16.mxu0 %v2578
    %2625 = vmatpush1.bf16.msra.mxu0 %v2577
    %2626 = vmatprep.subr.bf16.mxu0 %v2575
    %2627 = vmatpush1.bf16.msra.mxu0 %v2574
    %2628 = vmatprep.subr.bf16.mxu0 %v2572
    %2629 = vmatpush1.bf16.msra.mxu0 %v2571
    %2630 = vmatprep.subr.bf16.mxu0 %v2569
    %2631 = vmatpush1.bf16.msra.mxu0 %v2568
    %2632 = vmatprep.subr.bf16.mxu0 0
    %2633 = vmatpush2.bf16.msra.mxu0 0
    %2634 = vmatprep.subr.bf16.mxu0 0
    %2635 = vmatpush2.bf16.msra.mxu0 0
    %2636 = vmatprep.subr.bf16.mxu0 0
    %2637 = vmatpush2.bf16.msra.mxu0 0
    %2638 = vmatprep.subr.bf16.mxu0 0
    %2639 = vmatpush2.bf16.msra.mxu0 0
    %2640 = vmatprep.subr.bf16.mxu0 0
    %2641 = vmatpush2.bf16.msra.mxu0 0
    %2642 = vmatprep.subr.bf16.mxu0 0
    %2643 = vmatpush2.bf16.msra.mxu0 0
    %2644 = vmatprep.subr.bf16.mxu0 0
    %2645 = vmatpush2.bf16.msra.mxu0 0
    %2646 = vmatprep.subr.bf16.mxu0 0
    %2647 = vmatpush2.bf16.msra.mxu0 0
    %2648 = vmatprep.mubr.bf16.mxu0 0
    %2649 = vmatmul.mubr.bf16.gmra.mxu0 %v2487
    %v2650 = vpop.f32.mrf.mxu0
    %v2651 = vadd.f32 0.0, %v2650
    %v2652 = vpop.f32.mrf.mxu0
    %v2653 = vadd.f32 0.0, %v2652
    %v2654 = vpop.f32.mrf.mxu0
    %v2655 = vpop.f32.mrf.mxu0
    %2656 = vdwg.mxu0
    %2657 = vmatprep.subr.bf16.mxu0 0
    %2658 = vmatpush1.bf16.msra.mxu0 %v2591
    %2659 = vmatprep.subr.bf16.mxu0 0
    %2660 = vmatpush1.bf16.msra.mxu0 %v2588
    %2661 = vmatprep.subr.bf16.mxu0 0
    %2662 = vmatpush1.bf16.msra.mxu0 %v2585
    %2663 = vmatprep.subr.bf16.mxu0 0
    %2664 = vmatpush1.bf16.msra.mxu0 %v2582
    %2665 = vmatprep.subr.bf16.mxu0 0
    %2666 = vmatpush1.bf16.msra.mxu0 %v2579
    %2667 = vmatprep.subr.bf16.mxu0 0
    %2668 = vmatpush1.bf16.msra.mxu0 %v2576
    %2669 = vmatprep.subr.bf16.mxu0 0
    %2670 = vmatpush1.bf16.msra.mxu0 %v2573
    %2671 = vmatprep.subr.bf16.mxu0 0
    %2672 = vmatpush1.bf16.msra.mxu0 %v2570
    %2673 = vmatprep.subr.bf16.mxu0 0
    %2674 = vmatpush2.bf16.msra.mxu0 0
    %2675 = vmatprep.subr.bf16.mxu0 0
    %2676 = vmatpush2.bf16.msra.mxu0 0
    %2677 = vmatprep.subr.bf16.mxu0 0
    %2678 = vmatpush2.bf16.msra.mxu0 0
    %2679 = vmatprep.subr.bf16.mxu0 0
    %2680 = vmatpush2.bf16.msra.mxu0 0
    %2681 = vmatprep.subr.bf16.mxu0 0
    %2682 = vmatpush2.bf16.msra.mxu0 0
    %2683 = vmatprep.subr.bf16.mxu0 0
    %2684 = vmatpush2.bf16.msra.mxu0 0
    %2685 = vmatprep.subr.bf16.mxu0 0
    %2686 = vmatpush2.bf16.msra.mxu0 0
    %2687 = vmatprep.subr.bf16.mxu0 0
    %2688 = vmatpush2.bf16.msra.mxu0 0
    %2689 = vmatprep.mubr.bf16.mxu0 0
    %2690 = vmatmul.mubr.bf16.gmra.mxu0 %v2487
    %v2691 = vpop.f32.mrf.mxu0
    %v2692 = vadd.f32 0.0, %v2691
    %v2693 = vpop.f32.mrf.mxu0
    %v2694 = vpop.f32.mrf.mxu0
    %v2695 = vpop.f32.mrf.mxu0
    %2696 = vdwg.mxu0
    %v2697 = vadd.f32 %v2452, %v2651
    %v2698 = vmul.f32 %v2697, 0.5
    %v2699 = vtanh.pop %v2698
    %v2700 = vadd.f32 %v2699, 1.0
    %v2701 = vmul.f32 %v2700, 0.5
    %v2702 = vadd.f32 %v2453, %v2653
    %v2703 = vmul.f32 %v2702, 0.5
    %v2704 = vtanh.pop %v2703
    %v2705 = vadd.f32 %v2704, 1.0
    %v2706 = vmul.f32 %v2705, 0.5
    %v2707 = vadd.f32 %v2692, %v1916
    %v2708 = vmul.f32 %v2701, %v2707
    %v2709 = vadd.f32 %v2454, %v2708
    %v2710 = vtanh.pop %v2709
    %v2711 = vsub.f32 1.0, %v2706
    %v2712 = vmul.f32 %v2711, %v2710
    %v2713 = vmul.f32 %v2706, %v2451
    %v2714 = vadd.f32 %v2712, %v2713
    %2715 = vst [vmem:[#allocation3 + $0x10] sm:$0xff] %v2714
    %v2716 = vld [vmem:[#allocation4 + $0x18] sm:$0xff]
    %v2717 = vmul.f32 %v2714, %v2716
    %v2718 = vld [vmem:[#allocation2 + $0x48] sm:$0xff]
    %v2719 = vld [vmem:[#allocation2 + $0x50] sm:$0xff]
    %v2720 = vld [vmem:[#allocation2 + $0x58] sm:$0xff]
    %v2721 = vld [vmem:[#allocation22] sm:$0xff]
    %v2722 = vld [vmem:[#allocation22 + $0x8] sm:$0xf]
    %v2723 = vld [vmem:[#allocation22 + $0xc] sm:$0xff]
    %v2724 = vld [vmem:[#allocation22 + $0x14] sm:$0xf]
    %v2725 = vld [vmem:[#allocation22 + $0x18] sm:$0xff]
    %v2726 = vld [vmem:[#allocation22 + $0x20] sm:$0xf]
    %v2727 = vld [vmem:[#allocation22 + $0x24] sm:$0xff]
    %v2728 = vld [vmem:[#allocation22 + $0x2c] sm:$0xf]
    %v2729 = vld [vmem:[#allocation22 + $0x30] sm:$0xff]
    %v2730 = vld [vmem:[#allocation22 + $0x38] sm:$0xf]
    %v2731 = vld [vmem:[#allocation22 + $0x3c] sm:$0xff]
    %v2732 = vld [vmem:[#allocation22 + $0x44] sm:$0xf]
    %v2733 = vld [vmem:[#allocation22 + $0x48] sm:$0xff]
    %v2734 = vld [vmem:[#allocation22 + $0x50] sm:$0xf]
    %v2735 = vld [vmem:[#allocation22 + $0x54] sm:$0xff]
    %v2736 = vld [vmem:[#allocation22 + $0x5c] sm:$0xf]
    %v2737 = vld [vmem:[#allocation22 + $0x60] sm:$0xff]
    %v2738 = vld [vmem:[#allocation22 + $0x68] sm:$0xf]
    %v2739 = vld [vmem:[#allocation22 + $0x6c] sm:$0xff]
    %v2740 = vld [vmem:[#allocation22 + $0x74] sm:$0xf]
    %v2741 = vld [vmem:[#allocation22 + $0x78] sm:$0xff]
    %v2742 = vld [vmem:[#allocation22 + $0x80] sm:$0xf]
    %v2743 = vld [vmem:[#allocation22 + $0x84] sm:$0xff]
    %v2744 = vld [vmem:[#allocation22 + $0x8c] sm:$0xf]
    %v2745 = vld [vmem:[#allocation22 + $0x90] sm:$0xff]
    %v2746 = vld [vmem:[#allocation22 + $0x98] sm:$0xf]
    %v2747 = vld [vmem:[#allocation22 + $0x9c] sm:$0xff]
    %v2748 = vld [vmem:[#allocation22 + $0xa4] sm:$0xf]
    %v2749 = vld [vmem:[#allocation22 + $0xa8] sm:$0xff]
    %v2750 = vld [vmem:[#allocation22 + $0xb0] sm:$0xf]
    %v2751 = vld [vmem:[#allocation22 + $0xb4] sm:$0xff]
    %v2752 = vld [vmem:[#allocation22 + $0xbc] sm:$0xf]
    %v2753 = vpack.c.bf16 %v2717, %v2717
    %v2786 = vunpack.c.l.b16 %v2721
    %v2787 = vunpack.c.h.b16 %v2721
    %v2788 = vunpack.c.l.b16 %v2722
    %v2789 = vunpack.c.l.b16 %v2723
    %v2790 = vunpack.c.h.b16 %v2723
    %v2791 = vunpack.c.l.b16 %v2724
    %v2792 = vunpack.c.l.b16 %v2725
    %v2793 = vunpack.c.h.b16 %v2725
    %v2794 = vunpack.c.l.b16 %v2726
    %v2795 = vunpack.c.l.b16 %v2727
    %v2796 = vunpack.c.h.b16 %v2727
    %v2797 = vunpack.c.l.b16 %v2728
    %v2798 = vunpack.c.l.b16 %v2729
    %v2799 = vunpack.c.h.b16 %v2729
    %v2800 = vunpack.c.l.b16 %v2730
    %v2801 = vunpack.c.l.b16 %v2731
    %v2802 = vunpack.c.h.b16 %v2731
    %v2803 = vunpack.c.l.b16 %v2732
    %v2804 = vunpack.c.l.b16 %v2733
    %v2805 = vunpack.c.h.b16 %v2733
    %v2806 = vunpack.c.l.b16 %v2734
    %v2807 = vunpack.c.l.b16 %v2735
    %v2808 = vunpack.c.h.b16 %v2735
    %v2809 = vunpack.c.l.b16 %v2736
    %v2810 = vunpack.c.l.b16 %v2737
    %v2811 = vunpack.c.h.b16 %v2737
    %v2812 = vunpack.c.l.b16 %v2738
    %v2813 = vunpack.c.l.b16 %v2739
    %v2814 = vunpack.c.h.b16 %v2739
    %v2815 = vunpack.c.l.b16 %v2740
    %v2816 = vunpack.c.l.b16 %v2741
    %v2817 = vunpack.c.h.b16 %v2741
    %v2818 = vunpack.c.l.b16 %v2742
    %v2819 = vunpack.c.l.b16 %v2743
    %v2820 = vunpack.c.h.b16 %v2743
    %v2821 = vunpack.c.l.b16 %v2744
    %v2822 = vunpack.c.l.b16 %v2745
    %v2823 = vunpack.c.h.b16 %v2745
    %v2824 = vunpack.c.l.b16 %v2746
    %v2825 = vunpack.c.l.b16 %v2747
    %v2826 = vunpack.c.h.b16 %v2747
    %v2827 = vunpack.c.l.b16 %v2748
    %v2828 = vunpack.c.l.b16 %v2749
    %v2829 = vunpack.c.h.b16 %v2749
    %v2830 = vunpack.c.l.b16 %v2750
    %v2831 = vunpack.c.l.b16 %v2751
    %v2832 = vunpack.c.h.b16 %v2751
    %v2833 = vunpack.c.l.b16 %v2752
    %v2834 = vpack.c.b16 %v2789, %v2786
    %v2835 = vpack.c.b16 %v2790, %v2787
    %v2836 = vpack.c.b16 %v2791, %v2788
    %v2837 = vpack.c.b16 %v2795, %v2792
    %v2838 = vpack.c.b16 %v2796, %v2793
    %v2839 = vpack.c.b16 %v2797, %v2794
    %v2840 = vpack.c.b16 %v2801, %v2798
    %v2841 = vpack.c.b16 %v2802, %v2799
    %v2842 = vpack.c.b16 %v2803, %v2800
    %v2843 = vpack.c.b16 %v2807, %v2804
    %v2844 = vpack.c.b16 %v2808, %v2805
    %v2845 = vpack.c.b16 %v2809, %v2806
    %v2846 = vpack.c.b16 %v2813, %v2810
    %v2847 = vpack.c.b16 %v2814, %v2811
    %v2848 = vpack.c.b16 %v2815, %v2812
    %v2849 = vpack.c.b16 %v2819, %v2816
    %v2850 = vpack.c.b16 %v2820, %v2817
    %v2851 = vpack.c.b16 %v2821, %v2818
    %v2852 = vpack.c.b16 %v2825, %v2822
    %v2853 = vpack.c.b16 %v2826, %v2823
    %v2854 = vpack.c.b16 %v2827, %v2824
    %v2855 = vpack.c.b16 %v2831, %v2828
    %v2856 = vpack.c.b16 %v2832, %v2829
    %v2857 = vpack.c.b16 %v2833, %v2830
    %2882 = vmatprep.subr.bf16.mxu0 %v2856
    %2883 = vmatpush1.bf16.msra.mxu0 %v2855
    %2884 = vmatprep.subr.bf16.mxu0 %v2853
    %2885 = vmatpush1.bf16.msra.mxu0 %v2852
    %2886 = vmatprep.subr.bf16.mxu0 %v2850
    %2887 = vmatpush1.bf16.msra.mxu0 %v2849
    %2888 = vmatprep.subr.bf16.mxu0 %v2847
    %2889 = vmatpush1.bf16.msra.mxu0 %v2846
    %2890 = vmatprep.subr.bf16.mxu0 %v2844
    %2891 = vmatpush1.bf16.msra.mxu0 %v2843
    %2892 = vmatprep.subr.bf16.mxu0 %v2841
    %2893 = vmatpush1.bf16.msra.mxu0 %v2840
    %2894 = vmatprep.subr.bf16.mxu0 %v2838
    %2895 = vmatpush1.bf16.msra.mxu0 %v2837
    %2896 = vmatprep.subr.bf16.mxu0 %v2835
    %2897 = vmatpush1.bf16.msra.mxu0 %v2834
    %2898 = vmatprep.subr.bf16.mxu0 0
    %2899 = vmatpush2.bf16.msra.mxu0 0
    %2900 = vmatprep.subr.bf16.mxu0 0
    %2901 = vmatpush2.bf16.msra.mxu0 0
    %2902 = vmatprep.subr.bf16.mxu0 0
    %2903 = vmatpush2.bf16.msra.mxu0 0
    %2904 = vmatprep.subr.bf16.mxu0 0
    %2905 = vmatpush2.bf16.msra.mxu0 0
    %2906 = vmatprep.subr.bf16.mxu0 0
    %2907 = vmatpush2.bf16.msra.mxu0 0
    %2908 = vmatprep.subr.bf16.mxu0 0
    %2909 = vmatpush2.bf16.msra.mxu0 0
    %2910 = vmatprep.subr.bf16.mxu0 0
    %2911 = vmatpush2.bf16.msra.mxu0 0
    %2912 = vmatprep.subr.bf16.mxu0 0
    %2913 = vmatpush2.bf16.msra.mxu0 0
    %2914 = vmatprep.mubr.bf16.mxu0 0
    %2915 = vmatmul.mubr.bf16.gmra.mxu0 %v2753
    %v2916 = vpop.f32.mrf.mxu0
    %v2917 = vadd.f32 0.0, %v2916
    %v2918 = vpop.f32.mrf.mxu0
    %v2919 = vadd.f32 0.0, %v2918
    %v2920 = vpop.f32.mrf.mxu0
    %v2921 = vpop.f32.mrf.mxu0
    %2922 = vdwg.mxu0
    %2923 = vmatprep.subr.bf16.mxu0 0
    %2924 = vmatpush1.bf16.msra.mxu0 %v2857
    %2925 = vmatprep.subr.bf16.mxu0 0
    %2926 = vmatpush1.bf16.msra.mxu0 %v2854
    %2927 = vmatprep.subr.bf16.mxu0 0
    %2928 = vmatpush1.bf16.msra.mxu0 %v2851
    %2929 = vmatprep.subr.bf16.mxu0 0
    %2930 = vmatpush1.bf16.msra.mxu0 %v2848
    %2931 = vmatprep.subr.bf16.mxu0 0
    %2932 = vmatpush1.bf16.msra.mxu0 %v2845
    %2933 = vmatprep.subr.bf16.mxu0 0
    %2934 = vmatpush1.bf16.msra.mxu0 %v2842
    %2935 = vmatprep.subr.bf16.mxu0 0
    %2936 = vmatpush1.bf16.msra.mxu0 %v2839
    %2937 = vmatprep.subr.bf16.mxu0 0
    %2938 = vmatpush1.bf16.msra.mxu0 %v2836
    %2939 = vmatprep.subr.bf16.mxu0 0
    %2940 = vmatpush2.bf16.msra.mxu0 0
    %2941 = vmatprep.subr.bf16.mxu0 0
    %2942 = vmatpush2.bf16.msra.mxu0 0
    %2943 = vmatprep.subr.bf16.mxu0 0
    %2944 = vmatpush2.bf16.msra.mxu0 0
    %2945 = vmatprep.subr.bf16.mxu0 0
    %2946 = vmatpush2.bf16.msra.mxu0 0
    %2947 = vmatprep.subr.bf16.mxu0 0
    %2948 = vmatpush2.bf16.msra.mxu0 0
    %2949 = vmatprep.subr.bf16.mxu0 0
    %2950 = vmatpush2.bf16.msra.mxu0 0
    %2951 = vmatprep.subr.bf16.mxu0 0
    %2952 = vmatpush2.bf16.msra.mxu0 0
    %2953 = vmatprep.subr.bf16.mxu0 0
    %2954 = vmatpush2.bf16.msra.mxu0 0
    %2955 = vmatprep.mubr.bf16.mxu0 0
    %2956 = vmatmul.mubr.bf16.gmra.mxu0 %v2753
    %v2957 = vpop.f32.mrf.mxu0
    %v2958 = vadd.f32 0.0, %v2957
    %v2959 = vpop.f32.mrf.mxu0
    %v2960 = vpop.f32.mrf.mxu0
    %v2961 = vpop.f32.mrf.mxu0
    %2962 = vdwg.mxu0
    %v2963 = vadd.f32 %v2718, %v2917
    %v2964 = vmul.f32 %v2963, 0.5
    %v2965 = vtanh.pop %v2964
    %v2966 = vadd.f32 %v2965, 1.0
    %v2967 = vmul.f32 %v2966, 0.5
    %v2968 = vadd.f32 %v2719, %v2919
    %v2969 = vmul.f32 %v2968, 0.5
    %v2970 = vtanh.pop %v2969
    %v2971 = vadd.f32 %v2970, 1.0
    %v2972 = vmul.f32 %v2971, 0.5
    %v2973 = vadd.f32 %v2958, %v1916
    %v2974 = vmul.f32 %v2967, %v2973
    %v2975 = vadd.f32 %v2720, %v2974
    %v2976 = vtanh.pop %v2975
    %v2977 = vsub.f32 1.0, %v2972
    %v2978 = vmul.f32 %v2977, %v2976
    %v2979 = vmul.f32 %v2972, %v2717
    %v2980 = vadd.f32 %v2978, %v2979
    %2981 = vst [vmem:[#allocation3 + $0x18] sm:$0xff] %v2980
    %v2982 = vld [vmem:[#allocation4 + $0x20] sm:$0xff]
    %v2983 = vmul.f32 %v2980, %v2982
    %v2984 = vld [vmem:[#allocation2 + $0x60] sm:$0xff]
    %v2985 = vld [vmem:[#allocation2 + $0x68] sm:$0xff]
    %v2986 = vld [vmem:[#allocation2 + $0x70] sm:$0xff]
    %v2987 = vld [vmem:[#allocation22] sm:$0xff]
    %v2988 = vld [vmem:[#allocation22 + $0x8] sm:$0xf]
    %v2989 = vld [vmem:[#allocation22 + $0xc] sm:$0xff]
    %v2990 = vld [vmem:[#allocation22 + $0x14] sm:$0xf]
    %v2991 = vld [vmem:[#allocation22 + $0x18] sm:$0xff]
    %v2992 = vld [vmem:[#allocation22 + $0x20] sm:$0xf]
    %v2993 = vld [vmem:[#allocation22 + $0x24] sm:$0xff]
    %v2994 = vld [vmem:[#allocation22 + $0x2c] sm:$0xf]
    %v2995 = vld [vmem:[#allocation22 + $0x30] sm:$0xff]
    %v2996 = vld [vmem:[#allocation22 + $0x38] sm:$0xf]
    %v2997 = vld [vmem:[#allocation22 + $0x3c] sm:$0xff]
    %v2998 = vld [vmem:[#allocation22 + $0x44] sm:$0xf]
    %v2999 = vld [vmem:[#allocation22 + $0x48] sm:$0xff]
    %v3000 = vld [vmem:[#allocation22 + $0x50] sm:$0xf]
    %v3001 = vld [vmem:[#allocation22 + $0x54] sm:$0xff]
    %v3002 = vld [vmem:[#allocation22 + $0x5c] sm:$0xf]
    %v3003 = vld [vmem:[#allocation22 + $0x60] sm:$0xff]
    %v3004 = vld [vmem:[#allocation22 + $0x68] sm:$0xf]
    %v3005 = vld [vmem:[#allocation22 + $0x6c] sm:$0xff]
    %v3006 = vld [vmem:[#allocation22 + $0x74] sm:$0xf]
    %v3007 = vld [vmem:[#allocation22 + $0x78] sm:$0xff]
    %v3008 = vld [vmem:[#allocation22 + $0x80] sm:$0xf]
    %v3009 = vld [vmem:[#allocation22 + $0x84] sm:$0xff]
    %v3010 = vld [vmem:[#allocation22 + $0x8c] sm:$0xf]
    %v3011 = vld [vmem:[#allocation22 + $0x90] sm:$0xff]
    %v3012 = vld [vmem:[#allocation22 + $0x98] sm:$0xf]
    %v3013 = vld [vmem:[#allocation22 + $0x9c] sm:$0xff]
    %v3014 = vld [vmem:[#allocation22 + $0xa4] sm:$0xf]
    %v3015 = vld [vmem:[#allocation22 + $0xa8] sm:$0xff]
    %v3016 = vld [vmem:[#allocation22 + $0xb0] sm:$0xf]
    %v3017 = vld [vmem:[#allocation22 + $0xb4] sm:$0xff]
    %v3018 = vld [vmem:[#allocation22 + $0xbc] sm:$0xf]
    %v3019 = vpack.c.bf16 %v2983, %v2983
    %v3052 = vunpack.c.l.b16 %v2987
    %v3053 = vunpack.c.h.b16 %v2987
    %v3054 = vunpack.c.l.b16 %v2988
    %v3055 = vunpack.c.l.b16 %v2989
    %v3056 = vunpack.c.h.b16 %v2989
    %v3057 = vunpack.c.l.b16 %v2990
    %v3058 = vunpack.c.l.b16 %v2991
    %v3059 = vunpack.c.h.b16 %v2991
    %v3060 = vunpack.c.l.b16 %v2992
    %v3061 = vunpack.c.l.b16 %v2993
    %v3062 = vunpack.c.h.b16 %v2993
    %v3063 = vunpack.c.l.b16 %v2994
    %v3064 = vunpack.c.l.b16 %v2995
    %v3065 = vunpack.c.h.b16 %v2995
    %v3066 = vunpack.c.l.b16 %v2996
    %v3067 = vunpack.c.l.b16 %v2997
    %v3068 = vunpack.c.h.b16 %v2997
    %v3069 = vunpack.c.l.b16 %v2998
    %v3070 = vunpack.c.l.b16 %v2999
    %v3071 = vunpack.c.h.b16 %v2999
    %v3072 = vunpack.c.l.b16 %v3000
    %v3073 = vunpack.c.l.b16 %v3001
    %v3074 = vunpack.c.h.b16 %v3001
    %v3075 = vunpack.c.l.b16 %v3002
    %v3076 = vunpack.c.l.b16 %v3003
    %v3077 = vunpack.c.h.b16 %v3003
    %v3078 = vunpack.c.l.b16 %v3004
    %v3079 = vunpack.c.l.b16 %v3005
    %v3080 = vunpack.c.h.b16 %v3005
    %v3081 = vunpack.c.l.b16 %v3006
    %v3082 = vunpack.c.l.b16 %v3007
    %v3083 = vunpack.c.h.b16 %v3007
    %v3084 = vunpack.c.l.b16 %v3008
    %v3085 = vunpack.c.l.b16 %v3009
    %v3086 = vunpack.c.h.b16 %v3009
    %v3087 = vunpack.c.l.b16 %v3010
    %v3088 = vunpack.c.l.b16 %v3011
    %v3089 = vunpack.c.h.b16 %v3011
    %v3090 = vunpack.c.l.b16 %v3012
    %v3091 = vunpack.c.l.b16 %v3013
    %v3092 = vunpack.c.h.b16 %v3013
    %v3093 = vunpack.c.l.b16 %v3014
    %v3094 = vunpack.c.l.b16 %v3015
    %v3095 = vunpack.c.h.b16 %v3015
    %v3096 = vunpack.c.l.b16 %v3016
    %v3097 = vunpack.c.l.b16 %v3017
    %v3098 = vunpack.c.h.b16 %v3017
    %v3099 = vunpack.c.l.b16 %v3018
    %v3100 = vpack.c.b16 %v3055, %v3052
    %v3101 = vpack.c.b16 %v3056, %v3053
    %v3102 = vpack.c.b16 %v3057, %v3054
    %v3103 = vpack.c.b16 %v3061, %v3058
    %v3104 = vpack.c.b16 %v3062, %v3059
    %v3105 = vpack.c.b16 %v3063, %v3060
    %v3106 = vpack.c.b16 %v3067, %v3064
    %v3107 = vpack.c.b16 %v3068, %v3065
    %v3108 = vpack.c.b16 %v3069, %v3066
    %v3109 = vpack.c.b16 %v3073, %v3070
    %v3110 = vpack.c.b16 %v3074, %v3071
    %v3111 = vpack.c.b16 %v3075, %v3072
    %v3112 = vpack.c.b16 %v3079, %v3076
    %v3113 = vpack.c.b16 %v3080, %v3077
    %v3114 = vpack.c.b16 %v3081, %v3078
    %v3115 = vpack.c.b16 %v3085, %v3082
    %v3116 = vpack.c.b16 %v3086, %v3083
    %v3117 = vpack.c.b16 %v3087, %v3084
    %v3118 = vpack.c.b16 %v3091, %v3088
    %v3119 = vpack.c.b16 %v3092, %v3089
    %v3120 = vpack.c.b16 %v3093, %v3090
    %v3121 = vpack.c.b16 %v3097, %v3094
    %v3122 = vpack.c.b16 %v3098, %v3095
    %v3123 = vpack.c.b16 %v3099, %v3096
    %3148 = vmatprep.subr.bf16.mxu0 %v3122
    %3149 = vmatpush1.bf16.msra.mxu0 %v3121
    %3150 = vmatprep.subr.bf16.mxu0 %v3119
    %3151 = vmatpush1.bf16.msra.mxu0 %v3118
    %3152 = vmatprep.subr.bf16.mxu0 %v3116
    %3153 = vmatpush1.bf16.msra.mxu0 %v3115
    %3154 = vmatprep.subr.bf16.mxu0 %v3113
    %3155 = vmatpush1.bf16.msra.mxu0 %v3112
    %3156 = vmatprep.subr.bf16.mxu0 %v3110
    %3157 = vmatpush1.bf16.msra.mxu0 %v3109
    %3158 = vmatprep.subr.bf16.mxu0 %v3107
    %3159 = vmatpush1.bf16.msra.mxu0 %v3106
    %3160 = vmatprep.subr.bf16.mxu0 %v3104
    %3161 = vmatpush1.bf16.msra.mxu0 %v3103
    %3162 = vmatprep.subr.bf16.mxu0 %v3101
    %3163 = vmatpush1.bf16.msra.mxu0 %v3100
    %3164 = vmatprep.subr.bf16.mxu0 0
    %3165 = vmatpush2.bf16.msra.mxu0 0
    %3166 = vmatprep.subr.bf16.mxu0 0
    %3167 = vmatpush2.bf16.msra.mxu0 0
    %3168 = vmatprep.subr.bf16.mxu0 0
    %3169 = vmatpush2.bf16.msra.mxu0 0
    %3170 = vmatprep.subr.bf16.mxu0 0
    %3171 = vmatpush2.bf16.msra.mxu0 0
    %3172 = vmatprep.subr.bf16.mxu0 0
    %3173 = vmatpush2.bf16.msra.mxu0 0
    %3174 = vmatprep.subr.bf16.mxu0 0
    %3175 = vmatpush2.bf16.msra.mxu0 0
    %3176 = vmatprep.subr.bf16.mxu0 0
    %3177 = vmatpush2.bf16.msra.mxu0 0
    %3178 = vmatprep.subr.bf16.mxu0 0
    %3179 = vmatpush2.bf16.msra.mxu0 0
    %3180 = vmatprep.mubr.bf16.mxu0 0
    %3181 = vmatmul.mubr.bf16.gmra.mxu0 %v3019
    %v3182 = vpop.f32.mrf.mxu0
    %v3183 = vadd.f32 0.0, %v3182
    %v3184 = vpop.f32.mrf.mxu0
    %v3185 = vadd.f32 0.0, %v3184
    %v3186 = vpop.f32.mrf.mxu0
    %v3187 = vpop.f32.mrf.mxu0
    %3188 = vdwg.mxu0
    %3189 = vmatprep.subr.bf16.mxu0 0
    %3190 = vmatpush1.bf16.msra.mxu0 %v3123
    %3191 = vmatprep.subr.bf16.mxu0 0
    %3192 = vmatpush1.bf16.msra.mxu0 %v3120
    %3193 = vmatprep.subr.bf16.mxu0 0
    %3194 = vmatpush1.bf16.msra.mxu0 %v3117
    %3195 = vmatprep.subr.bf16.mxu0 0
    %3196 = vmatpush1.bf16.msra.mxu0 %v3114
    %3197 = vmatprep.subr.bf16.mxu0 0
    %3198 = vmatpush1.bf16.msra.mxu0 %v3111
    %3199 = vmatprep.subr.bf16.mxu0 0
    %3200 = vmatpush1.bf16.msra.mxu0 %v3108
    %3201 = vmatprep.subr.bf16.mxu0 0
    %3202 = vmatpush1.bf16.msra.mxu0 %v3105
    %3203 = vmatprep.subr.bf16.mxu0 0
    %3204 = vmatpush1.bf16.msra.mxu0 %v3102
    %3205 = vmatprep.subr.bf16.mxu0 0
    %3206 = vmatpush2.bf16.msra.mxu0 0
    %3207 = vmatprep.subr.bf16.mxu0 0
    %3208 = vmatpush2.bf16.msra.mxu0 0
    %3209 = vmatprep.subr.bf16.mxu0 0
    %3210 = vmatpush2.bf16.msra.mxu0 0
    %3211 = vmatprep.subr.bf16.mxu0 0
    %3212 = vmatpush2.bf16.msra.mxu0 0
    %3213 = vmatprep.subr.bf16.mxu0 0
    %3214 = vmatpush2.bf16.msra.mxu0 0
    %3215 = vmatprep.subr.bf16.mxu0 0
    %3216 = vmatpush2.bf16.msra.mxu0 0
    %3217 = vmatprep.subr.bf16.mxu0 0
    %3218 = vmatpush2.bf16.msra.mxu0 0
    %3219 = vmatprep.subr.bf16.mxu0 0
    %3220 = vmatpush2.bf16.msra.mxu0 0
    %3221 = vmatprep.mubr.bf16.mxu0 0
    %3222 = vmatmul.mubr.bf16.gmra.mxu0 %v3019
    %v3223 = vpop.f32.mrf.mxu0
    %v3224 = vadd.f32 0.0, %v3223
    %v3225 = vpop.f32.mrf.mxu0
    %v3226 = vpop.f32.mrf.mxu0
    %v3227 = vpop.f32.mrf.mxu0
    %3228 = vdwg.mxu0
    %v3229 = vadd.f32 %v2984, %v3183
    %v3230 = vmul.f32 %v3229, 0.5
    %v3231 = vtanh.pop %v3230
    %v3232 = vadd.f32 %v3231, 1.0
    %v3233 = vmul.f32 %v3232, 0.5
    %v3234 = vadd.f32 %v2985, %v3185
    %v3235 = vmul.f32 %v3234, 0.5
    %v3236 = vtanh.pop %v3235
    %v3237 = vadd.f32 %v3236, 1.0
    %v3238 = vmul.f32 %v3237, 0.5
    %v3239 = vadd.f32 %v3224, %v1916
    %v3240 = vmul.f32 %v3233, %v3239
    %v3241 = vadd.f32 %v2986, %v3240
    %v3242 = vtanh.pop %v3241
    %v3243 = vsub.f32 1.0, %v3238
    %v3244 = vmul.f32 %v3243, %v3242
    %v3245 = vmul.f32 %v3238, %v2983
    %v3246 = vadd.f32 %v3244, %v3245
    %3247 = vst [vmem:[#allocation3 + $0x20] sm:$0xff] %v3246
    %v3248 = vld [vmem:[#allocation4 + $0x28] sm:$0xff]
    %v3249 = vmul.f32 %v3246, %v3248
    %v3250 = vld [vmem:[#allocation2 + $0x78] sm:$0xff]
    %v3251 = vld [vmem:[#allocation2 + $0x80] sm:$0xff]
    %v3252 = vld [vmem:[#allocation2 + $0x88] sm:$0xff]
    %v3253 = vld [vmem:[#allocation22] sm:$0xff]
    %v3254 = vld [vmem:[#allocation22 + $0x8] sm:$0xf]
    %v3255 = vld [vmem:[#allocation22 + $0xc] sm:$0xff]
    %v3256 = vld [vmem:[#allocation22 + $0x14] sm:$0xf]
    %v3257 = vld [vmem:[#allocation22 + $0x18] sm:$0xff]
    %v3258 = vld [vmem:[#allocation22 + $0x20] sm:$0xf]
    %v3259 = vld [vmem:[#allocation22 + $0x24] sm:$0xff]
    %v3260 = vld [vmem:[#allocation22 + $0x2c] sm:$0xf]
    %v3261 = vld [vmem:[#allocation22 + $0x30] sm:$0xff]
    %v3262 = vld [vmem:[#allocation22 + $0x38] sm:$0xf]
    %v3263 = vld [vmem:[#allocation22 + $0x3c] sm:$0xff]
    %v3264 = vld [vmem:[#allocation22 + $0x44] sm:$0xf]
    %v3265 = vld [vmem:[#allocation22 + $0x48] sm:$0xff]
    %v3266 = vld [vmem:[#allocation22 + $0x50] sm:$0xf]
    %v3267 = vld [vmem:[#allocation22 + $0x54] sm:$0xff]
    %v3268 = vld [vmem:[#allocation22 + $0x5c] sm:$0xf]
    %v3269 = vld [vmem:[#allocation22 + $0x60] sm:$0xff]
    %v3270 = vld [vmem:[#allocation22 + $0x68] sm:$0xf]
    %v3271 = vld [vmem:[#allocation22 + $0x6c] sm:$0xff]
    %v3272 = vld [vmem:[#allocation22 + $0x74] sm:$0xf]
    %v3273 = vld [vmem:[#allocation22 + $0x78] sm:$0xff]
    %v3274 = vld [vmem:[#allocation22 + $0x80] sm:$0xf]
    %v3275 = vld [vmem:[#allocation22 + $0x84] sm:$0xff]
    %v3276 = vld [vmem:[#allocation22 + $0x8c] sm:$0xf]
    %v3277 = vld [vmem:[#allocation22 + $0x90] sm:$0xff]
    %v3278 = vld [vmem:[#allocation22 + $0x98] sm:$0xf]
    %v3279 = vld [vmem:[#allocation22 + $0x9c] sm:$0xff]
    %v3280 = vld [vmem:[#allocation22 + $0xa4] sm:$0xf]
    %v3281 = vld [vmem:[#allocation22 + $0xa8] sm:$0xff]
    %v3282 = vld [vmem:[#allocation22 + $0xb0] sm:$0xf]
    %v3283 = vld [vmem:[#allocation22 + $0xb4] sm:$0xff]
    %v3284 = vld [vmem:[#allocation22 + $0xbc] sm:$0xf]
    %v3285 = vpack.c.bf16 %v3249, %v3249
    %v3318 = vunpack.c.l.b16 %v3253
    %v3319 = vunpack.c.h.b16 %v3253
    %v3320 = vunpack.c.l.b16 %v3254
    %v3321 = vunpack.c.l.b16 %v3255
    %v3322 = vunpack.c.h.b16 %v3255
    %v3323 = vunpack.c.l.b16 %v3256
    %v3324 = vunpack.c.l.b16 %v3257
    %v3325 = vunpack.c.h.b16 %v3257
    %v3326 = vunpack.c.l.b16 %v3258
    %v3327 = vunpack.c.l.b16 %v3259
    %v3328 = vunpack.c.h.b16 %v3259
    %v3329 = vunpack.c.l.b16 %v3260
    %v3330 = vunpack.c.l.b16 %v3261
    %v3331 = vunpack.c.h.b16 %v3261
    %v3332 = vunpack.c.l.b16 %v3262
    %v3333 = vunpack.c.l.b16 %v3263
    %v3334 = vunpack.c.h.b16 %v3263
    %v3335 = vunpack.c.l.b16 %v3264
    %v3336 = vunpack.c.l.b16 %v3265
    %v3337 = vunpack.c.h.b16 %v3265
    %v3338 = vunpack.c.l.b16 %v3266
    %v3339 = vunpack.c.l.b16 %v3267
    %v3340 = vunpack.c.h.b16 %v3267
    %v3341 = vunpack.c.l.b16 %v3268
    %v3342 = vunpack.c.l.b16 %v3269
    %v3343 = vunpack.c.h.b16 %v3269
    %v3344 = vunpack.c.l.b16 %v3270
    %v3345 = vunpack.c.l.b16 %v3271
    %v3346 = vunpack.c.h.b16 %v3271
    %v3347 = vunpack.c.l.b16 %v3272
    %v3348 = vunpack.c.l.b16 %v3273
    %v3349 = vunpack.c.h.b16 %v3273
    %v3350 = vunpack.c.l.b16 %v3274
    %v3351 = vunpack.c.l.b16 %v3275
    %v3352 = vunpack.c.h.b16 %v3275
    %v3353 = vunpack.c.l.b16 %v3276
    %v3354 = vunpack.c.l.b16 %v3277
    %v3355 = vunpack.c.h.b16 %v3277
    %v3356 = vunpack.c.l.b16 %v3278
    %v3357 = vunpack.c.l.b16 %v3279
    %v3358 = vunpack.c.h.b16 %v3279
    %v3359 = vunpack.c.l.b16 %v3280
    %v3360 = vunpack.c.l.b16 %v3281
    %v3361 = vunpack.c.h.b16 %v3281
    %v3362 = vunpack.c.l.b16 %v3282
    %v3363 = vunpack.c.l.b16 %v3283
    %v3364 = vunpack.c.h.b16 %v3283
    %v3365 = vunpack.c.l.b16 %v3284
    %v3366 = vpack.c.b16 %v3321, %v3318
    %v3367 = vpack.c.b16 %v3322, %v3319
    %v3368 = vpack.c.b16 %v3323, %v3320
    %v3369 = vpack.c.b16 %v3327, %v3324
    %v3370 = vpack.c.b16 %v3328, %v3325
    %v3371 = vpack.c.b16 %v3329, %v3326
    %v3372 = vpack.c.b16 %v3333, %v3330
    %v3373 = vpack.c.b16 %v3334, %v3331
    %v3374 = vpack.c.b16 %v3335, %v3332
    %v3375 = vpack.c.b16 %v3339, %v3336
    %v3376 = vpack.c.b16 %v3340, %v3337
    %v3377 = vpack.c.b16 %v3341, %v3338
    %v3378 = vpack.c.b16 %v3345, %v3342
    %v3379 = vpack.c.b16 %v3346, %v3343
    %v3380 = vpack.c.b16 %v3347, %v3344
    %v3381 = vpack.c.b16 %v3351, %v3348
    %v3382 = vpack.c.b16 %v3352, %v3349
    %v3383 = vpack.c.b16 %v3353, %v3350
    %v3384 = vpack.c.b16 %v3357, %v3354
    %v3385 = vpack.c.b16 %v3358, %v3355
    %v3386 = vpack.c.b16 %v3359, %v3356
    %v3387 = vpack.c.b16 %v3363, %v3360
    %v3388 = vpack.c.b16 %v3364, %v3361
    %v3389 = vpack.c.b16 %v3365, %v3362
    %3414 = vmatprep.subr.bf16.mxu0 %v3388
    %3415 = vmatpush1.bf16.msra.mxu0 %v3387
    %3416 = vmatprep.subr.bf16.mxu0 %v3385
    %3417 = vmatpush1.bf16.msra.mxu0 %v3384
    %3418 = vmatprep.subr.bf16.mxu0 %v3382
    %3419 = vmatpush1.bf16.msra.mxu0 %v3381
    %3420 = vmatprep.subr.bf16.mxu0 %v3379
    %3421 = vmatpush1.bf16.msra.mxu0 %v3378
    %3422 = vmatprep.subr.bf16.mxu0 %v3376
    %3423 = vmatpush1.bf16.msra.mxu0 %v3375
    %3424 = vmatprep.subr.bf16.mxu0 %v3373
    %3425 = vmatpush1.bf16.msra.mxu0 %v3372
    %3426 = vmatprep.subr.bf16.mxu0 %v3370
    %3427 = vmatpush1.bf16.msra.mxu0 %v3369
    %3428 = vmatprep.subr.bf16.mxu0 %v3367
    %3429 = vmatpush1.bf16.msra.mxu0 %v3366
    %3430 = vmatprep.subr.bf16.mxu0 0
    %3431 = vmatpush2.bf16.msra.mxu0 0
    %3432 = vmatprep.subr.bf16.mxu0 0
    %3433 = vmatpush2.bf16.msra.mxu0 0
    %3434 = vmatprep.subr.bf16.mxu0 0
    %3435 = vmatpush2.bf16.msra.mxu0 0
    %3436 = vmatprep.subr.bf16.mxu0 0
    %3437 = vmatpush2.bf16.msra.mxu0 0
    %3438 = vmatprep.subr.bf16.mxu0 0
    %3439 = vmatpush2.bf16.msra.mxu0 0
    %3440 = vmatprep.subr.bf16.mxu0 0
    %3441 = vmatpush2.bf16.msra.mxu0 0
    %3442 = vmatprep.subr.bf16.mxu0 0
    %3443 = vmatpush2.bf16.msra.mxu0 0
    %3444 = vmatprep.subr.bf16.mxu0 0
    %3445 = vmatpush2.bf16.msra.mxu0 0
    %3446 = vmatprep.mubr.bf16.mxu0 0
    %3447 = vmatmul.mubr.bf16.gmra.mxu0 %v3285
    %v3448 = vpop.f32.mrf.mxu0
    %v3449 = vadd.f32 0.0, %v3448
    %v3450 = vpop.f32.mrf.mxu0
    %v3451 = vadd.f32 0.0, %v3450
    %v3452 = vpop.f32.mrf.mxu0
    %v3453 = vpop.f32.mrf.mxu0
    %3454 = vdwg.mxu0
    %3455 = vmatprep.subr.bf16.mxu0 0
    %3456 = vmatpush1.bf16.msra.mxu0 %v3389
    %3457 = vmatprep.subr.bf16.mxu0 0
    %3458 = vmatpush1.bf16.msra.mxu0 %v3386
    %3459 = vmatprep.subr.bf16.mxu0 0
    %3460 = vmatpush1.bf16.msra.mxu0 %v3383
    %3461 = vmatprep.subr.bf16.mxu0 0
    %3462 = vmatpush1.bf16.msra.mxu0 %v3380
    %3463 = vmatprep.subr.bf16.mxu0 0
    %3464 = vmatpush1.bf16.msra.mxu0 %v3377
    %3465 = vmatprep.subr.bf16.mxu0 0
    %3466 = vmatpush1.bf16.msra.mxu0 %v3374
    %3467 = vmatprep.subr.bf16.mxu0 0
    %3468 = vmatpush1.bf16.msra.mxu0 %v3371
    %3469 = vmatprep.subr.bf16.mxu0 0
    %3470 = vmatpush1.bf16.msra.mxu0 %v3368
    %3471 = vmatprep.subr.bf16.mxu0 0
    %3472 = vmatpush2.bf16.msra.mxu0 0
    %3473 = vmatprep.subr.bf16.mxu0 0
    %3474 = vmatpush2.bf16.msra.mxu0 0
    %3475 = vmatprep.subr.bf16.mxu0 0
    %3476 = vmatpush2.bf16.msra.mxu0 0
    %3477 = vmatprep.subr.bf16.mxu0 0
    %3478 = vmatpush2.bf16.msra.mxu0 0
    %3479 = vmatprep.subr.bf16.mxu0 0
    %3480 = vmatpush2.bf16.msra.mxu0 0
    %3481 = vmatprep.subr.bf16.mxu0 0
    %3482 = vmatpush2.bf16.msra.mxu0 0
    %3483 = vmatprep.subr.bf16.mxu0 0
    %3484 = vmatpush2.bf16.msra.mxu0 0
    %3485 = vmatprep.subr.bf16.mxu0 0
    %3486 = vmatpush2.bf16.msra.mxu0 0
    %3487 = vmatprep.mubr.bf16.mxu0 0
    %3488 = vmatmul.mubr.bf16.gmra.mxu0 %v3285
    %v3489 = vpop.f32.mrf.mxu0
    %v3490 = vadd.f32 0.0, %v3489
    %v3491 = vpop.f32.mrf.mxu0
    %v3492 = vpop.f32.mrf.mxu0
    %v3493 = vpop.f32.mrf.mxu0
    %3494 = vdwg.mxu0
    %v3495 = vadd.f32 %v3250, %v3449
    %v3496 = vmul.f32 %v3495, 0.5
    %v3497 = vtanh.pop %v3496
    %v3498 = vadd.f32 %v3497, 1.0
    %v3499 = vmul.f32 %v3498, 0.5
    %v3500 = vadd.f32 %v3251, %v3451
    %v3501 = vmul.f32 %v3500, 0.5
    %v3502 = vtanh.pop %v3501
    %v3503 = vadd.f32 %v3502, 1.0
    %v3504 = vmul.f32 %v3503, 0.5
    %v3505 = vadd.f32 %v3490, %v1916
    %v3506 = vmul.f32 %v3499, %v3505
    %v3507 = vadd.f32 %v3252, %v3506
    %v3508 = vtanh.pop %v3507
    %v3509 = vsub.f32 1.0, %v3504
    %v3510 = vmul.f32 %v3509, %v3508
    %v3511 = vmul.f32 %v3504, %v3249
    %v3512 = vadd.f32 %v3510, %v3511
    %3513 = vst [vmem:[#allocation3 + $0x28] sm:$0xff] %v3512
    %v3514 = vld [vmem:[#allocation4 + $0x30] sm:$0xff]
    %v3515 = vmul.f32 %v3512, %v3514
    %v3516 = vld [vmem:[#allocation2 + $0x90] sm:$0xff]
    %v3517 = vld [vmem:[#allocation2 + $0x98] sm:$0xff]
    %v3518 = vld [vmem:[#allocation2 + $0xa0] sm:$0xff]
    %v3519 = vld [vmem:[#allocation22] sm:$0xff]
    %v3520 = vld [vmem:[#allocation22 + $0x8] sm:$0xf]
    %v3521 = vld [vmem:[#allocation22 + $0xc] sm:$0xff]
    %v3522 = vld [vmem:[#allocation22 + $0x14] sm:$0xf]
    %v3523 = vld [vmem:[#allocation22 + $0x18] sm:$0xff]
    %v3524 = vld [vmem:[#allocation22 + $0x20] sm:$0xf]
    %v3525 = vld [vmem:[#allocation22 + $0x24] sm:$0xff]
    %v3526 = vld [vmem:[#allocation22 + $0x2c] sm:$0xf]
    %v3527 = vld [vmem:[#allocation22 + $0x30] sm:$0xff]
    %v3528 = vld [vmem:[#allocation22 + $0x38] sm:$0xf]
    %v3529 = vld [vmem:[#allocation22 + $0x3c] sm:$0xff]
    %v3530 = vld [vmem:[#allocation22 + $0x44] sm:$0xf]
    %v3531 = vld [vmem:[#allocation22 + $0x48] sm:$0xff]
    %v3532 = vld [vmem:[#allocation22 + $0x50] sm:$0xf]
    %v3533 = vld [vmem:[#allocation22 + $0x54] sm:$0xff]
    %v3534 = vld [vmem:[#allocation22 + $0x5c] sm:$0xf]
    %v3535 = vld [vmem:[#allocation22 + $0x60] sm:$0xff]
    %v3536 = vld [vmem:[#allocation22 + $0x68] sm:$0xf]
    %v3537 = vld [vmem:[#allocation22 + $0x6c] sm:$0xff]
    %v3538 = vld [vmem:[#allocation22 + $0x74] sm:$0xf]
    %v3539 = vld [vmem:[#allocation22 + $0x78] sm:$0xff]
    %v3540 = vld [vmem:[#allocation22 + $0x80] sm:$0xf]
    %v3541 = vld [vmem:[#allocation22 + $0x84] sm:$0xff]
    %v3542 = vld [vmem:[#allocation22 + $0x8c] sm:$0xf]
    %v3543 = vld [vmem:[#allocation22 + $0x90] sm:$0xff]
    %v3544 = vld [vmem:[#allocation22 + $0x98] sm:$0xf]
    %v3545 = vld [vmem:[#allocation22 + $0x9c] sm:$0xff]
    %v3546 = vld [vmem:[#allocation22 + $0xa4] sm:$0xf]
    %v3547 = vld [vmem:[#allocation22 + $0xa8] sm:$0xff]
    %v3548 = vld [vmem:[#allocation22 + $0xb0] sm:$0xf]
    %v3549 = vld [vmem:[#allocation22 + $0xb4] sm:$0xff]
    %v3550 = vld [vmem:[#allocation22 + $0xbc] sm:$0xf]
    %v3551 = vpack.c.bf16 %v3515, %v3515
    %v3584 = vunpack.c.l.b16 %v3519
    %v3585 = vunpack.c.h.b16 %v3519
    %v3586 = vunpack.c.l.b16 %v3520
    %v3587 = vunpack.c.l.b16 %v3521
    %v3588 = vunpack.c.h.b16 %v3521
    %v3589 = vunpack.c.l.b16 %v3522
    %v3590 = vunpack.c.l.b16 %v3523
    %v3591 = vunpack.c.h.b16 %v3523
    %v3592 = vunpack.c.l.b16 %v3524
    %v3593 = vunpack.c.l.b16 %v3525
    %v3594 = vunpack.c.h.b16 %v3525
    %v3595 = vunpack.c.l.b16 %v3526
    %v3596 = vunpack.c.l.b16 %v3527
    %v3597 = vunpack.c.h.b16 %v3527
    %v3598 = vunpack.c.l.b16 %v3528
    %v3599 = vunpack.c.l.b16 %v3529
    %v3600 = vunpack.c.h.b16 %v3529
    %v3601 = vunpack.c.l.b16 %v3530
    %v3602 = vunpack.c.l.b16 %v3531
    %v3603 = vunpack.c.h.b16 %v3531
    %v3604 = vunpack.c.l.b16 %v3532
    %v3605 = vunpack.c.l.b16 %v3533
    %v3606 = vunpack.c.h.b16 %v3533
    %v3607 = vunpack.c.l.b16 %v3534
    %v3608 = vunpack.c.l.b16 %v3535
    %v3609 = vunpack.c.h.b16 %v3535
    %v3610 = vunpack.c.l.b16 %v3536
    %v3611 = vunpack.c.l.b16 %v3537
    %v3612 = vunpack.c.h.b16 %v3537
    %v3613 = vunpack.c.l.b16 %v3538
    %v3614 = vunpack.c.l.b16 %v3539
    %v3615 = vunpack.c.h.b16 %v3539
    %v3616 = vunpack.c.l.b16 %v3540
    %v3617 = vunpack.c.l.b16 %v3541
    %v3618 = vunpack.c.h.b16 %v3541
    %v3619 = vunpack.c.l.b16 %v3542
    %v3620 = vunpack.c.l.b16 %v3543
    %v3621 = vunpack.c.h.b16 %v3543
    %v3622 = vunpack.c.l.b16 %v3544
    %v3623 = vunpack.c.l.b16 %v3545
    %v3624 = vunpack.c.h.b16 %v3545
    %v3625 = vunpack.c.l.b16 %v3546
    %v3626 = vunpack.c.l.b16 %v3547
    %v3627 = vunpack.c.h.b16 %v3547
    %v3628 = vunpack.c.l.b16 %v3548
    %v3629 = vunpack.c.l.b16 %v3549
    %v3630 = vunpack.c.h.b16 %v3549
    %v3631 = vunpack.c.l.b16 %v3550
    %v3632 = vpack.c.b16 %v3587, %v3584
    %v3633 = vpack.c.b16 %v3588, %v3585
    %v3634 = vpack.c.b16 %v3589, %v3586
    %v3635 = vpack.c.b16 %v3593, %v3590
    %v3636 = vpack.c.b16 %v3594, %v3591
    %v3637 = vpack.c.b16 %v3595, %v3592
    %v3638 = vpack.c.b16 %v3599, %v3596
    %v3639 = vpack.c.b16 %v3600, %v3597
    %v3640 = vpack.c.b16 %v3601, %v3598
    %v3641 = vpack.c.b16 %v3605, %v3602
    %v3642 = vpack.c.b16 %v3606, %v3603
    %v3643 = vpack.c.b16 %v3607, %v3604
    %v3644 = vpack.c.b16 %v3611, %v3608
    %v3645 = vpack.c.b16 %v3612, %v3609
    %v3646 = vpack.c.b16 %v3613, %v3610
    %v3647 = vpack.c.b16 %v3617, %v3614
    %v3648 = vpack.c.b16 %v3618, %v3615
    %v3649 = vpack.c.b16 %v3619, %v3616
    %v3650 = vpack.c.b16 %v3623, %v3620
    %v3651 = vpack.c.b16 %v3624, %v3621
    %v3652 = vpack.c.b16 %v3625, %v3622
    %v3653 = vpack.c.b16 %v3629, %v3626
    %v3654 = vpack.c.b16 %v3630, %v3627
    %v3655 = vpack.c.b16 %v3631, %v3628
    %3680 = vmatprep.subr.bf16.mxu0 %v3654
    %3681 = vmatpush1.bf16.msra.mxu0 %v3653
    %3682 = vmatprep.subr.bf16.mxu0 %v3651
    %3683 = vmatpush1.bf16.msra.mxu0 %v3650
    %3684 = vmatprep.subr.bf16.mxu0 %v3648
    %3685 = vmatpush1.bf16.msra.mxu0 %v3647
    %3686 = vmatprep.subr.bf16.mxu0 %v3645
    %3687 = vmatpush1.bf16.msra.mxu0 %v3644
    %3688 = vmatprep.subr.bf16.mxu0 %v3642
    %3689 = vmatpush1.bf16.msra.mxu0 %v3641
    %3690 = vmatprep.subr.bf16.mxu0 %v3639
    %3691 = vmatpush1.bf16.msra.mxu0 %v3638
    %3692 = vmatprep.subr.bf16.mxu0 %v3636
    %3693 = vmatpush1.bf16.msra.mxu0 %v3635
    %3694 = vmatprep.subr.bf16.mxu0 %v3633
    %3695 = vmatpush1.bf16.msra.mxu0 %v3632
    %3696 = vmatprep.subr.bf16.mxu0 0
    %3697 = vmatpush2.bf16.msra.mxu0 0
    %3698 = vmatprep.subr.bf16.mxu0 0
    %3699 = vmatpush2.bf16.msra.mxu0 0
    %3700 = vmatprep.subr.bf16.mxu0 0
    %3701 = vmatpush2.bf16.msra.mxu0 0
    %3702 = vmatprep.subr.bf16.mxu0 0
    %3703 = vmatpush2.bf16.msra.mxu0 0
    %3704 = vmatprep.subr.bf16.mxu0 0
    %3705 = vmatpush2.bf16.msra.mxu0 0
    %3706 = vmatprep.subr.bf16.mxu0 0
    %3707 = vmatpush2.bf16.msra.mxu0 0
    %3708 = vmatprep.subr.bf16.mxu0 0
    %3709 = vmatpush2.bf16.msra.mxu0 0
    %3710 = vmatprep.subr.bf16.mxu0 0
    %3711 = vmatpush2.bf16.msra.mxu0 0
    %3712 = vmatprep.mubr.bf16.mxu0 0
    %3713 = vmatmul.mubr.bf16.gmra.mxu0 %v3551
    %v3714 = vpop.f32.mrf.mxu0
    %v3715 = vadd.f32 0.0, %v3714
    %v3716 = vpop.f32.mrf.mxu0
    %v3717 = vadd.f32 0.0, %v3716
    %v3718 = vpop.f32.mrf.mxu0
    %v3719 = vpop.f32.mrf.mxu0
    %3720 = vdwg.mxu0
    %3721 = vmatprep.subr.bf16.mxu0 0
    %3722 = vmatpush1.bf16.msra.mxu0 %v3655
    %3723 = vmatprep.subr.bf16.mxu0 0
    %3724 = vmatpush1.bf16.msra.mxu0 %v3652
    %3725 = vmatprep.subr.bf16.mxu0 0
    %3726 = vmatpush1.bf16.msra.mxu0 %v3649
    %3727 = vmatprep.subr.bf16.mxu0 0
    %3728 = vmatpush1.bf16.msra.mxu0 %v3646
    %3729 = vmatprep.subr.bf16.mxu0 0
    %3730 = vmatpush1.bf16.msra.mxu0 %v3643
    %3731 = vmatprep.subr.bf16.mxu0 0
    %3732 = vmatpush1.bf16.msra.mxu0 %v3640
    %3733 = vmatprep.subr.bf16.mxu0 0
    %3734 = vmatpush1.bf16.msra.mxu0 %v3637
    %3735 = vmatprep.subr.bf16.mxu0 0
    %3736 = vmatpush1.bf16.msra.mxu0 %v3634
    %3737 = vmatprep.subr.bf16.mxu0 0
    %3738 = vmatpush2.bf16.msra.mxu0 0
    %3739 = vmatprep.subr.bf16.mxu0 0
    %3740 = vmatpush2.bf16.msra.mxu0 0
    %3741 = vmatprep.subr.bf16.mxu0 0
    %3742 = vmatpush2.bf16.msra.mxu0 0
    %3743 = vmatprep.subr.bf16.mxu0 0
    %3744 = vmatpush2.bf16.msra.mxu0 0
    %3745 = vmatprep.subr.bf16.mxu0 0
    %3746 = vmatpush2.bf16.msra.mxu0 0
    %3747 = vmatprep.subr.bf16.mxu0 0
    %3748 = vmatpush2.bf16.msra.mxu0 0
    %3749 = vmatprep.subr.bf16.mxu0 0
    %3750 = vmatpush2.bf16.msra.mxu0 0
    %3751 = vmatprep.subr.bf16.mxu0 0
    %3752 = vmatpush2.bf16.msra.mxu0 0
    %3753 = vmatprep.mubr.bf16.mxu0 0
    %3754 = vmatmul.mubr.bf16.gmra.mxu0 %v3551
    %v3755 = vpop.f32.mrf.mxu0
    %v3756 = vadd.f32 0.0, %v3755
    %v3757 = vpop.f32.mrf.mxu0
    %v3758 = vpop.f32.mrf.mxu0
    %v3759 = vpop.f32.mrf.mxu0
    %3760 = vdwg.mxu0
    %v3761 = vadd.f32 %v3516, %v3715
    %v3762 = vmul.f32 %v3761, 0.5
    %v3763 = vtanh.pop %v3762
    %v3764 = vadd.f32 %v3763, 1.0
    %v3765 = vmul.f32 %v3764, 0.5
    %v3766 = vadd.f32 %v3517, %v3717
    %v3767 = vmul.f32 %v3766, 0.5
    %v3768 = vtanh.pop %v3767
    %v3769 = vadd.f32 %v3768, 1.0
    %v3770 = vmul.f32 %v3769, 0.5
    %v3771 = vadd.f32 %v3756, %v1916
    %v3772 = vmul.f32 %v3765, %v3771
    %v3773 = vadd.f32 %v3518, %v3772
    %v3774 = vtanh.pop %v3773
    %v3775 = vsub.f32 1.0, %v3770
    %v3776 = vmul.f32 %v3775, %v3774
    %v3777 = vmul.f32 %v3770, %v3515
    %v3778 = vadd.f32 %v3776, %v3777
    %3779 = vst [vmem:[#allocation3 + $0x30] sm:$0xff] %v3778
    %v3780 = vld [vmem:[#allocation4 + $0x38] sm:$0xff]
    %v3781 = vmul.f32 %v3778, %v3780
    %v3782 = vld [vmem:[#allocation2 + $0xa8] sm:$0xff]
    %v3783 = vld [vmem:[#allocation2 + $0xb0] sm:$0xff]
    %v3784 = vld [vmem:[#allocation2 + $0xb8] sm:$0xff]
    %v3785 = vld [vmem:[#allocation22] sm:$0xff]
    %v3786 = vld [vmem:[#allocation22 + $0x8] sm:$0xf]
    %v3787 = vld [vmem:[#allocation22 + $0xc] sm:$0xff]
    %v3788 = vld [vmem:[#allocation22 + $0x14] sm:$0xf]
    %v3789 = vld [vmem:[#allocation22 + $0x18] sm:$0xff]
    %v3790 = vld [vmem:[#allocation22 + $0x20] sm:$0xf]
    %v3791 = vld [vmem:[#allocation22 + $0x24] sm:$0xff]
    %v3792 = vld [vmem:[#allocation22 + $0x2c] sm:$0xf]
    %v3793 = vld [vmem:[#allocation22 + $0x30] sm:$0xff]
    %v3794 = vld [vmem:[#allocation22 + $0x38] sm:$0xf]
    %v3795 = vld [vmem:[#allocation22 + $0x3c] sm:$0xff]
    %v3796 = vld [vmem:[#allocation22 + $0x44] sm:$0xf]
    %v3797 = vld [vmem:[#allocation22 + $0x48] sm:$0xff]
    %v3798 = vld [vmem:[#allocation22 + $0x50] sm:$0xf]
    %v3799 = vld [vmem:[#allocation22 + $0x54] sm:$0xff]
    %v3800 = vld [vmem:[#allocation22 + $0x5c] sm:$0xf]
    %v3801 = vld [vmem:[#allocation22 + $0x60] sm:$0xff]
    %v3802 = vld [vmem:[#allocation22 + $0x68] sm:$0xf]
    %v3803 = vld [vmem:[#allocation22 + $0x6c] sm:$0xff]
    %v3804 = vld [vmem:[#allocation22 + $0x74] sm:$0xf]
    %v3805 = vld [vmem:[#allocation22 + $0x78] sm:$0xff]
    %v3806 = vld [vmem:[#allocation22 + $0x80] sm:$0xf]
    %v3807 = vld [vmem:[#allocation22 + $0x84] sm:$0xff]
    %v3808 = vld [vmem:[#allocation22 + $0x8c] sm:$0xf]
    %v3809 = vld [vmem:[#allocation22 + $0x90] sm:$0xff]
    %v3810 = vld [vmem:[#allocation22 + $0x98] sm:$0xf]
    %v3811 = vld [vmem:[#allocation22 + $0x9c] sm:$0xff]
    %v3812 = vld [vmem:[#allocation22 + $0xa4] sm:$0xf]
    %v3813 = vld [vmem:[#allocation22 + $0xa8] sm:$0xff]
    %v3814 = vld [vmem:[#allocation22 + $0xb0] sm:$0xf]
    %v3815 = vld [vmem:[#allocation22 + $0xb4] sm:$0xff]
    %v3816 = vld [vmem:[#allocation22 + $0xbc] sm:$0xf]
    %v3817 = vpack.c.bf16 %v3781, %v3781
    %v3850 = vunpack.c.l.b16 %v3785
    %v3851 = vunpack.c.h.b16 %v3785
    %v3852 = vunpack.c.l.b16 %v3786
    %v3853 = vunpack.c.l.b16 %v3787
    %v3854 = vunpack.c.h.b16 %v3787
    %v3855 = vunpack.c.l.b16 %v3788
    %v3856 = vunpack.c.l.b16 %v3789
    %v3857 = vunpack.c.h.b16 %v3789
    %v3858 = vunpack.c.l.b16 %v3790
    %v3859 = vunpack.c.l.b16 %v3791
    %v3860 = vunpack.c.h.b16 %v3791
    %v3861 = vunpack.c.l.b16 %v3792
    %v3862 = vunpack.c.l.b16 %v3793
    %v3863 = vunpack.c.h.b16 %v3793
    %v3864 = vunpack.c.l.b16 %v3794
    %v3865 = vunpack.c.l.b16 %v3795
    %v3866 = vunpack.c.h.b16 %v3795
    %v3867 = vunpack.c.l.b16 %v3796
    %v3868 = vunpack.c.l.b16 %v3797
    %v3869 = vunpack.c.h.b16 %v3797
    %v3870 = vunpack.c.l.b16 %v3798
    %v3871 = vunpack.c.l.b16 %v3799
    %v3872 = vunpack.c.h.b16 %v3799
    %v3873 = vunpack.c.l.b16 %v3800
    %v3874 = vunpack.c.l.b16 %v3801
    %v3875 = vunpack.c.h.b16 %v3801
    %v3876 = vunpack.c.l.b16 %v3802
    %v3877 = vunpack.c.l.b16 %v3803
    %v3878 = vunpack.c.h.b16 %v3803
    %v3879 = vunpack.c.l.b16 %v3804
    %v3880 = vunpack.c.l.b16 %v3805
    %v3881 = vunpack.c.h.b16 %v3805
    %v3882 = vunpack.c.l.b16 %v3806
    %v3883 = vunpack.c.l.b16 %v3807
    %v3884 = vunpack.c.h.b16 %v3807
    %v3885 = vunpack.c.l.b16 %v3808
    %v3886 = vunpack.c.l.b16 %v3809
    %v3887 = vunpack.c.h.b16 %v3809
    %v3888 = vunpack.c.l.b16 %v3810
    %v3889 = vunpack.c.l.b16 %v3811
    %v3890 = vunpack.c.h.b16 %v3811
    %v3891 = vunpack.c.l.b16 %v3812
    %v3892 = vunpack.c.l.b16 %v3813
    %v3893 = vunpack.c.h.b16 %v3813
    %v3894 = vunpack.c.l.b16 %v3814
    %v3895 = vunpack.c.l.b16 %v3815
    %v3896 = vunpack.c.h.b16 %v3815
    %v3897 = vunpack.c.l.b16 %v3816
    %v3898 = vpack.c.b16 %v3853, %v3850
    %v3899 = vpack.c.b16 %v3854, %v3851
    %v3900 = vpack.c.b16 %v3855, %v3852
    %v3901 = vpack.c.b16 %v3859, %v3856
    %v3902 = vpack.c.b16 %v3860, %v3857
    %v3903 = vpack.c.b16 %v3861, %v3858
    %v3904 = vpack.c.b16 %v3865, %v3862
    %v3905 = vpack.c.b16 %v3866, %v3863
    %v3906 = vpack.c.b16 %v3867, %v3864
    %v3907 = vpack.c.b16 %v3871, %v3868
    %v3908 = vpack.c.b16 %v3872, %v3869
    %v3909 = vpack.c.b16 %v3873, %v3870
    %v3910 = vpack.c.b16 %v3877, %v3874
    %v3911 = vpack.c.b16 %v3878, %v3875
    %v3912 = vpack.c.b16 %v3879, %v3876
    %v3913 = vpack.c.b16 %v3883, %v3880
    %v3914 = vpack.c.b16 %v3884, %v3881
    %v3915 = vpack.c.b16 %v3885, %v3882
    %v3916 = vpack.c.b16 %v3889, %v3886
    %v3917 = vpack.c.b16 %v3890, %v3887
    %v3918 = vpack.c.b16 %v3891, %v3888
    %v3919 = vpack.c.b16 %v3895, %v3892
    %v3920 = vpack.c.b16 %v3896, %v3893
    %v3921 = vpack.c.b16 %v3897, %v3894
    %3946 = vmatprep.subr.bf16.mxu0 %v3920
    %3947 = vmatpush1.bf16.msra.mxu0 %v3919
    %3948 = vmatprep.subr.bf16.mxu0 %v3917
    %3949 = vmatpush1.bf16.msra.mxu0 %v3916
    %3950 = vmatprep.subr.bf16.mxu0 %v3914
    %3951 = vmatpush1.bf16.msra.mxu0 %v3913
    %3952 = vmatprep.subr.bf16.mxu0 %v3911
    %3953 = vmatpush1.bf16.msra.mxu0 %v3910
    %3954 = vmatprep.subr.bf16.mxu0 %v3908
    %3955 = vmatpush1.bf16.msra.mxu0 %v3907
    %3956 = vmatprep.subr.bf16.mxu0 %v3905
    %3957 = vmatpush1.bf16.msra.mxu0 %v3904
    %3958 = vmatprep.subr.bf16.mxu0 %v3902
    %3959 = vmatpush1.bf16.msra.mxu0 %v3901
    %3960 = vmatprep.subr.bf16.mxu0 %v3899
    %3961 = vmatpush1.bf16.msra.mxu0 %v3898
    %3962 = vmatprep.subr.bf16.mxu0 0
    %3963 = vmatpush2.bf16.msra.mxu0 0
    %3964 = vmatprep.subr.bf16.mxu0 0
    %3965 = vmatpush2.bf16.msra.mxu0 0
    %3966 = vmatprep.subr.bf16.mxu0 0
    %3967 = vmatpush2.bf16.msra.mxu0 0
    %3968 = vmatprep.subr.bf16.mxu0 0
    %3969 = vmatpush2.bf16.msra.mxu0 0
    %3970 = vmatprep.subr.bf16.mxu0 0
    %3971 = vmatpush2.bf16.msra.mxu0 0
    %3972 = vmatprep.subr.bf16.mxu0 0
    %3973 = vmatpush2.bf16.msra.mxu0 0
    %3974 = vmatprep.subr.bf16.mxu0 0
    %3975 = vmatpush2.bf16.msra.mxu0 0
    %3976 = vmatprep.subr.bf16.mxu0 0
    %3977 = vmatpush2.bf16.msra.mxu0 0
    %3978 = vmatprep.mubr.bf16.mxu0 0
    %3979 = vmatmul.mubr.bf16.gmra.mxu0 %v3817
    %v3980 = vpop.f32.mrf.mxu0
    %v3981 = vadd.f32 0.0, %v3980
    %v3982 = vpop.f32.mrf.mxu0
    %v3983 = vadd.f32 0.0, %v3982
    %v3984 = vpop.f32.mrf.mxu0
    %v3985 = vpop.f32.mrf.mxu0
    %3986 = vdwg.mxu0
    %3987 = vmatprep.subr.bf16.mxu0 0
    %3988 = vmatpush1.bf16.msra.mxu0 %v3921
    %3989 = vmatprep.subr.bf16.mxu0 0
    %3990 = vmatpush1.bf16.msra.mxu0 %v3918
    %3991 = vmatprep.subr.bf16.mxu0 0
    %3992 = vmatpush1.bf16.msra.mxu0 %v3915
    %3993 = vmatprep.subr.bf16.mxu0 0
    %3994 = vmatpush1.bf16.msra.mxu0 %v3912
    %3995 = vmatprep.subr.bf16.mxu0 0
    %3996 = vmatpush1.bf16.msra.mxu0 %v3909
    %3997 = vmatprep.subr.bf16.mxu0 0
    %3998 = vmatpush1.bf16.msra.mxu0 %v3906
    %3999 = vmatprep.subr.bf16.mxu0 0
    %4000 = vmatpush1.bf16.msra.mxu0 %v3903
    %4001 = vmatprep.subr.bf16.mxu0 0
    %4002 = vmatpush1.bf16.msra.mxu0 %v3900
    %4003 = vmatprep.subr.bf16.mxu0 0
    %4004 = vmatpush2.bf16.msra.mxu0 0
    %4005 = vmatprep.subr.bf16.mxu0 0
    %4006 = vmatpush2.bf16.msra.mxu0 0
    %4007 = vmatprep.subr.bf16.mxu0 0
    %4008 = vmatpush2.bf16.msra.mxu0 0
    %4009 = vmatprep.subr.bf16.mxu0 0
    %4010 = vmatpush2.bf16.msra.mxu0 0
    %4011 = vmatprep.subr.bf16.mxu0 0
    %4012 = vmatpush2.bf16.msra.mxu0 0
    %4013 = vmatprep.subr.bf16.mxu0 0
    %4014 = vmatpush2.bf16.msra.mxu0 0
    %4015 = vmatprep.subr.bf16.mxu0 0
    %4016 = vmatpush2.bf16.msra.mxu0 0
    %4017 = vmatprep.subr.bf16.mxu0 0
    %4018 = vmatpush2.bf16.msra.mxu0 0
    %4019 = vmatprep.mubr.bf16.mxu0 0
    %4020 = vmatmul.mubr.bf16.gmra.mxu0 %v3817
    %v4021 = vpop.f32.mrf.mxu0
    %v4022 = vadd.f32 0.0, %v4021
    %v4023 = vpop.f32.mrf.mxu0
    %v4024 = vpop.f32.mrf.mxu0
    %v4025 = vpop.f32.mrf.mxu0
    %4026 = vdwg.mxu0
    %v4027 = vadd.f32 %v3782, %v3981
    %v4028 = vmul.f32 %v4027, 0.5
    %v4029 = vtanh.pop %v4028
    %v4030 = vadd.f32 %v4029, 1.0
    %v4031 = vmul.f32 %v4030, 0.5
    %v4032 = vadd.f32 %v3783, %v3983
    %v4033 = vmul.f32 %v4032, 0.5
    %v4034 = vtanh.pop %v4033
    %v4035 = vadd.f32 %v4034, 1.0
    %v4036 = vmul.f32 %v4035, 0.5
    %v4037 = vadd.f32 %v4022, %v1916
    %v4038 = vmul.f32 %v4031, %v4037
    %v4039 = vadd.f32 %v3784, %v4038
    %v4040 = vtanh.pop %v4039
    %v4041 = vsub.f32 1.0, %v4036
    %v4042 = vmul.f32 %v4041, %v4040
    %v4043 = vmul.f32 %v4036, %v3781
    %v4044 = vadd.f32 %v4042, %v4043
    %4045 = vst [vmem:[#allocation3 + $0x38] sm:$0xff] %v4044
    %4046 = vst [vmem:[#allocation28] sm:$0xff] %v4044
    %v4047 = vld [vmem:[#allocation3] sm:$0xff]
    %v4048 = vld [vmem:[#allocation3 + $0x8] sm:$0xff]
    %v4049 = vld [vmem:[#allocation3 + $0x10] sm:$0xff]
    %v4050 = vld [vmem:[#allocation3 + $0x18] sm:$0xff]
    %v4051 = vld [vmem:[#allocation3 + $0x20] sm:$0xff]
    %v4052 = vld [vmem:[#allocation3 + $0x28] sm:$0xff]
    %v4053 = vld [vmem:[#allocation3 + $0x30] sm:$0xff]
    %v4054 = vld [vmem:[#allocation3 + $0x38] sm:$0xff]
    %v4055 = vld [vmem:[%s17] sm:$0x1]
    %v4056 = vld [vmem:[%s18] sm:$0x1]
    %v4057 = vsel %vm398, %v4047, 0.0
    %4058 = vadd.xlane.f32.xlu0 %v4057
    %v4059 = vpop.xlane.xlu0 %4058
    %v4060 = vsel %vm398, %v4048, 0.0
    %4061 = vadd.xlane.f32.xlu0 %v4060
    %v4062 = vpop.xlane.xlu0 %4061
    %v4063 = vsel %vm398, %v4049, 0.0
    %4064 = vadd.xlane.f32.xlu0 %v4063
    %v4065 = vpop.xlane.xlu0 %4064
    %v4066 = vsel %vm398, %v4050, 0.0
    %4067 = vadd.xlane.f32.xlu0 %v4066
    %v4068 = vpop.xlane.xlu0 %4067
    %v4069 = vsel %vm398, %v4051, 0.0
    %4070 = vadd.xlane.f32.xlu0 %v4069
    %v4071 = vpop.xlane.xlu0 %4070
    %v4072 = vsel %vm398, %v4052, 0.0
    %4073 = vadd.xlane.f32.xlu0 %v4072
    %v4074 = vpop.xlane.xlu0 %4073
    %v4075 = vsel %vm398, %v4053, 0.0
    %4076 = vadd.xlane.f32.xlu0 %v4075
    %v4077 = vpop.xlane.xlu0 %4076
    %v4078 = vsel %vm398, %v4054, 0.0
    %4079 = vadd.xlane.f32.xlu0 %v4078
    %v4080 = vpop.xlane.xlu0 %4079
    %v4081 = vmul.f32 %v4059, %v510
    %v4082 = vmul.f32 %v4062, %v510
    %v4083 = vmul.f32 %v4065, %v510
    %v4084 = vmul.f32 %v4068, %v510
    %v4085 = vmul.f32 %v4071, %v510
    %v4086 = vmul.f32 %v4074, %v510
    %v4087 = vmul.f32 %v4077, %v510
    %v4088 = vmul.f32 %v4080, %v510
    %v4089 = vsub.f32 %v4047, %v4081
    %v4090 = vsub.f32 %v4048, %v4082
    %v4091 = vsub.f32 %v4049, %v4083
    %v4092 = vsub.f32 %v4050, %v4084
    %v4093 = vsub.f32 %v4051, %v4085
    %v4094 = vsub.f32 %v4052, %v4086
    %v4095 = vsub.f32 %v4053, %v4087
    %v4096 = vsub.f32 %v4054, %v4088
    %v4097 = vmul.f32 %v4089, %v4089
    %v4098 = vmul.f32 %v4090, %v4090
    %v4099 = vmul.f32 %v4091, %v4091
    %v4100 = vmul.f32 %v4092, %v4092
    %v4101 = vmul.f32 %v4093, %v4093
    %v4102 = vmul.f32 %v4094, %v4094
    %v4103 = vmul.f32 %v4095, %v4095
    %v4104 = vmul.f32 %v4096, %v4096
    %v4105 = vsel %vm398, %v4097, 0.0
    %4106 = vadd.xlane.f32.xlu0 %v4105
    %v4107 = vpop.xlane.xlu0 %4106
    %v4108 = vsel %vm398, %v4098, 0.0
    %4109 = vadd.xlane.f32.xlu0 %v4108
    %v4110 = vpop.xlane.xlu0 %4109
    %v4111 = vsel %vm398, %v4099, 0.0
    %4112 = vadd.xlane.f32.xlu0 %v4111
    %v4113 = vpop.xlane.xlu0 %4112
    %v4114 = vsel %vm398, %v4100, 0.0
    %4115 = vadd.xlane.f32.xlu0 %v4114
    %v4116 = vpop.xlane.xlu0 %4115
    %v4117 = vsel %vm398, %v4101, 0.0
    %4118 = vadd.xlane.f32.xlu0 %v4117
    %v4119 = vpop.xlane.xlu0 %4118
    %v4120 = vsel %vm398, %v4102, 0.0
    %4121 = vadd.xlane.f32.xlu0 %v4120
    %v4122 = vpop.xlane.xlu0 %4121
    %v4123 = vsel %vm398, %v4103, 0.0
    %4124 = vadd.xlane.f32.xlu0 %v4123
    %v4125 = vpop.xlane.xlu0 %4124
    %v4126 = vsel %vm398, %v4104, 0.0
    %4127 = vadd.xlane.f32.xlu0 %v4126
    %v4128 = vpop.xlane.xlu0 %4127
    %v4129 = vmul.f32 %v4107, %v510
    %v4130 = vmul.f32 %v4110, %v510
    %v4131 = vmul.f32 %v4113, %v510
    %v4132 = vmul.f32 %v4116, %v510
    %v4133 = vmul.f32 %v4119, %v510
    %v4134 = vmul.f32 %v4122, %v510
    %v4135 = vmul.f32 %v4125, %v510
    %v4136 = vmul.f32 %v4128, %v510
    %v4137 = vadd.f32 %v4129, 1e-05
    %v4138 = vadd.f32 %v4130, 1e-05
    %v4139 = vadd.f32 %v4131, 1e-05
    %v4140 = vadd.f32 %v4132, 1e-05
    %v4141 = vadd.f32 %v4133, 1e-05
    %v4142 = vadd.f32 %v4134, 1e-05
    %v4143 = vadd.f32 %v4135, 1e-05
    %v4144 = vadd.f32 %v4136, 1e-05
    %v4145 = vrsqrt.pop %v4137
    %v4146 = vrsqrt.pop %v4138
    %v4147 = vrsqrt.pop %v4139
    %v4148 = vrsqrt.pop %v4140
    %v4149 = vrsqrt.pop %v4141
    %v4150 = vrsqrt.pop %v4142
    %v4151 = vrsqrt.pop %v4143
    %v4152 = vrsqrt.pop %v4144
    %v4153 = vmul.f32 %v4089, %v4145
    %v4154 = vmul.f32 %v4090, %v4146
    %v4155 = vmul.f32 %v4091, %v4147
    %v4156 = vmul.f32 %v4092, %v4148
    %v4157 = vmul.f32 %v4093, %v4149
    %v4158 = vmul.f32 %v4094, %v4150
    %v4159 = vmul.f32 %v4095, %v4151
    %v4160 = vmul.f32 %v4096, %v4152
    %v4162 = vlaneseq
    %v4163 = vshrl.u32 %v4162, 7
    %v4164 = vsub.s32 0, %v4163
    %v4165 = vrot.slane %v4055, %v4164
    %v4167 = vmul.f32 %v4153, %v4165
    %v4168 = vmul.f32 %v4154, %v4165
    %v4169 = vmul.f32 %v4155, %v4165
    %v4170 = vmul.f32 %v4156, %v4165
    %v4171 = vmul.f32 %v4157, %v4165
    %v4172 = vmul.f32 %v4158, %v4165
    %v4173 = vmul.f32 %v4159, %v4165
    %v4174 = vmul.f32 %v4160, %v4165
    %v4176 = vlaneseq
    %v4177 = vshrl.u32 %v4176, 7
    %v4178 = vsub.s32 0, %v4177
    %v4179 = vrot.slane %v4056, %v4178
    %v4181 = vadd.f32 %v4167, %v4179
    %v4182 = vadd.f32 %v4168, %v4179
    %v4183 = vadd.f32 %v4169, %v4179
    %v4184 = vadd.f32 %v4170, %v4179
    %v4185 = vadd.f32 %v4171, %v4179
    %v4186 = vadd.f32 %v4172, %v4179
    %v4187 = vadd.f32 %v4173, %v4179
    %v4188 = vadd.f32 %v4174, %v4179
    %s4189 = scalar_lea.vmem %s17, 1
    %v4190 = vld [vmem:[%s4189] sm:$0x1]
    %s4191 = scalar_lea.vmem %s18, 1
    %v4192 = vld [vmem:[%s4191] sm:$0x1]
    %4201 = vrot.lane.b32.xlu0 %v4047, 96
    %v4202 = vpop.permute.xlu0 %4201
    %4203 = vrot.lane.b32.xlu0 %v4048, 96
    %v4204 = vpop.permute.xlu0 %4203
    %4205 = vrot.lane.b32.xlu0 %v4049, 96
    %v4206 = vpop.permute.xlu0 %4205
    %4207 = vrot.lane.b32.xlu0 %v4050, 96
    %v4208 = vpop.permute.xlu0 %4207
    %4209 = vrot.lane.b32.xlu0 %v4051, 96
    %v4210 = vpop.permute.xlu0 %4209
    %4211 = vrot.lane.b32.xlu0 %v4052, 96
    %v4212 = vpop.permute.xlu0 %4211
    %4213 = vrot.lane.b32.xlu0 %v4053, 96
    %v4214 = vpop.permute.xlu0 %4213
    %4215 = vrot.lane.b32.xlu0 %v4054, 96
    %v4216 = vpop.permute.xlu0 %4215
    %v4225 = vsel %vm398, %v4202, 0.0
    %4226 = vadd.xlane.f32.xlu0 %v4225
    %v4227 = vpop.xlane.xlu0 %4226
    %v4228 = vsel %vm398, %v4204, 0.0
    %4229 = vadd.xlane.f32.xlu0 %v4228
    %v4230 = vpop.xlane.xlu0 %4229
    %v4231 = vsel %vm398, %v4206, 0.0
    %4232 = vadd.xlane.f32.xlu0 %v4231
    %v4233 = vpop.xlane.xlu0 %4232
    %v4234 = vsel %vm398, %v4208, 0.0
    %4235 = vadd.xlane.f32.xlu0 %v4234
    %v4236 = vpop.xlane.xlu0 %4235
    %v4237 = vsel %vm398, %v4210, 0.0
    %4238 = vadd.xlane.f32.xlu0 %v4237
    %v4239 = vpop.xlane.xlu0 %4238
    %v4240 = vsel %vm398, %v4212, 0.0
    %4241 = vadd.xlane.f32.xlu0 %v4240
    %v4242 = vpop.xlane.xlu0 %4241
    %v4243 = vsel %vm398, %v4214, 0.0
    %4244 = vadd.xlane.f32.xlu0 %v4243
    %v4245 = vpop.xlane.xlu0 %4244
    %v4246 = vsel %vm398, %v4216, 0.0
    %4247 = vadd.xlane.f32.xlu0 %v4246
    %v4248 = vpop.xlane.xlu0 %4247
    %v4249 = vmul.f32 %v4227, %v510
    %v4250 = vmul.f32 %v4230, %v510
    %v4251 = vmul.f32 %v4233, %v510
    %v4252 = vmul.f32 %v4236, %v510
    %v4253 = vmul.f32 %v4239, %v510
    %v4254 = vmul.f32 %v4242, %v510
    %v4255 = vmul.f32 %v4245, %v510
    %v4256 = vmul.f32 %v4248, %v510
    %v4257 = vsub.f32 %v4047, %v4249
    %v4258 = vsub.f32 %v4048, %v4250
    %v4259 = vsub.f32 %v4049, %v4251
    %v4260 = vsub.f32 %v4050, %v4252
    %v4261 = vsub.f32 %v4051, %v4253
    %v4262 = vsub.f32 %v4052, %v4254
    %v4263 = vsub.f32 %v4053, %v4255
    %v4264 = vsub.f32 %v4054, %v4256
    %v4265 = vmul.f32 %v4257, %v4257
    %v4266 = vmul.f32 %v4258, %v4258
    %v4267 = vmul.f32 %v4259, %v4259
    %v4268 = vmul.f32 %v4260, %v4260
    %v4269 = vmul.f32 %v4261, %v4261
    %v4270 = vmul.f32 %v4262, %v4262
    %v4271 = vmul.f32 %v4263, %v4263
    %v4272 = vmul.f32 %v4264, %v4264
    %4281 = vrot.lane.b32.xlu0 %v4265, 96
    %v4282 = vpop.permute.xlu0 %4281
    %4283 = vrot.lane.b32.xlu0 %v4266, 96
    %v4284 = vpop.permute.xlu0 %4283
    %4285 = vrot.lane.b32.xlu0 %v4267, 96
    %v4286 = vpop.permute.xlu0 %4285
    %4287 = vrot.lane.b32.xlu0 %v4268, 96
    %v4288 = vpop.permute.xlu0 %4287
    %4289 = vrot.lane.b32.xlu0 %v4269, 96
    %v4290 = vpop.permute.xlu0 %4289
    %4291 = vrot.lane.b32.xlu0 %v4270, 96
    %v4292 = vpop.permute.xlu0 %4291
    %4293 = vrot.lane.b32.xlu0 %v4271, 96
    %v4294 = vpop.permute.xlu0 %4293
    %4295 = vrot.lane.b32.xlu0 %v4272, 96
    %v4296 = vpop.permute.xlu0 %4295
    %v4305 = vsel %vm398, %v4282, 0.0
    %4306 = vadd.xlane.f32.xlu0 %v4305
    %v4307 = vpop.xlane.xlu0 %4306
    %v4308 = vsel %vm398, %v4284, 0.0
    %4309 = vadd.xlane.f32.xlu0 %v4308
    %v4310 = vpop.xlane.xlu0 %4309
    %v4311 = vsel %vm398, %v4286, 0.0
    %4312 = vadd.xlane.f32.xlu0 %v4311
    %v4313 = vpop.xlane.xlu0 %4312
    %v4314 = vsel %vm398, %v4288, 0.0
    %4315 = vadd.xlane.f32.xlu0 %v4314
    %v4316 = vpop.xlane.xlu0 %4315
    %v4317 = vsel %vm398, %v4290, 0.0
    %4318 = vadd.xlane.f32.xlu0 %v4317
    %v4319 = vpop.xlane.xlu0 %4318
    %v4320 = vsel %vm398, %v4292, 0.0
    %4321 = vadd.xlane.f32.xlu0 %v4320
    %v4322 = vpop.xlane.xlu0 %4321
    %v4323 = vsel %vm398, %v4294, 0.0
    %4324 = vadd.xlane.f32.xlu0 %v4323
    %v4325 = vpop.xlane.xlu0 %4324
    %v4326 = vsel %vm398, %v4296, 0.0
    %4327 = vadd.xlane.f32.xlu0 %v4326
    %v4328 = vpop.xlane.xlu0 %4327
    %v4329 = vmul.f32 %v4307, %v510
    %v4330 = vmul.f32 %v4310, %v510
    %v4331 = vmul.f32 %v4313, %v510
    %v4332 = vmul.f32 %v4316, %v510
    %v4333 = vmul.f32 %v4319, %v510
    %v4334 = vmul.f32 %v4322, %v510
    %v4335 = vmul.f32 %v4325, %v510
    %v4336 = vmul.f32 %v4328, %v510
    %v4337 = vadd.f32 %v4329, 1e-05
    %v4338 = vadd.f32 %v4330, 1e-05
    %v4339 = vadd.f32 %v4331, 1e-05
    %v4340 = vadd.f32 %v4332, 1e-05
    %v4341 = vadd.f32 %v4333, 1e-05
    %v4342 = vadd.f32 %v4334, 1e-05
    %v4343 = vadd.f32 %v4335, 1e-05
    %v4344 = vadd.f32 %v4336, 1e-05
    %v4345 = vrsqrt.pop %v4337
    %v4346 = vrsqrt.pop %v4338
    %v4347 = vrsqrt.pop %v4339
    %v4348 = vrsqrt.pop %v4340
    %v4349 = vrsqrt.pop %v4341
    %v4350 = vrsqrt.pop %v4342
    %v4351 = vrsqrt.pop %v4343
    %v4352 = vrsqrt.pop %v4344
    %v4353 = vmul.f32 %v4257, %v4345
    %v4354 = vmul.f32 %v4258, %v4346
    %v4355 = vmul.f32 %v4259, %v4347
    %v4356 = vmul.f32 %v4260, %v4348
    %v4357 = vmul.f32 %v4261, %v4349
    %v4358 = vmul.f32 %v4262, %v4350
    %v4359 = vmul.f32 %v4263, %v4351
    %v4360 = vmul.f32 %v4264, %v4352
    %v4362 = vlaneseq
    %v4363 = vshrl.u32 %v4362, 7
    %v4364 = vsub.s32 0, %v4363
    %v4365 = vrot.slane %v4190, %v4364
    %4366 = vrot.lane.b32.xlu0 %v4365, 32
    %v4367 = vpop.permute.xlu0 %4366
    %v4369 = vmul.f32 %v4353, %v4367
    %v4370 = vmul.f32 %v4354, %v4367
    %v4371 = vmul.f32 %v4355, %v4367
    %v4372 = vmul.f32 %v4356, %v4367
    %v4373 = vmul.f32 %v4357, %v4367
    %v4374 = vmul.f32 %v4358, %v4367
    %v4375 = vmul.f32 %v4359, %v4367
    %v4376 = vmul.f32 %v4360, %v4367
    %v4378 = vlaneseq
    %v4379 = vshrl.u32 %v4378, 7
    %v4380 = vsub.s32 0, %v4379
    %v4381 = vrot.slane %v4192, %v4380
    %4382 = vrot.lane.b32.xlu0 %v4381, 32
    %v4383 = vpop.permute.xlu0 %4382
    %v4385 = vadd.f32 %v4369, %v4383
    %v4386 = vadd.f32 %v4370, %v4383
    %v4387 = vadd.f32 %v4371, %v4383
    %v4388 = vadd.f32 %v4372, %v4383
    %v4389 = vadd.f32 %v4373, %v4383
    %v4390 = vadd.f32 %v4374, %v4383
    %v4391 = vadd.f32 %v4375, %v4383
    %v4392 = vadd.f32 %v4376, %v4383
    %v4393 = vld [vmem:[#allocation24] sm:$0xf]
    %v4394 = vld [vmem:[#allocation24 + $0x4] sm:$0xf]
    %v4395 = vld [vmem:[#allocation24 + $0x8] sm:$0xf]
    %v4396 = vld [vmem:[#allocation24 + $0xc] sm:$0xf]
    %v4397 = vpack.c.bf16 %v4182, %v4181
    %v4398 = vpack.c.bf16 %v4184, %v4183
    %v4399 = vpack.c.bf16 %v4186, %v4185
    %v4400 = vpack.c.bf16 %v4188, %v4187
    %v4401 = vld [vmem:[%s20] sm:$0x1]
    %v4403 = vlaneseq
    %v4404 = vshrl.u32 %v4403, 7
    %v4405 = vsub.s32 0, %v4404
    %v4406 = vrot.slane %v4401, %v4405
    %v4412 = vunpack.c.l.b16 %v4393
    %v4413 = vunpack.c.l.b16 %v4394
    %v4414 = vunpack.c.l.b16 %v4395
    %v4415 = vunpack.c.l.b16 %v4396
    %v4416 = vpack.c.b16 %v4413, %v4412
    %v4417 = vpack.c.b16 %v4415, %v4414
    %v4421 = vsel %vm398, %v4397, 0
    %v4424 = vsel %vm398, %v4398, 0
    %v4427 = vsel %vm398, %v4399, 0
    %v4430 = vsel %vm398, %v4400, 0
    %4432 = vmatprep.subr.bf16.mxu0 0
    %4433 = vmatpush1.bf16.msra.mxu0 0
    %4434 = vmatprep.subr.bf16.mxu0 0
    %4435 = vmatpush1.bf16.msra.mxu0 0
    %4436 = vmatprep.subr.bf16.mxu0 0
    %4437 = vmatpush1.bf16.msra.mxu0 0
    %4438 = vmatprep.subr.bf16.mxu0 0
    %4439 = vmatpush1.bf16.msra.mxu0 0
    %4440 = vmatprep.subr.bf16.mxu0 0
    %4441 = vmatpush1.bf16.msra.mxu0 0
    %4442 = vmatprep.subr.bf16.mxu0 0
    %4443 = vmatpush1.bf16.msra.mxu0 0
    %4444 = vmatprep.subr.bf16.mxu0 0
    %4445 = vmatpush1.bf16.msra.mxu0 %v4417
    %4446 = vmatprep.subr.bf16.mxu0 0
    %4447 = vmatpush1.bf16.msra.mxu0 %v4416
    %4448 = vmatprep.subr.bf16.mxu0 0
    %4449 = vmatpush2.bf16.msra.mxu0 0
    %4450 = vmatprep.subr.bf16.mxu0 0
    %4451 = vmatpush2.bf16.msra.mxu0 0
    %4452 = vmatprep.subr.bf16.mxu0 0
    %4453 = vmatpush2.bf16.msra.mxu0 0
    %4454 = vmatprep.subr.bf16.mxu0 0
    %4455 = vmatpush2.bf16.msra.mxu0 0
    %4456 = vmatprep.subr.bf16.mxu0 0
    %4457 = vmatpush2.bf16.msra.mxu0 0
    %4458 = vmatprep.subr.bf16.mxu0 0
    %4459 = vmatpush2.bf16.msra.mxu0 0
    %4460 = vmatprep.subr.bf16.mxu0 0
    %4461 = vmatpush2.bf16.msra.mxu0 0
    %4462 = vmatprep.subr.bf16.mxu0 0
    %4463 = vmatpush2.bf16.msra.mxu0 0
    %4464 = vmatprep.mubr.bf16.mxu0 0
    %4465 = vmatmul.mubr.bf16.gmra.mxu0 %v4421
    %v4466 = vpop.f32.mrf.mxu0
    %v4467 = vadd.f32 %v4406, %v4466
    %v4468 = vpop.f32.mrf.mxu0
    %v4469 = vpop.f32.mrf.mxu0
    %v4470 = vadd.f32 %v4406, %v4469
    %v4471 = vpop.f32.mrf.mxu0
    %4472 = vmatprep.mubr.bf16.mxu0 0
    %4473 = vmatmul.mubr.bf16.gmra.mxu0 %v4424
    %v4474 = vpop.f32.mrf.mxu0
    %v4475 = vadd.f32 %v4406, %v4474
    %v4476 = vpop.f32.mrf.mxu0
    %v4477 = vpop.f32.mrf.mxu0
    %v4478 = vadd.f32 %v4406, %v4477
    %v4479 = vpop.f32.mrf.mxu0
    %4480 = vmatprep.mubr.bf16.mxu0 0
    %4481 = vmatmul.mubr.bf16.gmra.mxu0 %v4427
    %v4482 = vpop.f32.mrf.mxu0
    %v4483 = vadd.f32 %v4406, %v4482
    %v4484 = vpop.f32.mrf.mxu0
    %v4485 = vpop.f32.mrf.mxu0
    %v4486 = vadd.f32 %v4406, %v4485
    %v4487 = vpop.f32.mrf.mxu0
    %4488 = vmatprep.mubr.bf16.mxu0 0
    %4489 = vmatmul.mubr.bf16.gmra.mxu0 %v4430
    %v4490 = vpop.f32.mrf.mxu0
    %v4491 = vadd.f32 %v4406, %v4490
    %v4492 = vpop.f32.mrf.mxu0
    %v4493 = vpop.f32.mrf.mxu0
    %v4494 = vadd.f32 %v4406, %v4493
    %v4495 = vpop.f32.mrf.mxu0
    %4496 = vdwg.mxu0
    %4497 = vst [vmem:[#allocation25] sm:$0xff] %v4467
    %4498 = vst [vmem:[#allocation25 + $0x8] sm:$0xff] %v4470
    %4499 = vst [vmem:[#allocation25 + $0x10] sm:$0xff] %v4475
    %4500 = vst [vmem:[#allocation25 + $0x18] sm:$0xff] %v4478
    %4501 = vst [vmem:[#allocation25 + $0x20] sm:$0xff] %v4483
    %4502 = vst [vmem:[#allocation25 + $0x28] sm:$0xff] %v4486
    %4503 = vst [vmem:[#allocation25 + $0x30] sm:$0xff] %v4491
    %4504 = vst [vmem:[#allocation25 + $0x38] sm:$0xff] %v4494
    %s4505 = scalar_lea.vmem [#allocation24], 16
    %v4506 = vld [vmem:[%s4505] sm:$0xf]
    %v4507 = vld [vmem:[%s4505 + $0x4] sm:$0xf]
    %v4508 = vld [vmem:[%s4505 + $0x8] sm:$0xf]
    %v4509 = vld [vmem:[%s4505 + $0xc] sm:$0xf]
    %v4510 = vpack.c.bf16 %v4386, %v4385
    %v4511 = vpack.c.bf16 %v4388, %v4387
    %v4512 = vpack.c.bf16 %v4390, %v4389
    %v4513 = vpack.c.bf16 %v4392, %v4391
    %s4514 = scalar_lea.vmem %s20, 1
    %v4515 = vld [vmem:[%s4514] sm:$0x1]
    %v4517 = vlaneseq
    %v4518 = vshrl.u32 %v4517, 7
    %v4519 = vsub.s32 0, %v4518
    %v4520 = vrot.slane %v4515, %v4519
    %4526 = vrot.lane.b32.xlu0 %v4510, 96
    %v4527 = vpop.permute.xlu0 %4526
    %4528 = vrot.lane.b32.xlu0 %v4511, 96
    %v4529 = vpop.permute.xlu0 %4528
    %4530 = vrot.lane.b32.xlu0 %v4512, 96
    %v4531 = vpop.permute.xlu0 %4530
    %4532 = vrot.lane.b32.xlu0 %v4513, 96
    %v4533 = vpop.permute.xlu0 %4532
    %v4538 = vunpack.c.l.b16 %v4506
    %v4539 = vunpack.c.l.b16 %v4507
    %v4540 = vunpack.c.l.b16 %v4508
    %v4541 = vunpack.c.l.b16 %v4509
    %v4542 = vpack.c.b16 %v4539, %v4538
    %v4543 = vpack.c.b16 %v4541, %v4540
    %v4547 = vsel %vm398, %v4527, 0
    %v4550 = vsel %vm398, %v4529, 0
    %v4553 = vsel %vm398, %v4531, 0
    %v4556 = vsel %vm398, %v4533, 0
    %4558 = vmatprep.subr.bf16.mxu0 0
    %4559 = vmatpush1.bf16.msra.mxu0 0
    %4560 = vmatprep.subr.bf16.mxu0 0
    %4561 = vmatpush1.bf16.msra.mxu0 0
    %4562 = vmatprep.subr.bf16.mxu0 0
    %4563 = vmatpush1.bf16.msra.mxu0 0
    %4564 = vmatprep.subr.bf16.mxu0 0
    %4565 = vmatpush1.bf16.msra.mxu0 0
    %4566 = vmatprep.subr.bf16.mxu0 0
    %4567 = vmatpush1.bf16.msra.mxu0 0
    %4568 = vmatprep.subr.bf16.mxu0 0
    %4569 = vmatpush1.bf16.msra.mxu0 0
    %4570 = vmatprep.subr.bf16.mxu0 0
    %4571 = vmatpush1.bf16.msra.mxu0 %v4543
    %4572 = vmatprep.subr.bf16.mxu0 0
    %4573 = vmatpush1.bf16.msra.mxu0 %v4542
    %4574 = vmatprep.subr.bf16.mxu0 0
    %4575 = vmatpush2.bf16.msra.mxu0 0
    %4576 = vmatprep.subr.bf16.mxu0 0
    %4577 = vmatpush2.bf16.msra.mxu0 0
    %4578 = vmatprep.subr.bf16.mxu0 0
    %4579 = vmatpush2.bf16.msra.mxu0 0
    %4580 = vmatprep.subr.bf16.mxu0 0
    %4581 = vmatpush2.bf16.msra.mxu0 0
    %4582 = vmatprep.subr.bf16.mxu0 0
    %4583 = vmatpush2.bf16.msra.mxu0 0
    %4584 = vmatprep.subr.bf16.mxu0 0
    %4585 = vmatpush2.bf16.msra.mxu0 0
    %4586 = vmatprep.subr.bf16.mxu0 0
    %4587 = vmatpush2.bf16.msra.mxu0 0
    %4588 = vmatprep.subr.bf16.mxu0 0
    %4589 = vmatpush2.bf16.msra.mxu0 0
    %4590 = vmatprep.mubr.bf16.mxu0 0
    %4591 = vmatmul.mubr.bf16.gmra.mxu0 %v4547
    %v4592 = vpop.f32.mrf.mxu0
    %v4593 = vadd.f32 %v4520, %v4592
    %v4594 = vpop.f32.mrf.mxu0
    %v4595 = vpop.f32.mrf.mxu0
    %v4596 = vadd.f32 %v4520, %v4595
    %v4597 = vpop.f32.mrf.mxu0
    %4598 = vmatprep.mubr.bf16.mxu0 0
    %4599 = vmatmul.mubr.bf16.gmra.mxu0 %v4550
    %v4600 = vpop.f32.mrf.mxu0
    %v4601 = vadd.f32 %v4520, %v4600
    %v4602 = vpop.f32.mrf.mxu0
    %v4603 = vpop.f32.mrf.mxu0
    %v4604 = vadd.f32 %v4520, %v4603
    %v4605 = vpop.f32.mrf.mxu0
    %4606 = vmatprep.mubr.bf16.mxu0 0
    %4607 = vmatmul.mubr.bf16.gmra.mxu0 %v4553
    %v4608 = vpop.f32.mrf.mxu0
    %v4609 = vadd.f32 %v4520, %v4608
    %v4610 = vpop.f32.mrf.mxu0
    %v4611 = vpop.f32.mrf.mxu0
    %v4612 = vadd.f32 %v4520, %v4611
    %v4613 = vpop.f32.mrf.mxu0
    %4614 = vmatprep.mubr.bf16.mxu0 0
    %4615 = vmatmul.mubr.bf16.gmra.mxu0 %v4556
    %v4616 = vpop.f32.mrf.mxu0
    %v4617 = vadd.f32 %v4520, %v4616
    %v4618 = vpop.f32.mrf.mxu0
    %v4619 = vpop.f32.mrf.mxu0
    %v4620 = vadd.f32 %v4520, %v4619
    %v4621 = vpop.f32.mrf.mxu0
    %4622 = vdwg.mxu0
    %4623 = vst [vmem:[#allocation26] sm:$0xff] %v4593
    %4624 = vst [vmem:[#allocation26 + $0x8] sm:$0xff] %v4596
    %4625 = vst [vmem:[#allocation26 + $0x10] sm:$0xff] %v4601
    %4626 = vst [vmem:[#allocation26 + $0x18] sm:$0xff] %v4604
    %4627 = vst [vmem:[#allocation26 + $0x20] sm:$0xff] %v4609
    %4628 = vst [vmem:[#allocation26 + $0x28] sm:$0xff] %v4612
    %4629 = vst [vmem:[#allocation26 + $0x30] sm:$0xff] %v4617
    %4630 = vst [vmem:[#allocation26 + $0x38] sm:$0xff] %v4620
    // Predicated region
    $region138: #{tpu_custom_call.1} parent=1 // pred_check
      _
    $region139: #{tpu_custom_call.1} parent=1 // pred_check_branch
      %4632 = sbr.rel (0) target = $region141
    $region140: #{tpu_custom_call.1} parent=1 // pred_region
      %s4634 = ssub.s32 1024, 1024
      %4635 = vsyncadd [#allocation6], %s4634
      %s4636 = sshll.u32 [#allocation25], 4
      %s4637 = int_to_ptr.vmem [resolvable:$true] %s4636
      %4642 = dma.vmem_to_hbm [thread:$0]  %s4637, 1024, %s21, [#allocation6], 128, 128, 8
    $region141: #{tpu_custom_call.1} parent=1 // pred_fallthru
      _
    // Predicated region
    $region142: #{tpu_custom_call.1} parent=1 // pred_check
      _
    $region143: #{tpu_custom_call.1} parent=1 // pred_check_branch
      %4644 = sbr.rel (0) target = $region145
    $region144: #{tpu_custom_call.1} parent=1 // pred_region
      %s4646 = ssub.s32 1024, 1024
      %4647 = vsyncadd [#allocation27], %s4646
      %s4648 = sshll.u32 [#allocation26], 4
      %s4649 = int_to_ptr.vmem [resolvable:$true] %s4648
      %4654 = dma.vmem_to_hbm [thread:$0]  %s4649, 1024, %s22, [#allocation27], 128, 128, 8
    $region145: #{tpu_custom_call.1} parent=1 // pred_fallthru
      _
    // Predicated region
    $region146: #{tpu_custom_call.1} parent=1 // pred_check
      _
    $region147: #{tpu_custom_call.1} parent=1 // pred_check_branch
      %4656 = sbr.rel (0) target = $region149
    $region148: #{tpu_custom_call.1} parent=1 // pred_region
      %s4658 = ssub.s32 128, 128
      %4659 = vsyncadd [#allocation27], %s4658
      %s4661 = sshll.u32 [#allocation28], 4
      %s4662 = int_to_ptr.vmem [resolvable:$true] %s4661
      %4664 = dma.vmem_to_hbm [thread:$0]  %s4662, 128, %s23, [#allocation27]
    $region149: #{tpu_custom_call.1} parent=1 // pred_fallthru
      _
    // Predicated region
    $region150: #{tpu_custom_call.1} parent=1 // pred_check
      _
    $region151: #{tpu_custom_call.1} parent=1 // pred_check_branch
      %4666 = sbr.rel (0) target = $region153
    $region152: #{tpu_custom_call.1} parent=1 // pred_region
      %4667 = dma.done [#allocation6], 1024
    $region153: #{tpu_custom_call.1} parent=1 // pred_fallthru
      _
    // Predicated region
    $region154: #{tpu_custom_call.1} parent=1 // pred_check
      _
    $region155: #{tpu_custom_call.1} parent=1 // pred_check_branch
      %4669 = sbr.rel (0) target = $region157
    $region156: #{tpu_custom_call.1} parent=1 // pred_region
      %4670 = dma.done [#allocation27], 1024
    $region157: #{tpu_custom_call.1} parent=1 // pred_fallthru
      _
    // Predicated region
    $region158: #{tpu_custom_call.1} parent=1 // pred_check
      _
    $region159: #{tpu_custom_call.1} parent=1 // pred_check_branch
      %4672 = sbr.rel (0) target = $region161
    $region160: #{tpu_custom_call.1} parent=1 // pred_region
      %4673 = dma.done [#allocation27], 128
    $region161: #{tpu_custom_call.1} parent=1 // pred_fallthru
      _
    %4674 = vsyncpa [#allocation5], 1
    %4675 = vsyncpa [#allocation8], 1
    %4676 = vsyncpa [#allocation11], 1
    %4677 = vsyncpa [#allocation14], 1
    %4678 = vsyncpa [#allocation17], 1
    %4679 = vsyncpa [#allocation20], 1
    %4680 = vsyncpa [#allocation23], 1
    %4681 = vsyncpa [#allocation6], 1
    %4682 = vsyncpa [#allocation27], 1

</llo_original>
